<compile_context>
chip_gen: v5e
topology: v5e:2x2
jax: 0.10.0
libtpu: 0.0.40
codegen_flags: <defaults>
</compile_context>

<pallas_src>
import functools

import jax
import jax.numpy as jnp
from jax import lax
from jax.experimental import pallas as pl
from jax.experimental.pallas import tpu as pltpu

NEG_SLOPE = 0.01  # nn.LeakyReLU default


def _leaky(v):
    # 0 < slope < 1  =>  leaky_relu(v) == max(v, slope * v)  (single VPU max)
    return jnp.maximum(v, NEG_SLOPE * v)


# --------------------------------------------------------------------------
# Fused kernel: one grid step == one group of B images, whole net in VMEM.
# --------------------------------------------------------------------------
def fused_kernel(*refs, W, HW_b, shallow_dim, k, num_module, num_layers):
    refs = list(refs)
    x_ref = refs.pop(0)                 # (1, C, HW_b) f32
    mask_ref = refs.pop(0)              # (9, HW_b)    f32 tap-validity masks
    sh_scale = refs.pop(0)              # (32, 1)
    sh_shift = refs.pop(0)              # (32, 1)
    sh_w = refs.pop(0)                  # (32, 9*C) bf16  (tap-major columns)
    sh_b = refs.pop(0)                  # (32, 1)
    dense = []
    for _ in range(num_module):
        d_scale = refs.pop(0)           # (L, cin, 1)
        d_shift = refs.pop(0)           # (L, cin, 1)
        d_w = refs.pop(0)               # (L, 9*k, cin) bf16 (tap-major rows)
        d_b = refs.pop(0)               # (L, k, 1)
        dense.append((d_scale, d_shift, d_w, d_b))
    fin_w = refs.pop(0)                 # (L, 32, 64) bf16
    fin_b = refs.pop(0)                 # (L, 32, 1)
    out_scale = refs.pop(0)             # (32, 1)
    out_shift = refs.pop(0)             # (32, 1)
    out_w = refs.pop(0)                 # (9*C, 32) bf16 (tap-major rows)
    out_b = refs.pop(0)                 # (C, 1)
    o_ref = refs.pop(0)                 # (1, C, HW_b)
    slab = refs.pop(0)                  # VMEM (64, HW_b) f32 channel slab

    # Hoist the 9 tap-validity rows once per grid step (JAX does not CSE
    # broadcast_in_dim; rebuilding/reloading them per tap would repeat work).
    masks_all = mask_ref[...]                              # (9, HW_b)
    mask_rows = [masks_all[t:t + 1, :] for t in range(9)]  # each (1, HW_b)

    deltas = [((t // 3 - 1) * W + (t % 3 - 1)) for t in range(9)]

    def taps_to_output(t_rows, cout, bias):
        # t_rows: (9*cout, HW_b) f32.  Rows [tap*cout:(tap+1)*cout] hold the
        # per-tap matmul contribution evaluated at the *source* pixel; shift
        # each tap's rows back by -delta and zero out-of-image taps.
        y = t_rows[4 * cout:5 * cout, :]          # centre tap, always valid
        for tap in range(9):
            if tap == 4:
                continue
            rolled = pltpu.roll(t_rows[tap * cout:(tap + 1) * cout, :],
                                shift=(-deltas[tap]) % HW_b, axis=1)
            y = y + mask_rows[tap] * rolled
        return y + bias

    def bn_leaky(v, scale, shift):
        return _leaky(v * scale + shift)

    x_img = x_ref[0]                                      # (C, HW_b) f32
    in_c = x_img.shape[0]

    # ---- shallow_feature: Conv3x3 -> BN -> LeakyReLU (shift-inputs, cin=C=1)
    pieces = []
    for tap in range(9):
        if deltas[tap] == 0:
            pieces.append(x_img)
        else:
            shifted = pltpu.roll(x_img, shift=(-deltas[tap]) % HW_b, axis=1)
            pieces.append(mask_rows[tap] * shifted)
    im2col = jnp.concatenate(pieces, axis=0).astype(jnp.bfloat16)  # (9C,HW_b)
    y = jnp.dot(sh_w[...], im2col,
                preferred_element_type=jnp.float32) + sh_b[...]
    slab[0:shallow_dim, :] = bn_leaky(y, sh_scale[...], sh_shift[...])

    total_c = shallow_dim + num_module * k

    # ---- num_layers x Conv_path (DenseBlock with channel growth inside the
    # slab, then a 1x1 conv back to 32).  Layer shapes are invariant, so the
    # layer loop is a fori_loop over the stacked (L, ...) weights.
    def layer_body(layer, carry):
        for i in range(num_module):
            d_scale, d_shift, d_w, d_b = dense[i]
            cin = shallow_dim + k * i
            a = bn_leaky(slab[0:cin, :], d_scale[layer], d_shift[layer])
            t_rows = jnp.dot(d_w[layer], a.astype(jnp.bfloat16),
                             preferred_element_type=jnp.float32)  # (9k, HW_b)
            slab[cin:cin + k, :] = taps_to_output(t_rows, k, d_b[layer])
        full = slab[0:total_c, :].astype(jnp.bfloat16)
        y32 = jnp.dot(fin_w[layer], full,
                      preferred_element_type=jnp.float32) + fin_b[layer]
        slab[0:shallow_dim, :] = y32
        return carry

    lax.fori_loop(0, num_layers, layer_body, 0)

    # TODO(synk): SwinTransformer is not defined in the reference source;
    # treated as identity here.

    # ---- out_layer: BN -> LeakyReLU -> Conv3x3, fused with zero-mask combine
    a = bn_leaky(slab[0:shallow_dim, :], out_scale[...], out_shift[...])
    t_rows = jnp.dot(out_w[...], a.astype(jnp.bfloat16),
                     preferred_element_type=jnp.float32)          # (9C, HW_b)
    y = taps_to_output(t_rows, in_c, out_b[...])                  # (C, HW_b)
    o_ref[0] = (jnp.where(x_img == 0.0, y, 0.0) + x_img).astype(o_ref.dtype)


# --------------------------------------------------------------------------
# Wrapper
# --------------------------------------------------------------------------
def _resident_spec(arr):
    # Full-array block with a constant index_map: stays resident in VMEM,
    # Pallas does not re-DMA it across grid steps.
    if arr.ndim == 2:
        return pl.BlockSpec(arr.shape, lambda n: (0, 0))
    assert arr.ndim == 3
    return pl.BlockSpec(arr.shape, lambda n: (0, 0, 0))


def _choose_images_per_step(n, hw, target_lanes=4096):
    # Largest divisor of n keeping the lane axis <= target_lanes.  VMEM is
    # nowhere near a constraint (<1 MiB used), so this only trades per-step
    # overhead against grid length.
    best = 1
    for b in range(1, n + 1):
        if n % b == 0 and b * hw <= target_lanes:
            best = b
    return best


def jct_hardanger_forward(x_nchw, params, *, shallow_dim=32, k=8,
                          num_module=4, num_layers=4, images_per_step=None):
    N, C, H, W = x_nchw.shape
    HW = H * W
    B = images_per_step or _choose_images_per_step(N, HW)
    assert N % B == 0
    G = N // B
    HW_b = B * HW

    # (N, C, H, W) -> (G, C, B*HW): images of a group concatenated on lanes.
    x = (x_nchw.reshape(G, B, C, HW)
               .transpose(0, 2, 1, 3)
               .reshape(G, C, HW_b))

    # Tap-validity masks over the batched lane axis.  pos % HW makes them
    # per-image, which also zeroes the cross-image wrap of pltpu.roll.
    p = jnp.arange(HW_b, dtype=jnp.int32) % HW
    r = p // W
    c = p % W
    mask_list = []
    for tap in range(9):
        dy, dx = tap // 3 - 1, tap % 3 - 1
        valid = (r + dy >= 0) & (r + dy < H) & (c + dx >= 0) & (c + dx < W)
        mask_list.append(valid.astype(jnp.float32))
    masks = jnp.stack(mask_list, axis=0)                  # (9, HW_b)

    flat = [params["shallow"]["scale"], params["shallow"]["shift"],
            params["shallow"]["w"], params["shallow"]["b"]]
    for dp in params["dense"]:
        flat += [dp["scale"], dp["shift"], dp["w"], dp["b"]]
    flat += [params["final"]["w"], params["final"]["b"],
             params["out"]["scale"], params["out"]["shift"],
             params["out"]["w"], params["out"]["b"]]

    in_specs = [pl.BlockSpec((1, C, HW_b), lambda n: (n, 0, 0)),
                pl.BlockSpec((9, HW_b), lambda n: (0, 0))]
    in_specs += [_resident_spec(a) for a in flat]

    total_c = shallow_dim + num_module * k
    cin_sum = sum(shallow_dim + k * i for i in range(num_module))
    flops = 2 * HW_b * G * (
        shallow_dim * 9 * C
        + num_layers * (9 * k * cin_sum + shallow_dim * total_c)
        + 9 * C * shallow_dim)
    bytes_weights = sum(int(a.size) * a.dtype.itemsize for a in flat)
    cost = pl.CostEstimate(flops=int(flops), transcendentals=0,
                           bytes_accessed=int(2 * x.size * 4
                                              + masks.size * 4
                                              + bytes_weights))

    kernel = functools.partial(fused_kernel, W=W, HW_b=HW_b,
                               shallow_dim=shallow_dim, k=k,
                               num_module=num_module, num_layers=num_layers)

    out = pl.pallas_call(
        kernel,
        out_shape=jax.ShapeDtypeStruct((G, C, HW_b), jnp.float32),
        grid_spec=pltpu.PrefetchScalarGridSpec(
            num_scalar_prefetch=0,
            grid=(G,),
            in_specs=in_specs,
            out_specs=pl.BlockSpec((1, C, HW_b), lambda n: (n, 0, 0)),
            scratch_shapes=[
                pltpu.VMEM((total_c, HW_b), jnp.float32),
            ],
        ),
        compiler_params=pltpu.CompilerParams(
            dimension_semantics=("parallel",)),
        cost_estimate=cost,
    )(x, masks, *flat)

    return (out.reshape(G, C, B, HW)
               .transpose(0, 2, 1, 3)
               .reshape(N, C, H, W))


# --------------------------------------------------------------------------
# Deterministic synthetic parameters (kernel layouts: weights bf16, per-channel
# scale/shift/bias as (C, 1) f32 columns; BN folded to eval-mode scale/shift).
# --------------------------------------------------------------------------
def _init_conv3x3_out_taps(key, cin, cout):
    # Layout for matmul-then-shift-outputs: w9[tap*cout + co, ci].
    kw_, kb_ = jax.random.split(key)
    fan_in = 9 * cin
    w = jax.random.normal(kw_, (3, 3, cin, cout), jnp.float32) / jnp.sqrt(
        jnp.float32(fan_in))
    b = 0.01 * jax.random.normal(kb_, (cout,), jnp.float32)
    w9 = w.transpose(0, 1, 3, 2).reshape(9 * cout, cin).astype(jnp.bfloat16)
    return w9, b.reshape(cout, 1)


def _init_conv3x3_in_taps(key, cin, cout):
    # Layout for shift-inputs im2col: w_mat[co, tap*cin + ci].
    kw_, kb_ = jax.random.split(key)
    fan_in = 9 * cin
    w = jax.random.normal(kw_, (3, 3, cin, cout), jnp.float32) / jnp.sqrt(
        jnp.float32(fan_in))
    b = 0.01 * jax.random.normal(kb_, (cout,), jnp.float32)
    w_mat = w.transpose(3, 0, 1, 2).reshape(cout, 9 * cin).astype(jnp.bfloat16)
    return w_mat, b.reshape(cout, 1)


def _init_conv1x1(key, cin, cout):
    kw_, kb_ = jax.random.split(key)
    w = jax.random.normal(kw_, (cin, cout), jnp.float32) / jnp.sqrt(
        jnp.float32(cin))
    b = 0.01 * jax.random.normal(kb_, (cout,), jnp.float32)
    return w.T.astype(jnp.bfloat16), b.reshape(cout, 1)


def _init_bn(key, c):
    k1, k2, k3, k4 = jax.random.split(key, 4)
    gamma = 1.0 + 0.1 * jax.random.normal(k1, (c,), jnp.float32)
    beta = 0.1 * jax.random.normal(k2, (c,), jnp.float32)
    mean = 0.1 * jax.random.normal(k3, (c,), jnp.float32)
    var = 0.5 + jax.random.uniform(k4, (c,), jnp.float32)
    scale = gamma / jnp.sqrt(var + 1e-5)
    shift = beta - mean * scale
    return scale.reshape(c, 1), shift.reshape(c, 1)


def init_params(key, in_channel=1, shallow_dim=32, num_layers=4, k=8,
                num_module=4):
    keys = iter(jax.random.split(key, 256))
    p = {}
    sw, sb = _init_conv3x3_in_taps(next(keys), in_channel, shallow_dim)
    ss, st = _init_bn(next(keys), shallow_dim)
    p["shallow"] = {"scale": ss, "shift": st, "w": sw, "b": sb}

    # Dense position i has identical shapes across the num_layers Conv_paths,
    # so stack those parameters along a leading layer axis (indexed by the
    # fori_loop variable inside the kernel).
    dense = [{"scale": [], "shift": [], "w": [], "b": []}
             for _ in range(num_module)]
    fin_w, fin_b = [], []
    for _ in range(num_layers):
        for i in range(num_module):
            cin = shallow_dim + k * i
            s, t = _init_bn(next(keys), cin)
            w, b = _init_conv3x3_out_taps(next(keys), cin, k)
            dense[i]["scale"].append(s)
            dense[i]["shift"].append(t)
            dense[i]["w"].append(w)
            dense[i]["b"].append(b)
        fw, fb = _init_conv1x1(next(keys), shallow_dim + num_module * k,
                               shallow_dim)
        fin_w.append(fw)
        fin_b.append(fb)
    p["dense"] = [{kk: jnp.stack(v, axis=0) for kk, v in d.items()}
                  for d in dense]
    p["final"] = {"w": jnp.stack(fin_w, axis=0), "b": jnp.stack(fin_b, axis=0)}

    os_, ot_ = _init_bn(next(keys), shallow_dim)
    ow, ob = _init_conv3x3_out_taps(next(keys), shallow_dim, in_channel)
    p["out"] = {"scale": os_, "shift": ot_, "w": ow, "b": ob}
    return p


# --------------------------------------------------------------------------
if __name__ == "__main__":
    key = jax.random.PRNGKey(0)
    kx, km, kp = jax.random.split(key, 3)

    N, C, H, W = 2, 1, 16, 16          # PyTorch NCHW (2, 1, 16, 16)
    x = jax.random.normal(kx, (N, C, H, W), jnp.float32)
    # introduce zeros so the mask path is exercised
    x = jnp.where(jax.random.uniform(km, x.shape) < 0.3, 0.0, x)

    params = init_params(kp, in_channel=C)
    out = jax.block_until_ready(jct_hardanger_forward(x, params))
    assert out.shape == (N, C, H, W)
    assert out.dtype == jnp.float32
    print("KERNEL_OK")
</pallas_src>

<mosaic_0001>
module attributes {stable_mosaic.version = 11 : i64} {
  func.func @fused_kernel(%arg0: i32, %arg1: memref<1x1x512xf32, #tpu.memory_space<vmem>>, %arg2: memref<9x512xf32, #tpu.memory_space<vmem>>, %arg3: memref<32x1xf32, #tpu.memory_space<vmem>>, %arg4: memref<32x1xf32, #tpu.memory_space<vmem>>, %arg5: memref<32x9xbf16, #tpu.memory_space<vmem>>, %arg6: memref<32x1xf32, #tpu.memory_space<vmem>>, %arg7: memref<4x32x1xf32, #tpu.memory_space<vmem>>, %arg8: memref<4x32x1xf32, #tpu.memory_space<vmem>>, %arg9: memref<4x72x32xbf16, #tpu.memory_space<vmem>>, %arg10: memref<4x8x1xf32, #tpu.memory_space<vmem>>, %arg11: memref<4x40x1xf32, #tpu.memory_space<vmem>>, %arg12: memref<4x40x1xf32, #tpu.memory_space<vmem>>, %arg13: memref<4x72x40xbf16, #tpu.memory_space<vmem>>, %arg14: memref<4x8x1xf32, #tpu.memory_space<vmem>>, %arg15: memref<4x48x1xf32, #tpu.memory_space<vmem>>, %arg16: memref<4x48x1xf32, #tpu.memory_space<vmem>>, %arg17: memref<4x72x48xbf16, #tpu.memory_space<vmem>>, %arg18: memref<4x8x1xf32, #tpu.memory_space<vmem>>, %arg19: memref<4x56x1xf32, #tpu.memory_space<vmem>>, %arg20: memref<4x56x1xf32, #tpu.memory_space<vmem>>, %arg21: memref<4x72x56xbf16, #tpu.memory_space<vmem>>, %arg22: memref<4x8x1xf32, #tpu.memory_space<vmem>>, %arg23: memref<4x32x64xbf16, #tpu.memory_space<vmem>>, %arg24: memref<4x32x1xf32, #tpu.memory_space<vmem>>, %arg25: memref<32x1xf32, #tpu.memory_space<vmem>>, %arg26: memref<32x1xf32, #tpu.memory_space<vmem>>, %arg27: memref<9x32xbf16, #tpu.memory_space<vmem>>, %arg28: memref<1x1xf32, #tpu.memory_space<vmem>>, %arg29: memref<1x1x512xf32, #tpu.memory_space<vmem>>, %arg30: memref<64x512xf32, #tpu.memory_space<vmem>>) attributes {dimension_semantics = [#tpu.dimension_semantics<parallel>], iteration_bounds = array<i64: 1>, scalar_prefetch = 0 : i64, scratch_operands = 1 : i64, tpu.core_type = #tpu.core_type<tc>, window_params = [{transform_indices = @transform_0, window_bounds = array<i64: 1, 1, 512>}, {pipeline_mode = #tpu.pipeline_mode<synchronous>, transform_indices = @transform_1, window_bounds = array<i64: 9, 512>}, {pipeline_mode = #tpu.pipeline_mode<synchronous>, transform_indices = @transform_2, window_bounds = array<i64: 32, 1>}, {pipeline_mode = #tpu.pipeline_mode<synchronous>, transform_indices = @transform_3, window_bounds = array<i64: 32, 1>}, {pipeline_mode = #tpu.pipeline_mode<synchronous>, transform_indices = @transform_4, window_bounds = array<i64: 32, 9>}, {pipeline_mode = #tpu.pipeline_mode<synchronous>, transform_indices = @transform_5, window_bounds = array<i64: 32, 1>}, {pipeline_mode = #tpu.pipeline_mode<synchronous>, transform_indices = @transform_6, window_bounds = array<i64: 4, 32, 1>}, {pipeline_mode = #tpu.pipeline_mode<synchronous>, transform_indices = @transform_7, window_bounds = array<i64: 4, 32, 1>}, {pipeline_mode = #tpu.pipeline_mode<synchronous>, transform_indices = @transform_8, window_bounds = array<i64: 4, 72, 32>}, {pipeline_mode = #tpu.pipeline_mode<synchronous>, transform_indices = @transform_9, window_bounds = array<i64: 4, 8, 1>}, {pipeline_mode = #tpu.pipeline_mode<synchronous>, transform_indices = @transform_10, window_bounds = array<i64: 4, 40, 1>}, {pipeline_mode = #tpu.pipeline_mode<synchronous>, transform_indices = @transform_11, window_bounds = array<i64: 4, 40, 1>}, {pipeline_mode = #tpu.pipeline_mode<synchronous>, transform_indices = @transform_12, window_bounds = array<i64: 4, 72, 40>}, {pipeline_mode = #tpu.pipeline_mode<synchronous>, transform_indices = @transform_13, window_bounds = array<i64: 4, 8, 1>}, {pipeline_mode = #tpu.pipeline_mode<synchronous>, transform_indices = @transform_14, window_bounds = array<i64: 4, 48, 1>}, {pipeline_mode = #tpu.pipeline_mode<synchronous>, transform_indices = @transform_15, window_bounds = array<i64: 4, 48, 1>}, {pipeline_mode = #tpu.pipeline_mode<synchronous>, transform_indices = @transform_16, window_bounds = array<i64: 4, 72, 48>}, {pipeline_mode = #tpu.pipeline_mode<synchronous>, transform_indices = @transform_17, window_bounds = array<i64: 4, 8, 1>}, {pipeline_mode = #tpu.pipeline_mode<synchronous>, transform_indices = @transform_18, window_bounds = array<i64: 4, 56, 1>}, {pipeline_mode = #tpu.pipeline_mode<synchronous>, transform_indices = @transform_19, window_bounds = array<i64: 4, 56, 1>}, {pipeline_mode = #tpu.pipeline_mode<synchronous>, transform_indices = @transform_20, window_bounds = array<i64: 4, 72, 56>}, {pipeline_mode = #tpu.pipeline_mode<synchronous>, transform_indices = @transform_21, window_bounds = array<i64: 4, 8, 1>}, {pipeline_mode = #tpu.pipeline_mode<synchronous>, transform_indices = @transform_22, window_bounds = array<i64: 4, 32, 64>}, {pipeline_mode = #tpu.pipeline_mode<synchronous>, transform_indices = @transform_23, window_bounds = array<i64: 4, 32, 1>}, {pipeline_mode = #tpu.pipeline_mode<synchronous>, transform_indices = @transform_24, window_bounds = array<i64: 32, 1>}, {pipeline_mode = #tpu.pipeline_mode<synchronous>, transform_indices = @transform_25, window_bounds = array<i64: 32, 1>}, {pipeline_mode = #tpu.pipeline_mode<synchronous>, transform_indices = @transform_26, window_bounds = array<i64: 9, 32>}, {pipeline_mode = #tpu.pipeline_mode<synchronous>, transform_indices = @transform_27, window_bounds = array<i64: 1, 1>}, {transform_indices = @transform_28, window_bounds = array<i64: 1, 1, 512>}]} {
    %c0 = arith.constant 0 : index
    %c0_0 = arith.constant 0 : index
    %0 = vector.load %arg2[%c0, %c0_0] : memref<9x512xf32, #tpu.memory_space<vmem>>, vector<9x512xf32>
    %1 = vector.extract_strided_slice %0 {offsets = [0, 0], sizes = [1, 512], strides = [1, 1]} : vector<9x512xf32> to vector<1x512xf32>
    %2 = vector.extract_strided_slice %0 {offsets = [1, 0], sizes = [1, 512], strides = [1, 1]} : vector<9x512xf32> to vector<1x512xf32>
    %3 = vector.extract_strided_slice %0 {offsets = [2, 0], sizes = [1, 512], strides = [1, 1]} : vector<9x512xf32> to vector<1x512xf32>
    %4 = vector.extract_strided_slice %0 {offsets = [3, 0], sizes = [1, 512], strides = [1, 1]} : vector<9x512xf32> to vector<1x512xf32>
    %5 = vector.extract_strided_slice %0 {offsets = [5, 0], sizes = [1, 512], strides = [1, 1]} : vector<9x512xf32> to vector<1x512xf32>
    %6 = vector.extract_strided_slice %0 {offsets = [6, 0], sizes = [1, 512], strides = [1, 1]} : vector<9x512xf32> to vector<1x512xf32>
    %7 = vector.extract_strided_slice %0 {offsets = [7, 0], sizes = [1, 512], strides = [1, 1]} : vector<9x512xf32> to vector<1x512xf32>
    %8 = vector.extract_strided_slice %0 {offsets = [8, 0], sizes = [1, 512], strides = [1, 1]} : vector<9x512xf32> to vector<1x512xf32>
    %c0_1 = arith.constant 0 : index
    %c0_2 = arith.constant 0 : index
    %c0_3 = arith.constant 0 : index
    %9 = vector.load %arg1[%c0_1, %c0_2, %c0_3] : memref<1x1x512xf32, #tpu.memory_space<vmem>>, vector<1x1x512xf32>
    %10 = vector.shape_cast %9 : vector<1x1x512xf32> to vector<1x512xf32>
    %c17_i32 = arith.constant 17 : i32
    %11 = tpu.dynamic_rotate %10 by %c17_i32 dim 1 : vector<1x512xf32>, i32 -> vector<1x512xf32>
    %12 = arith.mulf %1, %11 : vector<1x512xf32>
    %c16_i32 = arith.constant 16 : i32
    %13 = tpu.dynamic_rotate %10 by %c16_i32 dim 1 : vector<1x512xf32>, i32 -> vector<1x512xf32>
    %14 = arith.mulf %2, %13 : vector<1x512xf32>
    %c15_i32 = arith.constant 15 : i32
    %15 = tpu.dynamic_rotate %10 by %c15_i32 dim 1 : vector<1x512xf32>, i32 -> vector<1x512xf32>
    %16 = arith.mulf %3, %15 : vector<1x512xf32>
    %c1_i32 = arith.constant 1 : i32
    %17 = tpu.dynamic_rotate %10 by %c1_i32 dim 1 : vector<1x512xf32>, i32 -> vector<1x512xf32>
    %18 = arith.mulf %4, %17 : vector<1x512xf32>
    %c511_i32 = arith.constant 511 : i32
    %19 = tpu.dynamic_rotate %10 by %c511_i32 dim 1 : vector<1x512xf32>, i32 -> vector<1x512xf32>
    %20 = arith.mulf %5, %19 : vector<1x512xf32>
    %c497_i32 = arith.constant 497 : i32
    %21 = tpu.dynamic_rotate %10 by %c497_i32 dim 1 : vector<1x512xf32>, i32 -> vector<1x512xf32>
    %22 = arith.mulf %6, %21 : vector<1x512xf32>
    %c496_i32 = arith.constant 496 : i32
    %23 = tpu.dynamic_rotate %10 by %c496_i32 dim 1 : vector<1x512xf32>, i32 -> vector<1x512xf32>
    %24 = arith.mulf %7, %23 : vector<1x512xf32>
    %c495_i32 = arith.constant 495 : i32
    %25 = tpu.dynamic_rotate %10 by %c495_i32 dim 1 : vector<1x512xf32>, i32 -> vector<1x512xf32>
    %26 = arith.mulf %8, %25 : vector<1x512xf32>
    %27 = tpu.concatenate %12, %14, %16, %18, %10, %20, %22, %24, %26 in 0 : vector<1x512xf32>, vector<1x512xf32>, vector<1x512xf32>, vector<1x512xf32>, vector<1x512xf32>, vector<1x512xf32>, vector<1x512xf32>, vector<1x512xf32>, vector<1x512xf32> -> vector<9x512xf32>
    %28 = arith.truncf %27 : vector<9x512xf32> to vector<9x512xbf16>
    %c0_4 = arith.constant 0 : index
    %c0_5 = arith.constant 0 : index
    %29 = vector.load %arg5[%c0_4, %c0_5] : memref<32x9xbf16, #tpu.memory_space<vmem>>, vector<32x9xbf16>
    %cst = arith.constant dense<0.000000e+00> : vector<32x512xf32>
    %30 = tpu.matmul %29, %28, %cst {dimension_numbers = #tpu.dot_dimension_numbers<[1], [0], [0], [1], [0, 0, 1, 1], [], []>} : vector<32x9xbf16>, vector<9x512xbf16>, vector<32x512xf32> -> vector<32x512xf32>
    %c0_6 = arith.constant 0 : index
    %c0_7 = arith.constant 0 : index
    %31 = vector.load %arg6[%c0_6, %c0_7] : memref<32x1xf32, #tpu.memory_space<vmem>>, vector<32x1xf32>
    %32 = vector.broadcast %31 : vector<32x1xf32> to vector<32x512xf32>
    %33 = arith.addf %30, %32 : vector<32x512xf32>
    %c0_8 = arith.constant 0 : index
    %c0_9 = arith.constant 0 : index
    %34 = vector.load %arg3[%c0_8, %c0_9] : memref<32x1xf32, #tpu.memory_space<vmem>>, vector<32x1xf32>
    %c0_10 = arith.constant 0 : index
    %c0_11 = arith.constant 0 : index
    %35 = vector.load %arg4[%c0_10, %c0_11] : memref<32x1xf32, #tpu.memory_space<vmem>>, vector<32x1xf32>
    %36 = vector.broadcast %34 : vector<32x1xf32> to vector<32x512xf32>
    %37 = arith.mulf %33, %36 : vector<32x512xf32>
    %38 = vector.broadcast %35 : vector<32x1xf32> to vector<32x512xf32>
    %39 = arith.addf %37, %38 : vector<32x512xf32>
    %cst_12 = arith.constant 0.00999999977 : f32
    %40 = vector.broadcast %cst_12 : f32 to vector<32x512xf32>
    %41 = arith.mulf %40, %39 : vector<32x512xf32>
    %42 = arith.maximumf %39, %41 : vector<32x512xf32>
    %c0_13 = arith.constant 0 : index
    %c0_14 = arith.constant 0 : index
    %43 = vector.load %arg30[%c0_13, %c0_14] : memref<64x512xf32, #tpu.memory_space<vmem>>, vector<32x512xf32>
    tpu.vector_store %arg30[%c0_13, %c0_14], %42 {strides = array<i32>} : memref<64x512xf32, #tpu.memory_space<vmem>>, vector<32x512xf32>,
    %c0_i32 = arith.constant 0 : i32
    %c4_i32 = arith.constant 4 : i32
    %44 = arith.addi %c0_i32, %c4_i32 : i32
    %c1_i32_15 = arith.constant 1 : i32
    scf.for %arg31 = %c0_i32 to %44 step %c1_i32_15  : i32 {
      %c0_42 = arith.constant 0 : index
      %c0_43 = arith.constant 0 : index
      %102 = vector.load %arg30[%c0_42, %c0_43] : memref<64x512xf32, #tpu.memory_space<vmem>>, vector<32x512xf32>
      %103 = arith.index_cast %arg31 : i32 to index
      %c0_44 = arith.constant 0 : index
      %c0_45 = arith.constant 0 : index
      %104 = vector.load %arg7[%103, %c0_44, %c0_45] : memref<4x32x1xf32, #tpu.memory_space<vmem>>, vector<1x32x1xf32>
      %105 = vector.shape_cast %104 : vector<1x32x1xf32> to vector<32x1xf32>
      %106 = arith.index_cast %arg31 : i32 to index
      %c0_46 = arith.constant 0 : index
      %c0_47 = arith.constant 0 : index
      %107 = vector.load %arg8[%106, %c0_46, %c0_47] : memref<4x32x1xf32, #tpu.memory_space<vmem>>, vector<1x32x1xf32>
      %108 = vector.shape_cast %107 : vector<1x32x1xf32> to vector<32x1xf32>
      %109 = vector.broadcast %105 : vector<32x1xf32> to vector<32x512xf32>
      %110 = arith.mulf %102, %109 : vector<32x512xf32>
      %111 = vector.broadcast %108 : vector<32x1xf32> to vector<32x512xf32>
      %112 = arith.addf %110, %111 : vector<32x512xf32>
      %cst_48 = arith.constant 0.00999999977 : f32
      %113 = vector.broadcast %cst_48 : f32 to vector<32x512xf32>
      %114 = arith.mulf %113, %112 : vector<32x512xf32>
      %115 = arith.maximumf %112, %114 : vector<32x512xf32>
      %116 = arith.index_cast %arg31 : i32 to index
      %c0_49 = arith.constant 0 : index
      %c0_50 = arith.constant 0 : index
      %117 = vector.load %arg9[%116, %c0_49, %c0_50] : memref<4x72x32xbf16, #tpu.memory_space<vmem>>, vector<1x72x32xbf16>
      %118 = vector.shape_cast %117 : vector<1x72x32xbf16> to vector<72x32xbf16>
      %119 = arith.truncf %115 : vector<32x512xf32> to vector<32x512xbf16>
      %cst_51 = arith.constant dense<0.000000e+00> : vector<72x512xf32>
      %120 = tpu.matmul %118, %119, %cst_51 {dimension_numbers = #tpu.dot_dimension_numbers<[1], [0], [0], [1], [0, 0, 1, 1], [], []>} : vector<72x32xbf16>, vector<32x512xbf16>, vector<72x512xf32> -> vector<72x512xf32>
      %121 = arith.index_cast %arg31 : i32 to index
      %c0_52 = arith.constant 0 : index
      %c0_53 = arith.constant 0 : index
      %122 = vector.load %arg10[%121, %c0_52, %c0_53] : memref<4x8x1xf32, #tpu.memory_space<vmem>>, vector<1x8x1xf32>
      %123 = vector.shape_cast %122 : vector<1x8x1xf32> to vector<8x1xf32>
      %124 = vector.extract_strided_slice %120 {offsets = [32, 0], sizes = [8, 512], strides = [1, 1]} : vector<72x512xf32> to vector<8x512xf32>
      %125 = vector.extract_strided_slice %120 {offsets = [0, 0], sizes = [8, 512], strides = [1, 1]} : vector<72x512xf32> to vector<8x512xf32>
      %c17_i32_54 = arith.constant 17 : i32
      %126 = tpu.dynamic_rotate %125 by %c17_i32_54 dim 1 : vector<8x512xf32>, i32 -> vector<8x512xf32>
      %127 = vector.broadcast %1 : vector<1x512xf32> to vector<8x512xf32>
      %128 = arith.mulf %127, %126 : vector<8x512xf32>
      %129 = arith.addf %124, %128 : vector<8x512xf32>
      %130 = vector.extract_strided_slice %120 {offsets = [8, 0], sizes = [8, 512], strides = [1, 1]} : vector<72x512xf32> to vector<8x512xf32>
      %c16_i32_55 = arith.constant 16 : i32
      %131 = tpu.dynamic_rotate %130 by %c16_i32_55 dim 1 : vector<8x512xf32>, i32 -> vector<8x512xf32>
      %132 = vector.broadcast %2 : vector<1x512xf32> to vector<8x512xf32>
      %133 = arith.mulf %132, %131 : vector<8x512xf32>
      %134 = arith.addf %129, %133 : vector<8x512xf32>
      %135 = vector.extract_strided_slice %120 {offsets = [16, 0], sizes = [8, 512], strides = [1, 1]} : vector<72x512xf32> to vector<8x512xf32>
      %c15_i32_56 = arith.constant 15 : i32
      %136 = tpu.dynamic_rotate %135 by %c15_i32_56 dim 1 : vector<8x512xf32>, i32 -> vector<8x512xf32>
      %137 = vector.broadcast %3 : vector<1x512xf32> to vector<8x512xf32>
      %138 = arith.mulf %137, %136 : vector<8x512xf32>
      %139 = arith.addf %134, %138 : vector<8x512xf32>
      %140 = vector.extract_strided_slice %120 {offsets = [24, 0], sizes = [8, 512], strides = [1, 1]} : vector<72x512xf32> to vector<8x512xf32>
      %c1_i32_57 = arith.constant 1 : i32
      %141 = tpu.dynamic_rotate %140 by %c1_i32_57 dim 1 : vector<8x512xf32>, i32 -> vector<8x512xf32>
      %142 = vector.broadcast %4 : vector<1x512xf32> to vector<8x512xf32>
      %143 = arith.mulf %142, %141 : vector<8x512xf32>
      %144 = arith.addf %139, %143 : vector<8x512xf32>
      %145 = vector.extract_strided_slice %120 {offsets = [40, 0], sizes = [8, 512], strides = [1, 1]} : vector<72x512xf32> to vector<8x512xf32>
      %c511_i32_58 = arith.constant 511 : i32
      %146 = tpu.dynamic_rotate %145 by %c511_i32_58 dim 1 : vector<8x512xf32>, i32 -> vector<8x512xf32>
      %147 = vector.broadcast %5 : vector<1x512xf32> to vector<8x512xf32>
      %148 = arith.mulf %147, %146 : vector<8x512xf32>
      %149 = arith.addf %144, %148 : vector<8x512xf32>
      %150 = vector.extract_strided_slice %120 {offsets = [48, 0], sizes = [8, 512], strides = [1, 1]} : vector<72x512xf32> to vector<8x512xf32>
      %c497_i32_59 = arith.constant 497 : i32
      %151 = tpu.dynamic_rotate %150 by %c497_i32_59 dim 1 : vector<8x512xf32>, i32 -> vector<8x512xf32>
      %152 = vector.broadcast %6 : vector<1x512xf32> to vector<8x512xf32>
      %153 = arith.mulf %152, %151 : vector<8x512xf32>
      %154 = arith.addf %149, %153 : vector<8x512xf32>
      %155 = vector.extract_strided_slice %120 {offsets = [56, 0], sizes = [8, 512], strides = [1, 1]} : vector<72x512xf32> to vector<8x512xf32>
      %c496_i32_60 = arith.constant 496 : i32
      %156 = tpu.dynamic_rotate %155 by %c496_i32_60 dim 1 : vector<8x512xf32>, i32 -> vector<8x512xf32>
      %157 = vector.broadcast %7 : vector<1x512xf32> to vector<8x512xf32>
      %158 = arith.mulf %157, %156 : vector<8x512xf32>
      %159 = arith.addf %154, %158 : vector<8x512xf32>
      %160 = vector.extract_strided_slice %120 {offsets = [64, 0], sizes = [8, 512], strides = [1, 1]} : vector<72x512xf32> to vector<8x512xf32>
      %c495_i32_61 = arith.constant 495 : i32
      %161 = tpu.dynamic_rotate %160 by %c495_i32_61 dim 1 : vector<8x512xf32>, i32 -> vector<8x512xf32>
      %162 = vector.broadcast %8 : vector<1x512xf32> to vector<8x512xf32>
      %163 = arith.mulf %162, %161 : vector<8x512xf32>
      %164 = arith.addf %159, %163 : vector<8x512xf32>
      %165 = vector.broadcast %123 : vector<8x1xf32> to vector<8x512xf32>
      %166 = arith.addf %164, %165 : vector<8x512xf32>
      %c32 = arith.constant 32 : index
      %c0_62 = arith.constant 0 : index
      %167 = vector.load %arg30[%c32, %c0_62] : memref<64x512xf32, #tpu.memory_space<vmem>>, vector<8x512xf32>
      tpu.vector_store %arg30[%c32, %c0_62], %166 {strides = array<i32>} : memref<64x512xf32, #tpu.memory_space<vmem>>, vector<8x512xf32>,
      %c0_63 = arith.constant 0 : index
      %c0_64 = arith.constant 0 : index
      %168 = vector.load %arg30[%c0_63, %c0_64] : memref<64x512xf32, #tpu.memory_space<vmem>>, vector<40x512xf32>
      %169 = arith.index_cast %arg31 : i32 to index
      %c0_65 = arith.constant 0 : index
      %c0_66 = arith.constant 0 : index
      %170 = vector.load %arg11[%169, %c0_65, %c0_66] : memref<4x40x1xf32, #tpu.memory_space<vmem>>, vector<1x40x1xf32>
      %171 = vector.shape_cast %170 : vector<1x40x1xf32> to vector<40x1xf32>
      %172 = arith.index_cast %arg31 : i32 to index
      %c0_67 = arith.constant 0 : index
      %c0_68 = arith.constant 0 : index
      %173 = vector.load %arg12[%172, %c0_67, %c0_68] : memref<4x40x1xf32, #tpu.memory_space<vmem>>, vector<1x40x1xf32>
      %174 = vector.shape_cast %173 : vector<1x40x1xf32> to vector<40x1xf32>
      %175 = vector.broadcast %171 : vector<40x1xf32> to vector<40x512xf32>
      %176 = arith.mulf %168, %175 : vector<40x512xf32>
      %177 = vector.broadcast %174 : vector<40x1xf32> to vector<40x512xf32>
      %178 = arith.addf %176, %177 : vector<40x512xf32>
      %cst_69 = arith.constant 0.00999999977 : f32
      %179 = vector.broadcast %cst_69 : f32 to vector<40x512xf32>
      %180 = arith.mulf %179, %178 : vector<40x512xf32>
      %181 = arith.maximumf %178, %180 : vector<40x512xf32>
      %182 = arith.index_cast %arg31 : i32 to index
      %c0_70 = arith.constant 0 : index
      %c0_71 = arith.constant 0 : index
      %183 = vector.load %arg13[%182, %c0_70, %c0_71] : memref<4x72x40xbf16, #tpu.memory_space<vmem>>, vector<1x72x40xbf16>
      %184 = vector.shape_cast %183 : vector<1x72x40xbf16> to vector<72x40xbf16>
      %185 = arith.truncf %181 : vector<40x512xf32> to vector<40x512xbf16>
      %cst_72 = arith.constant dense<0.000000e+00> : vector<72x512xf32>
      %186 = tpu.matmul %184, %185, %cst_72 {dimension_numbers = #tpu.dot_dimension_numbers<[1], [0], [0], [1], [0, 0, 1, 1], [], []>} : vector<72x40xbf16>, vector<40x512xbf16>, vector<72x512xf32> -> vector<72x512xf32>
      %187 = arith.index_cast %arg31 : i32 to index
      %c0_73 = arith.constant 0 : index
      %c0_74 = arith.constant 0 : index
      %188 = vector.load %arg14[%187, %c0_73, %c0_74] : memref<4x8x1xf32, #tpu.memory_space<vmem>>, vector<1x8x1xf32>
      %189 = vector.shape_cast %188 : vector<1x8x1xf32> to vector<8x1xf32>
      %190 = vector.extract_strided_slice %186 {offsets = [32, 0], sizes = [8, 512], strides = [1, 1]} : vector<72x512xf32> to vector<8x512xf32>
      %191 = vector.extract_strided_slice %186 {offsets = [0, 0], sizes = [8, 512], strides = [1, 1]} : vector<72x512xf32> to vector<8x512xf32>
      %c17_i32_75 = arith.constant 17 : i32
      %192 = tpu.dynamic_rotate %191 by %c17_i32_75 dim 1 : vector<8x512xf32>, i32 -> vector<8x512xf32>
      %193 = vector.broadcast %1 : vector<1x512xf32> to vector<8x512xf32>
      %194 = arith.mulf %193, %192 : vector<8x512xf32>
      %195 = arith.addf %190, %194 : vector<8x512xf32>
      %196 = vector.extract_strided_slice %186 {offsets = [8, 0], sizes = [8, 512], strides = [1, 1]} : vector<72x512xf32> to vector<8x512xf32>
      %c16_i32_76 = arith.constant 16 : i32
      %197 = tpu.dynamic_rotate %196 by %c16_i32_76 dim 1 : vector<8x512xf32>, i32 -> vector<8x512xf32>
      %198 = vector.broadcast %2 : vector<1x512xf32> to vector<8x512xf32>
      %199 = arith.mulf %198, %197 : vector<8x512xf32>
      %200 = arith.addf %195, %199 : vector<8x512xf32>
      %201 = vector.extract_strided_slice %186 {offsets = [16, 0], sizes = [8, 512], strides = [1, 1]} : vector<72x512xf32> to vector<8x512xf32>
      %c15_i32_77 = arith.constant 15 : i32
      %202 = tpu.dynamic_rotate %201 by %c15_i32_77 dim 1 : vector<8x512xf32>, i32 -> vector<8x512xf32>
      %203 = vector.broadcast %3 : vector<1x512xf32> to vector<8x512xf32>
      %204 = arith.mulf %203, %202 : vector<8x512xf32>
      %205 = arith.addf %200, %204 : vector<8x512xf32>
      %206 = vector.extract_strided_slice %186 {offsets = [24, 0], sizes = [8, 512], strides = [1, 1]} : vector<72x512xf32> to vector<8x512xf32>
      %c1_i32_78 = arith.constant 1 : i32
      %207 = tpu.dynamic_rotate %206 by %c1_i32_78 dim 1 : vector<8x512xf32>, i32 -> vector<8x512xf32>
      %208 = vector.broadcast %4 : vector<1x512xf32> to vector<8x512xf32>
      %209 = arith.mulf %208, %207 : vector<8x512xf32>
      %210 = arith.addf %205, %209 : vector<8x512xf32>
      %211 = vector.extract_strided_slice %186 {offsets = [40, 0], sizes = [8, 512], strides = [1, 1]} : vector<72x512xf32> to vector<8x512xf32>
      %c511_i32_79 = arith.constant 511 : i32
      %212 = tpu.dynamic_rotate %211 by %c511_i32_79 dim 1 : vector<8x512xf32>, i32 -> vector<8x512xf32>
      %213 = vector.broadcast %5 : vector<1x512xf32> to vector<8x512xf32>
      %214 = arith.mulf %213, %212 : vector<8x512xf32>
      %215 = arith.addf %210, %214 : vector<8x512xf32>
      %216 = vector.extract_strided_slice %186 {offsets = [48, 0], sizes = [8, 512], strides = [1, 1]} : vector<72x512xf32> to vector<8x512xf32>
      %c497_i32_80 = arith.constant 497 : i32
      %217 = tpu.dynamic_rotate %216 by %c497_i32_80 dim 1 : vector<8x512xf32>, i32 -> vector<8x512xf32>
      %218 = vector.broadcast %6 : vector<1x512xf32> to vector<8x512xf32>
      %219 = arith.mulf %218, %217 : vector<8x512xf32>
      %220 = arith.addf %215, %219 : vector<8x512xf32>
      %221 = vector.extract_strided_slice %186 {offsets = [56, 0], sizes = [8, 512], strides = [1, 1]} : vector<72x512xf32> to vector<8x512xf32>
      %c496_i32_81 = arith.constant 496 : i32
      %222 = tpu.dynamic_rotate %221 by %c496_i32_81 dim 1 : vector<8x512xf32>, i32 -> vector<8x512xf32>
      %223 = vector.broadcast %7 : vector<1x512xf32> to vector<8x512xf32>
      %224 = arith.mulf %223, %222 : vector<8x512xf32>
      %225 = arith.addf %220, %224 : vector<8x512xf32>
      %226 = vector.extract_strided_slice %186 {offsets = [64, 0], sizes = [8, 512], strides = [1, 1]} : vector<72x512xf32> to vector<8x512xf32>
      %c495_i32_82 = arith.constant 495 : i32
      %227 = tpu.dynamic_rotate %226 by %c495_i32_82 dim 1 : vector<8x512xf32>, i32 -> vector<8x512xf32>
      %228 = vector.broadcast %8 : vector<1x512xf32> to vector<8x512xf32>
      %229 = arith.mulf %228, %227 : vector<8x512xf32>
      %230 = arith.addf %225, %229 : vector<8x512xf32>
      %231 = vector.broadcast %189 : vector<8x1xf32> to vector<8x512xf32>
      %232 = arith.addf %230, %231 : vector<8x512xf32>
      %c40 = arith.constant 40 : index
      %c0_83 = arith.constant 0 : index
      %233 = vector.load %arg30[%c40, %c0_83] : memref<64x512xf32, #tpu.memory_space<vmem>>, vector<8x512xf32>
      tpu.vector_store %arg30[%c40, %c0_83], %232 {strides = array<i32>} : memref<64x512xf32, #tpu.memory_space<vmem>>, vector<8x512xf32>,
      %c0_84 = arith.constant 0 : index
      %c0_85 = arith.constant 0 : index
      %234 = vector.load %arg30[%c0_84, %c0_85] : memref<64x512xf32, #tpu.memory_space<vmem>>, vector<48x512xf32>
      %235 = arith.index_cast %arg31 : i32 to index
      %c0_86 = arith.constant 0 : index
      %c0_87 = arith.constant 0 : index
      %236 = vector.load %arg15[%235, %c0_86, %c0_87] : memref<4x48x1xf32, #tpu.memory_space<vmem>>, vector<1x48x1xf32>
      %237 = vector.shape_cast %236 : vector<1x48x1xf32> to vector<48x1xf32>
      %238 = arith.index_cast %arg31 : i32 to index
      %c0_88 = arith.constant 0 : index
      %c0_89 = arith.constant 0 : index
      %239 = vector.load %arg16[%238, %c0_88, %c0_89] : memref<4x48x1xf32, #tpu.memory_space<vmem>>, vector<1x48x1xf32>
      %240 = vector.shape_cast %239 : vector<1x48x1xf32> to vector<48x1xf32>
      %241 = vector.broadcast %237 : vector<48x1xf32> to vector<48x512xf32>
      %242 = arith.mulf %234, %241 : vector<48x512xf32>
      %243 = vector.broadcast %240 : vector<48x1xf32> to vector<48x512xf32>
      %244 = arith.addf %242, %243 : vector<48x512xf32>
      %cst_90 = arith.constant 0.00999999977 : f32
      %245 = vector.broadcast %cst_90 : f32 to vector<48x512xf32>
      %246 = arith.mulf %245, %244 : vector<48x512xf32>
      %247 = arith.maximumf %244, %246 : vector<48x512xf32>
      %248 = arith.index_cast %arg31 : i32 to index
      %c0_91 = arith.constant 0 : index
      %c0_92 = arith.constant 0 : index
      %249 = vector.load %arg17[%248, %c0_91, %c0_92] : memref<4x72x48xbf16, #tpu.memory_space<vmem>>, vector<1x72x48xbf16>
      %250 = vector.shape_cast %249 : vector<1x72x48xbf16> to vector<72x48xbf16>
      %251 = arith.truncf %247 : vector<48x512xf32> to vector<48x512xbf16>
      %cst_93 = arith.constant dense<0.000000e+00> : vector<72x512xf32>
      %252 = tpu.matmul %250, %251, %cst_93 {dimension_numbers = #tpu.dot_dimension_numbers<[1], [0], [0], [1], [0, 0, 1, 1], [], []>} : vector<72x48xbf16>, vector<48x512xbf16>, vector<72x512xf32> -> vector<72x512xf32>
      %253 = arith.index_cast %arg31 : i32 to index
      %c0_94 = arith.constant 0 : index
      %c0_95 = arith.constant 0 : index
      %254 = vector.load %arg18[%253, %c0_94, %c0_95] : memref<4x8x1xf32, #tpu.memory_space<vmem>>, vector<1x8x1xf32>
      %255 = vector.shape_cast %254 : vector<1x8x1xf32> to vector<8x1xf32>
      %256 = vector.extract_strided_slice %252 {offsets = [32, 0], sizes = [8, 512], strides = [1, 1]} : vector<72x512xf32> to vector<8x512xf32>
      %257 = vector.extract_strided_slice %252 {offsets = [0, 0], sizes = [8, 512], strides = [1, 1]} : vector<72x512xf32> to vector<8x512xf32>
      %c17_i32_96 = arith.constant 17 : i32
      %258 = tpu.dynamic_rotate %257 by %c17_i32_96 dim 1 : vector<8x512xf32>, i32 -> vector<8x512xf32>
      %259 = vector.broadcast %1 : vector<1x512xf32> to vector<8x512xf32>
      %260 = arith.mulf %259, %258 : vector<8x512xf32>
      %261 = arith.addf %256, %260 : vector<8x512xf32>
      %262 = vector.extract_strided_slice %252 {offsets = [8, 0], sizes = [8, 512], strides = [1, 1]} : vector<72x512xf32> to vector<8x512xf32>
      %c16_i32_97 = arith.constant 16 : i32
      %263 = tpu.dynamic_rotate %262 by %c16_i32_97 dim 1 : vector<8x512xf32>, i32 -> vector<8x512xf32>
      %264 = vector.broadcast %2 : vector<1x512xf32> to vector<8x512xf32>
      %265 = arith.mulf %264, %263 : vector<8x512xf32>
      %266 = arith.addf %261, %265 : vector<8x512xf32>
      %267 = vector.extract_strided_slice %252 {offsets = [16, 0], sizes = [8, 512], strides = [1, 1]} : vector<72x512xf32> to vector<8x512xf32>
      %c15_i32_98 = arith.constant 15 : i32
      %268 = tpu.dynamic_rotate %267 by %c15_i32_98 dim 1 : vector<8x512xf32>, i32 -> vector<8x512xf32>
      %269 = vector.broadcast %3 : vector<1x512xf32> to vector<8x512xf32>
      %270 = arith.mulf %269, %268 : vector<8x512xf32>
      %271 = arith.addf %266, %270 : vector<8x512xf32>
      %272 = vector.extract_strided_slice %252 {offsets = [24, 0], sizes = [8, 512], strides = [1, 1]} : vector<72x512xf32> to vector<8x512xf32>
      %c1_i32_99 = arith.constant 1 : i32
      %273 = tpu.dynamic_rotate %272 by %c1_i32_99 dim 1 : vector<8x512xf32>, i32 -> vector<8x512xf32>
      %274 = vector.broadcast %4 : vector<1x512xf32> to vector<8x512xf32>
      %275 = arith.mulf %274, %273 : vector<8x512xf32>
      %276 = arith.addf %271, %275 : vector<8x512xf32>
      %277 = vector.extract_strided_slice %252 {offsets = [40, 0], sizes = [8, 512], strides = [1, 1]} : vector<72x512xf32> to vector<8x512xf32>
      %c511_i32_100 = arith.constant 511 : i32
      %278 = tpu.dynamic_rotate %277 by %c511_i32_100 dim 1 : vector<8x512xf32>, i32 -> vector<8x512xf32>
      %279 = vector.broadcast %5 : vector<1x512xf32> to vector<8x512xf32>
      %280 = arith.mulf %279, %278 : vector<8x512xf32>
      %281 = arith.addf %276, %280 : vector<8x512xf32>
      %282 = vector.extract_strided_slice %252 {offsets = [48, 0], sizes = [8, 512], strides = [1, 1]} : vector<72x512xf32> to vector<8x512xf32>
      %c497_i32_101 = arith.constant 497 : i32
      %283 = tpu.dynamic_rotate %282 by %c497_i32_101 dim 1 : vector<8x512xf32>, i32 -> vector<8x512xf32>
      %284 = vector.broadcast %6 : vector<1x512xf32> to vector<8x512xf32>
      %285 = arith.mulf %284, %283 : vector<8x512xf32>
      %286 = arith.addf %281, %285 : vector<8x512xf32>
      %287 = vector.extract_strided_slice %252 {offsets = [56, 0], sizes = [8, 512], strides = [1, 1]} : vector<72x512xf32> to vector<8x512xf32>
      %c496_i32_102 = arith.constant 496 : i32
      %288 = tpu.dynamic_rotate %287 by %c496_i32_102 dim 1 : vector<8x512xf32>, i32 -> vector<8x512xf32>
      %289 = vector.broadcast %7 : vector<1x512xf32> to vector<8x512xf32>
      %290 = arith.mulf %289, %288 : vector<8x512xf32>
      %291 = arith.addf %286, %290 : vector<8x512xf32>
      %292 = vector.extract_strided_slice %252 {offsets = [64, 0], sizes = [8, 512], strides = [1, 1]} : vector<72x512xf32> to vector<8x512xf32>
      %c495_i32_103 = arith.constant 495 : i32
      %293 = tpu.dynamic_rotate %292 by %c495_i32_103 dim 1 : vector<8x512xf32>, i32 -> vector<8x512xf32>
      %294 = vector.broadcast %8 : vector<1x512xf32> to vector<8x512xf32>
      %295 = arith.mulf %294, %293 : vector<8x512xf32>
      %296 = arith.addf %291, %295 : vector<8x512xf32>
      %297 = vector.broadcast %255 : vector<8x1xf32> to vector<8x512xf32>
      %298 = arith.addf %296, %297 : vector<8x512xf32>
      %c48 = arith.constant 48 : index
      %c0_104 = arith.constant 0 : index
      %299 = vector.load %arg30[%c48, %c0_104] : memref<64x512xf32, #tpu.memory_space<vmem>>, vector<8x512xf32>
      tpu.vector_store %arg30[%c48, %c0_104], %298 {strides = array<i32>} : memref<64x512xf32, #tpu.memory_space<vmem>>, vector<8x512xf32>,
      %c0_105 = arith.constant 0 : index
      %c0_106 = arith.constant 0 : index
      %300 = vector.load %arg30[%c0_105, %c0_106] : memref<64x512xf32, #tpu.memory_space<vmem>>, vector<56x512xf32>
      %301 = arith.index_cast %arg31 : i32 to index
      %c0_107 = arith.constant 0 : index
      %c0_108 = arith.constant 0 : index
      %302 = vector.load %arg19[%301, %c0_107, %c0_108] : memref<4x56x1xf32, #tpu.memory_space<vmem>>, vector<1x56x1xf32>
      %303 = vector.shape_cast %302 : vector<1x56x1xf32> to vector<56x1xf32>
      %304 = arith.index_cast %arg31 : i32 to index
      %c0_109 = arith.constant 0 : index
      %c0_110 = arith.constant 0 : index
      %305 = vector.load %arg20[%304, %c0_109, %c0_110] : memref<4x56x1xf32, #tpu.memory_space<vmem>>, vector<1x56x1xf32>
      %306 = vector.shape_cast %305 : vector<1x56x1xf32> to vector<56x1xf32>
      %307 = vector.broadcast %303 : vector<56x1xf32> to vector<56x512xf32>
      %308 = arith.mulf %300, %307 : vector<56x512xf32>
      %309 = vector.broadcast %306 : vector<56x1xf32> to vector<56x512xf32>
      %310 = arith.addf %308, %309 : vector<56x512xf32>
      %cst_111 = arith.constant 0.00999999977 : f32
      %311 = vector.broadcast %cst_111 : f32 to vector<56x512xf32>
      %312 = arith.mulf %311, %310 : vector<56x512xf32>
      %313 = arith.maximumf %310, %312 : vector<56x512xf32>
      %314 = arith.index_cast %arg31 : i32 to index
      %c0_112 = arith.constant 0 : index
      %c0_113 = arith.constant 0 : index
      %315 = vector.load %arg21[%314, %c0_112, %c0_113] : memref<4x72x56xbf16, #tpu.memory_space<vmem>>, vector<1x72x56xbf16>
      %316 = vector.shape_cast %315 : vector<1x72x56xbf16> to vector<72x56xbf16>
      %317 = arith.truncf %313 : vector<56x512xf32> to vector<56x512xbf16>
      %cst_114 = arith.constant dense<0.000000e+00> : vector<72x512xf32>
      %318 = tpu.matmul %316, %317, %cst_114 {dimension_numbers = #tpu.dot_dimension_numbers<[1], [0], [0], [1], [0, 0, 1, 1], [], []>} : vector<72x56xbf16>, vector<56x512xbf16>, vector<72x512xf32> -> vector<72x512xf32>
      %319 = arith.index_cast %arg31 : i32 to index
      %c0_115 = arith.constant 0 : index
      %c0_116 = arith.constant 0 : index
      %320 = vector.load %arg22[%319, %c0_115, %c0_116] : memref<4x8x1xf32, #tpu.memory_space<vmem>>, vector<1x8x1xf32>
      %321 = vector.shape_cast %320 : vector<1x8x1xf32> to vector<8x1xf32>
      %322 = vector.extract_strided_slice %318 {offsets = [32, 0], sizes = [8, 512], strides = [1, 1]} : vector<72x512xf32> to vector<8x512xf32>
      %323 = vector.extract_strided_slice %318 {offsets = [0, 0], sizes = [8, 512], strides = [1, 1]} : vector<72x512xf32> to vector<8x512xf32>
      %c17_i32_117 = arith.constant 17 : i32
      %324 = tpu.dynamic_rotate %323 by %c17_i32_117 dim 1 : vector<8x512xf32>, i32 -> vector<8x512xf32>
      %325 = vector.broadcast %1 : vector<1x512xf32> to vector<8x512xf32>
      %326 = arith.mulf %325, %324 : vector<8x512xf32>
      %327 = arith.addf %322, %326 : vector<8x512xf32>
      %328 = vector.extract_strided_slice %318 {offsets = [8, 0], sizes = [8, 512], strides = [1, 1]} : vector<72x512xf32> to vector<8x512xf32>
      %c16_i32_118 = arith.constant 16 : i32
      %329 = tpu.dynamic_rotate %328 by %c16_i32_118 dim 1 : vector<8x512xf32>, i32 -> vector<8x512xf32>
      %330 = vector.broadcast %2 : vector<1x512xf32> to vector<8x512xf32>
      %331 = arith.mulf %330, %329 : vector<8x512xf32>
      %332 = arith.addf %327, %331 : vector<8x512xf32>
      %333 = vector.extract_strided_slice %318 {offsets = [16, 0], sizes = [8, 512], strides = [1, 1]} : vector<72x512xf32> to vector<8x512xf32>
      %c15_i32_119 = arith.constant 15 : i32
      %334 = tpu.dynamic_rotate %333 by %c15_i32_119 dim 1 : vector<8x512xf32>, i32 -> vector<8x512xf32>
      %335 = vector.broadcast %3 : vector<1x512xf32> to vector<8x512xf32>
      %336 = arith.mulf %335, %334 : vector<8x512xf32>
      %337 = arith.addf %332, %336 : vector<8x512xf32>
      %338 = vector.extract_strided_slice %318 {offsets = [24, 0], sizes = [8, 512], strides = [1, 1]} : vector<72x512xf32> to vector<8x512xf32>
      %c1_i32_120 = arith.constant 1 : i32
      %339 = tpu.dynamic_rotate %338 by %c1_i32_120 dim 1 : vector<8x512xf32>, i32 -> vector<8x512xf32>
      %340 = vector.broadcast %4 : vector<1x512xf32> to vector<8x512xf32>
      %341 = arith.mulf %340, %339 : vector<8x512xf32>
      %342 = arith.addf %337, %341 : vector<8x512xf32>
      %343 = vector.extract_strided_slice %318 {offsets = [40, 0], sizes = [8, 512], strides = [1, 1]} : vector<72x512xf32> to vector<8x512xf32>
      %c511_i32_121 = arith.constant 511 : i32
      %344 = tpu.dynamic_rotate %343 by %c511_i32_121 dim 1 : vector<8x512xf32>, i32 -> vector<8x512xf32>
      %345 = vector.broadcast %5 : vector<1x512xf32> to vector<8x512xf32>
      %346 = arith.mulf %345, %344 : vector<8x512xf32>
      %347 = arith.addf %342, %346 : vector<8x512xf32>
      %348 = vector.extract_strided_slice %318 {offsets = [48, 0], sizes = [8, 512], strides = [1, 1]} : vector<72x512xf32> to vector<8x512xf32>
      %c497_i32_122 = arith.constant 497 : i32
      %349 = tpu.dynamic_rotate %348 by %c497_i32_122 dim 1 : vector<8x512xf32>, i32 -> vector<8x512xf32>
      %350 = vector.broadcast %6 : vector<1x512xf32> to vector<8x512xf32>
      %351 = arith.mulf %350, %349 : vector<8x512xf32>
      %352 = arith.addf %347, %351 : vector<8x512xf32>
      %353 = vector.extract_strided_slice %318 {offsets = [56, 0], sizes = [8, 512], strides = [1, 1]} : vector<72x512xf32> to vector<8x512xf32>
      %c496_i32_123 = arith.constant 496 : i32
      %354 = tpu.dynamic_rotate %353 by %c496_i32_123 dim 1 : vector<8x512xf32>, i32 -> vector<8x512xf32>
      %355 = vector.broadcast %7 : vector<1x512xf32> to vector<8x512xf32>
      %356 = arith.mulf %355, %354 : vector<8x512xf32>
      %357 = arith.addf %352, %356 : vector<8x512xf32>
      %358 = vector.extract_strided_slice %318 {offsets = [64, 0], sizes = [8, 512], strides = [1, 1]} : vector<72x512xf32> to vector<8x512xf32>
      %c495_i32_124 = arith.constant 495 : i32
      %359 = tpu.dynamic_rotate %358 by %c495_i32_124 dim 1 : vector<8x512xf32>, i32 -> vector<8x512xf32>
      %360 = vector.broadcast %8 : vector<1x512xf32> to vector<8x512xf32>
      %361 = arith.mulf %360, %359 : vector<8x512xf32>
      %362 = arith.addf %357, %361 : vector<8x512xf32>
      %363 = vector.broadcast %321 : vector<8x1xf32> to vector<8x512xf32>
      %364 = arith.addf %362, %363 : vector<8x512xf32>
      %c56 = arith.constant 56 : index
      %c0_125 = arith.constant 0 : index
      %365 = vector.load %arg30[%c56, %c0_125] : memref<64x512xf32, #tpu.memory_space<vmem>>, vector<8x512xf32>
      tpu.vector_store %arg30[%c56, %c0_125], %364 {strides = array<i32>} : memref<64x512xf32, #tpu.memory_space<vmem>>, vector<8x512xf32>,
      %c0_126 = arith.constant 0 : index
      %c0_127 = arith.constant 0 : index
      %366 = vector.load %arg30[%c0_126, %c0_127] : memref<64x512xf32, #tpu.memory_space<vmem>>, vector<64x512xf32>
      %367 = arith.truncf %366 : vector<64x512xf32> to vector<64x512xbf16>
      %368 = arith.index_cast %arg31 : i32 to index
      %c0_128 = arith.constant 0 : index
      %c0_129 = arith.constant 0 : index
      %369 = vector.load %arg23[%368, %c0_128, %c0_129] : memref<4x32x64xbf16, #tpu.memory_space<vmem>>, vector<1x32x64xbf16>
      %370 = vector.shape_cast %369 : vector<1x32x64xbf16> to vector<32x64xbf16>
      %cst_130 = arith.constant dense<0.000000e+00> : vector<32x512xf32>
      %371 = tpu.matmul %370, %367, %cst_130 {dimension_numbers = #tpu.dot_dimension_numbers<[1], [0], [0], [1], [0, 0, 1, 1], [], []>} : vector<32x64xbf16>, vector<64x512xbf16>, vector<32x512xf32> -> vector<32x512xf32>
      %372 = arith.index_cast %arg31 : i32 to index
      %c0_131 = arith.constant 0 : index
      %c0_132 = arith.constant 0 : index
      %373 = vector.load %arg24[%372, %c0_131, %c0_132] : memref<4x32x1xf32, #tpu.memory_space<vmem>>, vector<1x32x1xf32>
      %374 = vector.shape_cast %373 : vector<1x32x1xf32> to vector<32x1xf32>
      %375 = vector.broadcast %374 : vector<32x1xf32> to vector<32x512xf32>
      %376 = arith.addf %371, %375 : vector<32x512xf32>
      %c0_133 = arith.constant 0 : index
      %c0_134 = arith.constant 0 : index
      %377 = vector.load %arg30[%c0_133, %c0_134] : memref<64x512xf32, #tpu.memory_space<vmem>>, vector<32x512xf32>
      tpu.vector_store %arg30[%c0_133, %c0_134], %376 {strides = array<i32>} : memref<64x512xf32, #tpu.memory_space<vmem>>, vector<32x512xf32>,
    }
    %c4_i32_16 = arith.constant 4 : i32
    %c0_17 = arith.constant 0 : index
    %c0_18 = arith.constant 0 : index
    %45 = vector.load %arg30[%c0_17, %c0_18] : memref<64x512xf32, #tpu.memory_space<vmem>>, vector<32x512xf32>
    %c0_19 = arith.constant 0 : index
    %c0_20 = arith.constant 0 : index
    %46 = vector.load %arg25[%c0_19, %c0_20] : memref<32x1xf32, #tpu.memory_space<vmem>>, vector<32x1xf32>
    %c0_21 = arith.constant 0 : index
    %c0_22 = arith.constant 0 : index
    %47 = vector.load %arg26[%c0_21, %c0_22] : memref<32x1xf32, #tpu.memory_space<vmem>>, vector<32x1xf32>
    %48 = vector.broadcast %46 : vector<32x1xf32> to vector<32x512xf32>
    %49 = arith.mulf %45, %48 : vector<32x512xf32>
    %50 = vector.broadcast %47 : vector<32x1xf32> to vector<32x512xf32>
    %51 = arith.addf %49, %50 : vector<32x512xf32>
    %cst_23 = arith.constant 0.00999999977 : f32
    %52 = vector.broadcast %cst_23 : f32 to vector<32x512xf32>
    %53 = arith.mulf %52, %51 : vector<32x512xf32>
    %54 = arith.maximumf %51, %53 : vector<32x512xf32>
    %c0_24 = arith.constant 0 : index
    %c0_25 = arith.constant 0 : index
    %55 = vector.load %arg27[%c0_24, %c0_25] : memref<9x32xbf16, #tpu.memory_space<vmem>>, vector<9x32xbf16>
    %56 = arith.truncf %54 : vector<32x512xf32> to vector<32x512xbf16>
    %cst_26 = arith.constant dense<0.000000e+00> : vector<9x512xf32>
    %57 = tpu.matmul %55, %56, %cst_26 {dimension_numbers = #tpu.dot_dimension_numbers<[1], [0], [0], [1], [0, 0, 1, 1], [], []>} : vector<9x32xbf16>, vector<32x512xbf16>, vector<9x512xf32> -> vector<9x512xf32>
    %c0_27 = arith.constant 0 : index
    %c0_28 = arith.constant 0 : index
    %58 = vector.load %arg28[%c0_27, %c0_28] : memref<1x1xf32, #tpu.memory_space<vmem>>, vector<1x1xf32>
    %59 = vector.extract_strided_slice %57 {offsets = [4, 0], sizes = [1, 512], strides = [1, 1]} : vector<9x512xf32> to vector<1x512xf32>
    %60 = vector.extract_strided_slice %57 {offsets = [0, 0], sizes = [1, 512], strides = [1, 1]} : vector<9x512xf32> to vector<1x512xf32>
    %c17_i32_29 = arith.constant 17 : i32
    %61 = tpu.dynamic_rotate %60 by %c17_i32_29 dim 1 : vector<1x512xf32>, i32 -> vector<1x512xf32>
    %62 = arith.mulf %1, %61 : vector<1x512xf32>
    %63 = arith.addf %59, %62 : vector<1x512xf32>
    %64 = vector.extract_strided_slice %57 {offsets = [1, 0], sizes = [1, 512], strides = [1, 1]} : vector<9x512xf32> to vector<1x512xf32>
    %c16_i32_30 = arith.constant 16 : i32
    %65 = tpu.dynamic_rotate %64 by %c16_i32_30 dim 1 : vector<1x512xf32>, i32 -> vector<1x512xf32>
    %66 = arith.mulf %2, %65 : vector<1x512xf32>
    %67 = arith.addf %63, %66 : vector<1x512xf32>
    %68 = vector.extract_strided_slice %57 {offsets = [2, 0], sizes = [1, 512], strides = [1, 1]} : vector<9x512xf32> to vector<1x512xf32>
    %c15_i32_31 = arith.constant 15 : i32
    %69 = tpu.dynamic_rotate %68 by %c15_i32_31 dim 1 : vector<1x512xf32>, i32 -> vector<1x512xf32>
    %70 = arith.mulf %3, %69 : vector<1x512xf32>
    %71 = arith.addf %67, %70 : vector<1x512xf32>
    %72 = vector.extract_strided_slice %57 {offsets = [3, 0], sizes = [1, 512], strides = [1, 1]} : vector<9x512xf32> to vector<1x512xf32>
    %c1_i32_32 = arith.constant 1 : i32
    %73 = tpu.dynamic_rotate %72 by %c1_i32_32 dim 1 : vector<1x512xf32>, i32 -> vector<1x512xf32>
    %74 = arith.mulf %4, %73 : vector<1x512xf32>
    %75 = arith.addf %71, %74 : vector<1x512xf32>
    %76 = vector.extract_strided_slice %57 {offsets = [5, 0], sizes = [1, 512], strides = [1, 1]} : vector<9x512xf32> to vector<1x512xf32>
    %c511_i32_33 = arith.constant 511 : i32
    %77 = tpu.dynamic_rotate %76 by %c511_i32_33 dim 1 : vector<1x512xf32>, i32 -> vector<1x512xf32>
    %78 = arith.mulf %5, %77 : vector<1x512xf32>
    %79 = arith.addf %75, %78 : vector<1x512xf32>
    %80 = vector.extract_strided_slice %57 {offsets = [6, 0], sizes = [1, 512], strides = [1, 1]} : vector<9x512xf32> to vector<1x512xf32>
    %c497_i32_34 = arith.constant 497 : i32
    %81 = tpu.dynamic_rotate %80 by %c497_i32_34 dim 1 : vector<1x512xf32>, i32 -> vector<1x512xf32>
    %82 = arith.mulf %6, %81 : vector<1x512xf32>
    %83 = arith.addf %79, %82 : vector<1x512xf32>
    %84 = vector.extract_strided_slice %57 {offsets = [7, 0], sizes = [1, 512], strides = [1, 1]} : vector<9x512xf32> to vector<1x512xf32>
    %c496_i32_35 = arith.constant 496 : i32
    %85 = tpu.dynamic_rotate %84 by %c496_i32_35 dim 1 : vector<1x512xf32>, i32 -> vector<1x512xf32>
    %86 = arith.mulf %7, %85 : vector<1x512xf32>
    %87 = arith.addf %83, %86 : vector<1x512xf32>
    %88 = vector.extract_strided_slice %57 {offsets = [8, 0], sizes = [1, 512], strides = [1, 1]} : vector<9x512xf32> to vector<1x512xf32>
    %c495_i32_36 = arith.constant 495 : i32
    %89 = tpu.dynamic_rotate %88 by %c495_i32_36 dim 1 : vector<1x512xf32>, i32 -> vector<1x512xf32>
    %90 = arith.mulf %8, %89 : vector<1x512xf32>
    %91 = arith.addf %87, %90 : vector<1x512xf32>
    %92 = vector.broadcast %58 : vector<1x1xf32> to vector<1x512xf32>
    %93 = arith.addf %91, %92 : vector<1x512xf32>
    %cst_37 = arith.constant 0.000000e+00 : f32
    %94 = vector.broadcast %cst_37 : f32 to vector<1x512xf32>
    %95 = arith.cmpf oeq, %10, %94 : vector<1x512xf32>
    %cst_38 = arith.constant 0.000000e+00 : f32
    %96 = vector.broadcast %cst_38 : f32 to vector<1x512xf32>
    %97 = arith.select %95, %93, %96 : vector<1x512xi1>, vector<1x512xf32>
    %98 = arith.addf %97, %10 : vector<1x512xf32>
    %c0_39 = arith.constant 0 : index
    %c0_40 = arith.constant 0 : index
    %c0_41 = arith.constant 0 : index
    %99 = vector.load %arg29[%c0_39, %c0_40, %c0_41] : memref<1x1x512xf32, #tpu.memory_space<vmem>>, vector<1x1x512xf32>
    %100 = vector.shape_cast %99 : vector<1x1x512xf32> to vector<1x512xf32>
    %101 = vector.shape_cast %98 : vector<1x512xf32> to vector<1x1x512xf32>
    tpu.vector_store %arg29[%c0_39, %c0_40, %c0_41], %101 {strides = array<i32>} : memref<1x1x512xf32, #tpu.memory_space<vmem>>, vector<1x1x512xf32>,
    return
  }
  func.func @transform_0(%arg0: i32) -> (i32, i32, i32) {
    %c0_i32 = arith.constant 0 : i32
    %c0_i32_0 = arith.constant 0 : i32
    %c0_i32_1 = arith.constant 0 : i32
    return %arg0, %c0_i32, %c0_i32_0 : i32, i32, i32
  }
  func.func @transform_1(%arg0: i32) -> (i32, i32) {
    %c0_i32 = arith.constant 0 : i32
    %c0_i32_0 = arith.constant 0 : i32
    %c0_i32_1 = arith.constant 0 : i32
    return %c0_i32, %c0_i32_0 : i32, i32
  }
  func.func @transform_2(%arg0: i32) -> (i32, i32) {
    %c0_i32 = arith.constant 0 : i32
    %c0_i32_0 = arith.constant 0 : i32
    %c0_i32_1 = arith.constant 0 : i32
    return %c0_i32, %c0_i32_0 : i32, i32
  }
  func.func @transform_3(%arg0: i32) -> (i32, i32) {
    %c0_i32 = arith.constant 0 : i32
    %c0_i32_0 = arith.constant 0 : i32
    %c0_i32_1 = arith.constant 0 : i32
    return %c0_i32, %c0_i32_0 : i32, i32
  }
  func.func @transform_4(%arg0: i32) -> (i32, i32) {
    %c0_i32 = arith.constant 0 : i32
    %c0_i32_0 = arith.constant 0 : i32
    %c0_i32_1 = arith.constant 0 : i32
    return %c0_i32, %c0_i32_0 : i32, i32
  }
  func.func @transform_5(%arg0: i32) -> (i32, i32) {
    %c0_i32 = arith.constant 0 : i32
    %c0_i32_0 = arith.constant 0 : i32
    %c0_i32_1 = arith.constant 0 : i32
    return %c0_i32, %c0_i32_0 : i32, i32
  }
  func.func @transform_6(%arg0: i32) -> (i32, i32, i32) {
    %c0_i32 = arith.constant 0 : i32
    %c0_i32_0 = arith.constant 0 : i32
    %c0_i32_1 = arith.constant 0 : i32
    %c0_i32_2 = arith.constant 0 : i32
    return %c0_i32, %c0_i32_0, %c0_i32_1 : i32, i32, i32
  }
  func.func @transform_7(%arg0: i32) -> (i32, i32, i32) {
    %c0_i32 = arith.constant 0 : i32
    %c0_i32_0 = arith.constant 0 : i32
    %c0_i32_1 = arith.constant 0 : i32
    %c0_i32_2 = arith.constant 0 : i32
    return %c0_i32, %c0_i32_0, %c0_i32_1 : i32, i32, i32
  }
  func.func @transform_8(%arg0: i32) -> (i32, i32, i32) {
    %c0_i32 = arith.constant 0 : i32
    %c0_i32_0 = arith.constant 0 : i32
    %c0_i32_1 = arith.constant 0 : i32
    %c0_i32_2 = arith.constant 0 : i32
    return %c0_i32, %c0_i32_0, %c0_i32_1 : i32, i32, i32
  }
  func.func @transform_9(%arg0: i32) -> (i32, i32, i32) {
    %c0_i32 = arith.constant 0 : i32
    %c0_i32_0 = arith.constant 0 : i32
    %c0_i32_1 = arith.constant 0 : i32
    %c0_i32_2 = arith.constant 0 : i32
    return %c0_i32, %c0_i32_0, %c0_i32_1 : i32, i32, i32
  }
  func.func @transform_10(%arg0: i32) -> (i32, i32, i32) {
    %c0_i32 = arith.constant 0 : i32
    %c0_i32_0 = arith.constant 0 : i32
    %c0_i32_1 = arith.constant 0 : i32
    %c0_i32_2 = arith.constant 0 : i32
    return %c0_i32, %c0_i32_0, %c0_i32_1 : i32, i32, i32
  }
  func.func @transform_11(%arg0: i32) -> (i32, i32, i32) {
    %c0_i32 = arith.constant 0 : i32
    %c0_i32_0 = arith.constant 0 : i32
    %c0_i32_1 = arith.constant 0 : i32
    %c0_i32_2 = arith.constant 0 : i32
    return %c0_i32, %c0_i32_0, %c0_i32_1 : i32, i32, i32
  }
  func.func @transform_12(%arg0: i32) -> (i32, i32, i32) {
    %c0_i32 = arith.constant 0 : i32
    %c0_i32_0 = arith.constant 0 : i32
    %c0_i32_1 = arith.constant 0 : i32
    %c0_i32_2 = arith.constant 0 : i32
    return %c0_i32, %c0_i32_0, %c0_i32_1 : i32, i32, i32
  }
  func.func @transform_13(%arg0: i32) -> (i32, i32, i32) {
    %c0_i32 = arith.constant 0 : i32
    %c0_i32_0 = arith.constant 0 : i32
    %c0_i32_1 = arith.constant 0 : i32
    %c0_i32_2 = arith.constant 0 : i32
    return %c0_i32, %c0_i32_0, %c0_i32_1 : i32, i32, i32
  }
  func.func @transform_14(%arg0: i32) -> (i32, i32, i32) {
    %c0_i32 = arith.constant 0 : i32
    %c0_i32_0 = arith.constant 0 : i32
    %c0_i32_1 = arith.constant 0 : i32
    %c0_i32_2 = arith.constant 0 : i32
    return %c0_i32, %c0_i32_0, %c0_i32_1 : i32, i32, i32
  }
  func.func @transform_15(%arg0: i32) -> (i32, i32, i32) {
    %c0_i32 = arith.constant 0 : i32
    %c0_i32_0 = arith.constant 0 : i32
    %c0_i32_1 = arith.constant 0 : i32
    %c0_i32_2 = arith.constant 0 : i32
    return %c0_i32, %c0_i32_0, %c0_i32_1 : i32, i32, i32
  }
  func.func @transform_16(%arg0: i32) -> (i32, i32, i32) {
    %c0_i32 = arith.constant 0 : i32
    %c0_i32_0 = arith.constant 0 : i32
    %c0_i32_1 = arith.constant 0 : i32
    %c0_i32_2 = arith.constant 0 : i32
    return %c0_i32, %c0_i32_0, %c0_i32_1 : i32, i32, i32
  }
  func.func @transform_17(%arg0: i32) -> (i32, i32, i32) {
    %c0_i32 = arith.constant 0 : i32
    %c0_i32_0 = arith.constant 0 : i32
    %c0_i32_1 = arith.constant 0 : i32
    %c0_i32_2 = arith.constant 0 : i32
    return %c0_i32, %c0_i32_0, %c0_i32_1 : i32, i32, i32
  }
  func.func @transform_18(%arg0: i32) -> (i32, i32, i32) {
    %c0_i32 = arith.constant 0 : i32
    %c0_i32_0 = arith.constant 0 : i32
    %c0_i32_1 = arith.constant 0 : i32
    %c0_i32_2 = arith.constant 0 : i32
    return %c0_i32, %c0_i32_0, %c0_i32_1 : i32, i32, i32
  }
  func.func @transform_19(%arg0: i32) -> (i32, i32, i32) {
    %c0_i32 = arith.constant 0 : i32
    %c0_i32_0 = arith.constant 0 : i32
    %c0_i32_1 = arith.constant 0 : i32
    %c0_i32_2 = arith.constant 0 : i32
    return %c0_i32, %c0_i32_0, %c0_i32_1 : i32, i32, i32
  }
  func.func @transform_20(%arg0: i32) -> (i32, i32, i32) {
    %c0_i32 = arith.constant 0 : i32
    %c0_i32_0 = arith.constant 0 : i32
    %c0_i32_1 = arith.constant 0 : i32
    %c0_i32_2 = arith.constant 0 : i32
    return %c0_i32, %c0_i32_0, %c0_i32_1 : i32, i32, i32
  }
  func.func @transform_21(%arg0: i32) -> (i32, i32, i32) {
    %c0_i32 = arith.constant 0 : i32
    %c0_i32_0 = arith.constant 0 : i32
    %c0_i32_1 = arith.constant 0 : i32
    %c0_i32_2 = arith.constant 0 : i32
    return %c0_i32, %c0_i32_0, %c0_i32_1 : i32, i32, i32
  }
  func.func @transform_22(%arg0: i32) -> (i32, i32, i32) {
    %c0_i32 = arith.constant 0 : i32
    %c0_i32_0 = arith.constant 0 : i32
    %c0_i32_1 = arith.constant 0 : i32
    %c0_i32_2 = arith.constant 0 : i32
    return %c0_i32, %c0_i32_0, %c0_i32_1 : i32, i32, i32
  }
  func.func @transform_23(%arg0: i32) -> (i32, i32, i32) {
    %c0_i32 = arith.constant 0 : i32
    %c0_i32_0 = arith.constant 0 : i32
    %c0_i32_1 = arith.constant 0 : i32
    %c0_i32_2 = arith.constant 0 : i32
    return %c0_i32, %c0_i32_0, %c0_i32_1 : i32, i32, i32
  }
  func.func @transform_24(%arg0: i32) -> (i32, i32) {
    %c0_i32 = arith.constant 0 : i32
    %c0_i32_0 = arith.constant 0 : i32
    %c0_i32_1 = arith.constant 0 : i32
    return %c0_i32, %c0_i32_0 : i32, i32
  }
  func.func @transform_25(%arg0: i32) -> (i32, i32) {
    %c0_i32 = arith.constant 0 : i32
    %c0_i32_0 = arith.constant 0 : i32
    %c0_i32_1 = arith.constant 0 : i32
    return %c0_i32, %c0_i32_0 : i32, i32
  }
  func.func @transform_26(%arg0: i32) -> (i32, i32) {
    %c0_i32 = arith.constant 0 : i32
    %c0_i32_0 = arith.constant 0 : i32
    %c0_i32_1 = arith.constant 0 : i32
    return %c0_i32, %c0_i32_0 : i32, i32
  }
  func.func @transform_27(%arg0: i32) -> (i32, i32) {
    %c0_i32 = arith.constant 0 : i32
    %c0_i32_0 = arith.constant 0 : i32
    %c0_i32_1 = arith.constant 0 : i32
    return %c0_i32, %c0_i32_0 : i32, i32
  }
  func.func @transform_28(%arg0: i32) -> (i32, i32, i32) {
    %c0_i32 = arith.constant 0 : i32
    %c0_i32_0 = arith.constant 0 : i32
    %c0_i32_1 = arith.constant 0 : i32
    return %arg0, %c0_i32, %c0_i32_0 : i32, i32, i32
  }
}

</mosaic_0001>

<llo_original>
// kernel: tpu_custom_call.1
$region0: #{tpu_custom_call.1}
  #allocation0 [shape = 'u32[]', space=smem, size = 0x4, offset = 0x4, fixed_abs, tag = 'smem constant byte address 0x4 - core index']
  #allocation1 [shape = 'u32[72,128]{1,0:T(1,128)}', space=vmem, size = 0x9000, scoped, tag = 'internal scratch']
  #allocation2 [shape = 'f32[64,512]{1,0:T(8,128)}', space=vmem, size = 0x20000, scoped, tag = 'scratch operand']
  #allocation3 [shape = 'f32[1,1]{1,0:T(1,128)S(1)}', space=vmem, size = 0x200, scoped, tag = 'scoped memory for tpu_custom_call.1']
  %s0 = inlined_call_operand.vmem [shape: f32[1,1,512], index: 0, kind: input, shape index: {}]
  %s1 = inlined_call_operand.vmem [shape: f32[9,512], index: 1, kind: input, shape index: {}]
  %s2 = inlined_call_operand.vmem [shape: f32[32,1], index: 2, kind: input, shape index: {}]
  %s3 = inlined_call_operand.vmem [shape: f32[32,1], index: 3, kind: input, shape index: {}]
  %s4 = inlined_call_operand.vmem [shape: bf16[32,9], index: 4, kind: input, shape index: {}]
  %s5 = inlined_call_operand.vmem [shape: f32[32,1], index: 5, kind: input, shape index: {}]
  %s6 = inlined_call_operand.vmem [shape: f32[4,32,1], index: 6, kind: input, shape index: {}]
  %s7 = inlined_call_operand.vmem [shape: f32[4,32,1], index: 7, kind: input, shape index: {}]
  %s8 = inlined_call_operand.vmem [shape: bf16[4,72,32], index: 8, kind: input, shape index: {}]
  %s9 = inlined_call_operand.vmem [shape: f32[4,8,1], index: 9, kind: input, shape index: {}]
  %s10 = inlined_call_operand.vmem [shape: f32[4,40,1], index: 10, kind: input, shape index: {}]
  %s11 = inlined_call_operand.vmem [shape: f32[4,40,1], index: 11, kind: input, shape index: {}]
  %s12 = inlined_call_operand.vmem [shape: bf16[4,72,40], index: 12, kind: input, shape index: {}]
  %s13 = inlined_call_operand.vmem [shape: f32[4,8,1], index: 13, kind: input, shape index: {}]
  %s14 = inlined_call_operand.vmem [shape: f32[4,48,1], index: 14, kind: input, shape index: {}]
  %s15 = inlined_call_operand.vmem [shape: f32[4,48,1], index: 15, kind: input, shape index: {}]
  %s16 = inlined_call_operand.vmem [shape: bf16[4,72,48], index: 16, kind: input, shape index: {}]
  %s17 = inlined_call_operand.vmem [shape: f32[4,8,1], index: 17, kind: input, shape index: {}]
  %s18 = inlined_call_operand.vmem [shape: f32[4,56,1], index: 18, kind: input, shape index: {}]
  %s19 = inlined_call_operand.vmem [shape: f32[4,56,1], index: 19, kind: input, shape index: {}]
  %s20 = inlined_call_operand.vmem [shape: bf16[4,72,56], index: 20, kind: input, shape index: {}]
  %s21 = inlined_call_operand.vmem [shape: f32[4,8,1], index: 21, kind: input, shape index: {}]
  %s22 = inlined_call_operand.vmem [shape: bf16[4,32,64], index: 22, kind: input, shape index: {}]
  %s23 = inlined_call_operand.vmem [shape: f32[4,32,1], index: 23, kind: input, shape index: {}]
  %s24 = inlined_call_operand.vmem [shape: f32[32,1], index: 24, kind: input, shape index: {}]
  %s25 = inlined_call_operand.vmem [shape: f32[32,1], index: 25, kind: input, shape index: {}]
  %s26 = inlined_call_operand.vmem [shape: bf16[9,32], index: 26, kind: input, shape index: {}]
  %s27 = inlined_call_operand.<no memory space> [shape: f32[1,1], index: 27, kind: input, shape index: {}]
  %s28 = inlined_call_operand.hbm [shape: f32[1,1,512], index: 28, kind: output, shape index: {}]
  %s29 = sld [smem:[#allocation0]]
  $region129: #{tpu_custom_call.1} parent=0
    _
  %s31 = ssub.s32 1, %s29
  %s32 = scalar_select 0, %s31, %s29
  %v33 = vstv %s27
  %34 = vst [vmem:[#allocation3] sm:$0x1] %v33
  $region1: #{tpu_custom_call.1} parent=0
    #allocation4 [shape = 'u8[2048]{0}', space=vmem, size = 0x800, scoped, tag = 'output window, operand 0, single buffered']
    #allocation5 [shape = 's32[1]{0}', space=sflag, size = 0x4, scoped, tag = 'scoped memory for tpu_custom_call.1']
    %35 = vsyncpa [#allocation5], 0
    // Predicated region
    $region2: #{tpu_custom_call.1} parent=1 // pred_check
      _
    $region3: #{tpu_custom_call.1} parent=1 // pred_check_branch
      %37 = sbr.rel (0) target = $region5
    $region4: #{tpu_custom_call.1} parent=1 // pred_region
      _
    $region5: #{tpu_custom_call.1} parent=1 // pred_fallthru
      _
    // Predicated region
    $region6: #{tpu_custom_call.1} parent=1 // pred_check
      _
    $region7: #{tpu_custom_call.1} parent=1 // pred_check_branch
      %39 = sbr.rel (0) target = $region9
    $region8: #{tpu_custom_call.1} parent=1 // pred_region
      _
    $region9: #{tpu_custom_call.1} parent=1 // pred_fallthru
      _
    // Predicated region
    $region10: #{tpu_custom_call.1} parent=1 // pred_check
      _
    $region11: #{tpu_custom_call.1} parent=1 // pred_check_branch
      %41 = sbr.rel (0) target = $region13
    $region12: #{tpu_custom_call.1} parent=1 // pred_region
      _
    $region13: #{tpu_custom_call.1} parent=1 // pred_fallthru
      _
    // Predicated region
    $region14: #{tpu_custom_call.1} parent=1 // pred_check
      _
    $region15: #{tpu_custom_call.1} parent=1 // pred_check_branch
      %43 = sbr.rel (0) target = $region17
    $region16: #{tpu_custom_call.1} parent=1 // pred_region
      _
    $region17: #{tpu_custom_call.1} parent=1 // pred_fallthru
      _
    // Predicated region
    $region18: #{tpu_custom_call.1} parent=1 // pred_check
      _
    $region19: #{tpu_custom_call.1} parent=1 // pred_check_branch
      %45 = sbr.rel (0) target = $region21
    $region20: #{tpu_custom_call.1} parent=1 // pred_region
      _
    $region21: #{tpu_custom_call.1} parent=1 // pred_fallthru
      _
    // Predicated region
    $region22: #{tpu_custom_call.1} parent=1 // pred_check
      _
    $region23: #{tpu_custom_call.1} parent=1 // pred_check_branch
      %47 = sbr.rel (0) target = $region25
    $region24: #{tpu_custom_call.1} parent=1 // pred_region
      _
    $region25: #{tpu_custom_call.1} parent=1 // pred_fallthru
      _
    // Predicated region
    $region26: #{tpu_custom_call.1} parent=1 // pred_check
      _
    $region27: #{tpu_custom_call.1} parent=1 // pred_check_branch
      %49 = sbr.rel (0) target = $region29
    $region28: #{tpu_custom_call.1} parent=1 // pred_region
      _
    $region29: #{tpu_custom_call.1} parent=1 // pred_fallthru
      _
    // Predicated region
    $region30: #{tpu_custom_call.1} parent=1 // pred_check
      _
    $region31: #{tpu_custom_call.1} parent=1 // pred_check_branch
      %51 = sbr.rel (0) target = $region33
    $region32: #{tpu_custom_call.1} parent=1 // pred_region
      _
    $region33: #{tpu_custom_call.1} parent=1 // pred_fallthru
      _
    // Predicated region
    $region34: #{tpu_custom_call.1} parent=1 // pred_check
      _
    $region35: #{tpu_custom_call.1} parent=1 // pred_check_branch
      %53 = sbr.rel (0) target = $region37
    $region36: #{tpu_custom_call.1} parent=1 // pred_region
      _
    $region37: #{tpu_custom_call.1} parent=1 // pred_fallthru
      _
    // Predicated region
    $region38: #{tpu_custom_call.1} parent=1 // pred_check
      _
    $region39: #{tpu_custom_call.1} parent=1 // pred_check_branch
      %55 = sbr.rel (0) target = $region41
    $region40: #{tpu_custom_call.1} parent=1 // pred_region
      _
    $region41: #{tpu_custom_call.1} parent=1 // pred_fallthru
      _
    // Predicated region
    $region42: #{tpu_custom_call.1} parent=1 // pred_check
      _
    $region43: #{tpu_custom_call.1} parent=1 // pred_check_branch
      %57 = sbr.rel (0) target = $region45
    $region44: #{tpu_custom_call.1} parent=1 // pred_region
      _
    $region45: #{tpu_custom_call.1} parent=1 // pred_fallthru
      _
    // Predicated region
    $region46: #{tpu_custom_call.1} parent=1 // pred_check
      _
    $region47: #{tpu_custom_call.1} parent=1 // pred_check_branch
      %59 = sbr.rel (0) target = $region49
    $region48: #{tpu_custom_call.1} parent=1 // pred_region
      _
    $region49: #{tpu_custom_call.1} parent=1 // pred_fallthru
      _
    // Predicated region
    $region50: #{tpu_custom_call.1} parent=1 // pred_check
      _
    $region51: #{tpu_custom_call.1} parent=1 // pred_check_branch
      %61 = sbr.rel (0) target = $region53
    $region52: #{tpu_custom_call.1} parent=1 // pred_region
      _
    $region53: #{tpu_custom_call.1} parent=1 // pred_fallthru
      _
    // Predicated region
    $region54: #{tpu_custom_call.1} parent=1 // pred_check
      _
    $region55: #{tpu_custom_call.1} parent=1 // pred_check_branch
      %63 = sbr.rel (0) target = $region57
    $region56: #{tpu_custom_call.1} parent=1 // pred_region
      _
    $region57: #{tpu_custom_call.1} parent=1 // pred_fallthru
      _
    // Predicated region
    $region58: #{tpu_custom_call.1} parent=1 // pred_check
      _
    $region59: #{tpu_custom_call.1} parent=1 // pred_check_branch
      %65 = sbr.rel (0) target = $region61
    $region60: #{tpu_custom_call.1} parent=1 // pred_region
      _
    $region61: #{tpu_custom_call.1} parent=1 // pred_fallthru
      _
    // Predicated region
    $region62: #{tpu_custom_call.1} parent=1 // pred_check
      _
    $region63: #{tpu_custom_call.1} parent=1 // pred_check_branch
      %67 = sbr.rel (0) target = $region65
    $region64: #{tpu_custom_call.1} parent=1 // pred_region
      _
    $region65: #{tpu_custom_call.1} parent=1 // pred_fallthru
      _
    // Predicated region
    $region66: #{tpu_custom_call.1} parent=1 // pred_check
      _
    $region67: #{tpu_custom_call.1} parent=1 // pred_check_branch
      %69 = sbr.rel (0) target = $region69
    $region68: #{tpu_custom_call.1} parent=1 // pred_region
      _
    $region69: #{tpu_custom_call.1} parent=1 // pred_fallthru
      _
    // Predicated region
    $region70: #{tpu_custom_call.1} parent=1 // pred_check
      _
    $region71: #{tpu_custom_call.1} parent=1 // pred_check_branch
      %71 = sbr.rel (0) target = $region73
    $region72: #{tpu_custom_call.1} parent=1 // pred_region
      _
    $region73: #{tpu_custom_call.1} parent=1 // pred_fallthru
      _
    // Predicated region
    $region74: #{tpu_custom_call.1} parent=1 // pred_check
      _
    $region75: #{tpu_custom_call.1} parent=1 // pred_check_branch
      %73 = sbr.rel (0) target = $region77
    $region76: #{tpu_custom_call.1} parent=1 // pred_region
      _
    $region77: #{tpu_custom_call.1} parent=1 // pred_fallthru
      _
    // Predicated region
    $region78: #{tpu_custom_call.1} parent=1 // pred_check
      _
    $region79: #{tpu_custom_call.1} parent=1 // pred_check_branch
      %75 = sbr.rel (0) target = $region81
    $region80: #{tpu_custom_call.1} parent=1 // pred_region
      _
    $region81: #{tpu_custom_call.1} parent=1 // pred_fallthru
      _
    // Predicated region
    $region82: #{tpu_custom_call.1} parent=1 // pred_check
      _
    $region83: #{tpu_custom_call.1} parent=1 // pred_check_branch
      %77 = sbr.rel (0) target = $region85
    $region84: #{tpu_custom_call.1} parent=1 // pred_region
      _
    $region85: #{tpu_custom_call.1} parent=1 // pred_fallthru
      _
    // Predicated region
    $region86: #{tpu_custom_call.1} parent=1 // pred_check
      _
    $region87: #{tpu_custom_call.1} parent=1 // pred_check_branch
      %79 = sbr.rel (0) target = $region89
    $region88: #{tpu_custom_call.1} parent=1 // pred_region
      _
    $region89: #{tpu_custom_call.1} parent=1 // pred_fallthru
      _
    // Predicated region
    $region90: #{tpu_custom_call.1} parent=1 // pred_check
      _
    $region91: #{tpu_custom_call.1} parent=1 // pred_check_branch
      %81 = sbr.rel (0) target = $region93
    $region92: #{tpu_custom_call.1} parent=1 // pred_region
      _
    $region93: #{tpu_custom_call.1} parent=1 // pred_fallthru
      _
    // Predicated region
    $region94: #{tpu_custom_call.1} parent=1 // pred_check
      _
    $region95: #{tpu_custom_call.1} parent=1 // pred_check_branch
      %83 = sbr.rel (0) target = $region97
    $region96: #{tpu_custom_call.1} parent=1 // pred_region
      _
    $region97: #{tpu_custom_call.1} parent=1 // pred_fallthru
      _
    // Predicated region
    $region98: #{tpu_custom_call.1} parent=1 // pred_check
      _
    $region99: #{tpu_custom_call.1} parent=1 // pred_check_branch
      %85 = sbr.rel (0) target = $region101
    $region100: #{tpu_custom_call.1} parent=1 // pred_region
      _
    $region101: #{tpu_custom_call.1} parent=1 // pred_fallthru
      _
    // Predicated region
    $region102: #{tpu_custom_call.1} parent=1 // pred_check
      _
    $region103: #{tpu_custom_call.1} parent=1 // pred_check_branch
      %87 = sbr.rel (0) target = $region105
    $region104: #{tpu_custom_call.1} parent=1 // pred_region
      _
    $region105: #{tpu_custom_call.1} parent=1 // pred_fallthru
      _
    // Predicated region
    $region106: #{tpu_custom_call.1} parent=1 // pred_check
      _
    $region107: #{tpu_custom_call.1} parent=1 // pred_check_branch
      %89 = sbr.rel (0) target = $region109
    $region108: #{tpu_custom_call.1} parent=1 // pred_region
      _
    $region109: #{tpu_custom_call.1} parent=1 // pred_fallthru
      _
    // Predicated region
    $region110: #{tpu_custom_call.1} parent=1 // pred_check
      _
    $region111: #{tpu_custom_call.1} parent=1 // pred_check_branch
      %91 = sbr.rel (0) target = $region113
    $region112: #{tpu_custom_call.1} parent=1 // pred_region
      _
    $region113: #{tpu_custom_call.1} parent=1 // pred_fallthru
      _
    %v93 = vld [vmem:[%s1] sm:$0xff]
    %v94 = vld [vmem:[%s1 + $0x8] sm:$0xff]
    %v95 = vld [vmem:[%s1 + $0x10] sm:$0xff]
    %v96 = vld [vmem:[%s1 + $0x18] sm:$0xff]
    %v97 = vld [vmem:[%s1 + $0x20] sm:$0x1]
    %v98 = vld [vmem:[%s1 + $0x28] sm:$0x1]
    %v99 = vld [vmem:[%s1 + $0x30] sm:$0x1]
    %v100 = vld [vmem:[%s1 + $0x38] sm:$0x1]
    %v101 = vld [vmem:[%s0] sm:$0xf]
    %v103 = vperm.slane %v101, 0
    %v104 = vperm.slane %v101, 1
    %v105 = vperm.slane %v101, 2
    %v106 = vperm.slane %v101, 3
    %111 = vrot.lane.b32.xlu0 %v103, 17
    %v112 = vpop.permute.xlu0 %111
    %113 = vrot.lane.b32.xlu0 %v104, 17
    %v114 = vpop.permute.xlu0 %113
    %115 = vrot.lane.b32.xlu0 %v105, 17
    %v116 = vpop.permute.xlu0 %115
    %117 = vrot.lane.b32.xlu0 %v106, 17
    %v118 = vpop.permute.xlu0 %117
    %v119 = vlaneseq
    %v120 = vand.u32 %v119, 127
    %vm121 = vcmp.lt.s32.totalorder %v120, 17
    %v122 = vsel %vm121, %v116, %v118
    %v123 = vsel %vm121, %v114, %v116
    %v124 = vsel %vm121, %v112, %v114
    %v125 = vsel %vm121, %v118, %v112
    %v126 = vmul.f32 %v93, %v125
    %v127 = vmul.f32 %v94, %v124
    %v128 = vmul.f32 %v95, %v123
    %v129 = vmul.f32 %v96, %v122
    %130 = vrot.lane.b32.xlu0 %v103, 16
    %v131 = vpop.permute.xlu0 %130
    %132 = vrot.lane.b32.xlu0 %v104, 16
    %v133 = vpop.permute.xlu0 %132
    %134 = vrot.lane.b32.xlu0 %v105, 16
    %v135 = vpop.permute.xlu0 %134
    %136 = vrot.lane.b32.xlu0 %v106, 16
    %v137 = vpop.permute.xlu0 %136
    %vm138 = vcmp.lt.s32.totalorder %v120, 16
    %v139 = vsel %vm138, %v135, %v137
    %v140 = vsel %vm138, %v133, %v135
    %v141 = vsel %vm138, %v131, %v133
    %v142 = vsel %vm138, %v137, %v131
    %v147 = vrot.slane %v142, 7
    %v148 = vrot.slane %v141, 7
    %v149 = vrot.slane %v140, 7
    %v150 = vrot.slane %v139, 7
    %v155 = vmul.f32 %v93, %v147
    %v156 = vmul.f32 %v94, %v148
    %v157 = vmul.f32 %v95, %v149
    %v158 = vmul.f32 %v96, %v150
    %159 = vrot.lane.b32.xlu0 %v103, 15
    %v160 = vpop.permute.xlu0 %159
    %161 = vrot.lane.b32.xlu0 %v104, 15
    %v162 = vpop.permute.xlu0 %161
    %163 = vrot.lane.b32.xlu0 %v105, 15
    %v164 = vpop.permute.xlu0 %163
    %165 = vrot.lane.b32.xlu0 %v106, 15
    %v166 = vpop.permute.xlu0 %165
    %vm167 = vcmp.lt.s32.totalorder %v120, 15
    %v168 = vsel %vm167, %v164, %v166
    %v169 = vsel %vm167, %v162, %v164
    %v170 = vsel %vm167, %v160, %v162
    %v171 = vsel %vm167, %v166, %v160
    %v176 = vrot.slane %v171, 6
    %v177 = vrot.slane %v170, 6
    %v178 = vrot.slane %v169, 6
    %v179 = vrot.slane %v168, 6
    %v184 = vmul.f32 %v93, %v176
    %v185 = vmul.f32 %v94, %v177
    %v186 = vmul.f32 %v95, %v178
    %v187 = vmul.f32 %v96, %v179
    %188 = vrot.lane.b32.xlu0 %v103, 1
    %v189 = vpop.permute.xlu0 %188
    %190 = vrot.lane.b32.xlu0 %v104, 1
    %v191 = vpop.permute.xlu0 %190
    %192 = vrot.lane.b32.xlu0 %v105, 1
    %v193 = vpop.permute.xlu0 %192
    %194 = vrot.lane.b32.xlu0 %v106, 1
    %v195 = vpop.permute.xlu0 %194
    %vm196 = vcmp.lt.s32.totalorder %v120, 1
    %v197 = vsel %vm196, %v193, %v195
    %v198 = vsel %vm196, %v191, %v193
    %v199 = vsel %vm196, %v189, %v191
    %v200 = vsel %vm196, %v195, %v189
    %v205 = vrot.slane %v200, 5
    %v206 = vrot.slane %v199, 5
    %v207 = vrot.slane %v198, 5
    %v208 = vrot.slane %v197, 5
    %v213 = vmul.f32 %v93, %v205
    %v214 = vmul.f32 %v94, %v206
    %v215 = vmul.f32 %v95, %v207
    %v216 = vmul.f32 %v96, %v208
    %217 = vrot.lane.b32.xlu0 %v103, 127
    %v218 = vpop.permute.xlu0 %217
    %219 = vrot.lane.b32.xlu0 %v104, 127
    %v220 = vpop.permute.xlu0 %219
    %221 = vrot.lane.b32.xlu0 %v105, 127
    %v222 = vpop.permute.xlu0 %221
    %223 = vrot.lane.b32.xlu0 %v106, 127
    %v224 = vpop.permute.xlu0 %223
    %vm225 = vcmp.lt.s32.totalorder %v120, 127
    %v226 = vsel %vm225, %v222, %v224
    %v227 = vsel %vm225, %v220, %v222
    %v228 = vsel %vm225, %v218, %v220
    %v229 = vsel %vm225, %v224, %v218
    %v234 = vrot.slane %v228, 3
    %v235 = vrot.slane %v227, 3
    %v236 = vrot.slane %v226, 3
    %v237 = vrot.slane %v229, 3
    %v242 = vmul.f32 %v93, %v234
    %v243 = vmul.f32 %v94, %v235
    %v244 = vmul.f32 %v95, %v236
    %v245 = vmul.f32 %v96, %v237
    %246 = vrot.lane.b32.xlu0 %v103, 113
    %v247 = vpop.permute.xlu0 %246
    %248 = vrot.lane.b32.xlu0 %v104, 113
    %v249 = vpop.permute.xlu0 %248
    %250 = vrot.lane.b32.xlu0 %v105, 113
    %v251 = vpop.permute.xlu0 %250
    %252 = vrot.lane.b32.xlu0 %v106, 113
    %v253 = vpop.permute.xlu0 %252
    %vm254 = vcmp.lt.s32.totalorder %v120, 113
    %v255 = vsel %vm254, %v251, %v253
    %v256 = vsel %vm254, %v249, %v251
    %v257 = vsel %vm254, %v247, %v249
    %v258 = vsel %vm254, %v253, %v247
    %v263 = vrot.slane %v257, 2
    %v264 = vrot.slane %v256, 2
    %v265 = vrot.slane %v255, 2
    %v266 = vrot.slane %v258, 2
    %v271 = vmul.f32 %v93, %v263
    %v272 = vmul.f32 %v94, %v264
    %v273 = vmul.f32 %v95, %v265
    %v274 = vmul.f32 %v96, %v266
    %275 = vrot.lane.b32.xlu0 %v103, 112
    %v276 = vpop.permute.xlu0 %275
    %277 = vrot.lane.b32.xlu0 %v104, 112
    %v278 = vpop.permute.xlu0 %277
    %279 = vrot.lane.b32.xlu0 %v105, 112
    %v280 = vpop.permute.xlu0 %279
    %281 = vrot.lane.b32.xlu0 %v106, 112
    %v282 = vpop.permute.xlu0 %281
    %vm283 = vcmp.lt.s32.totalorder %v120, 112
    %v284 = vsel %vm283, %v280, %v282
    %v285 = vsel %vm283, %v278, %v280
    %v286 = vsel %vm283, %v276, %v278
    %v287 = vsel %vm283, %v282, %v276
    %v292 = vrot.slane %v286, 1
    %v293 = vrot.slane %v285, 1
    %v294 = vrot.slane %v284, 1
    %v295 = vrot.slane %v287, 1
    %v300 = vmul.f32 %v93, %v292
    %v301 = vmul.f32 %v94, %v293
    %v302 = vmul.f32 %v95, %v294
    %v303 = vmul.f32 %v96, %v295
    %304 = vrot.lane.b32.xlu0 %v103, 111
    %v305 = vpop.permute.xlu0 %304
    %306 = vrot.lane.b32.xlu0 %v104, 111
    %v307 = vpop.permute.xlu0 %306
    %308 = vrot.lane.b32.xlu0 %v105, 111
    %v309 = vpop.permute.xlu0 %308
    %310 = vrot.lane.b32.xlu0 %v106, 111
    %v311 = vpop.permute.xlu0 %310
    %vm312 = vcmp.lt.s32.totalorder %v120, 111
    %v313 = vsel %vm312, %v309, %v311
    %v314 = vsel %vm312, %v307, %v309
    %v315 = vsel %vm312, %v305, %v307
    %v316 = vsel %vm312, %v311, %v305
    %v317 = vmul.f32 %v97, %v315
    %v318 = vmul.f32 %v98, %v314
    %v319 = vmul.f32 %v99, %v313
    %v320 = vmul.f32 %v100, %v316
    %vm321 = vcmask 1040384
    %v322 = vsel %vm321, %v126, %v155
    %v323 = vsel %vm321, %v127, %v156
    %v324 = vsel %vm321, %v128, %v157
    %v325 = vsel %vm321, %v129, %v158
    %vm326 = vcmask 1041408
    %v327 = vsel %vm326, %v322, %v184
    %v328 = vsel %vm326, %v323, %v185
    %v329 = vsel %vm326, %v324, %v186
    %v330 = vsel %vm326, %v325, %v187
    %vm331 = vcmask 1042432
    %v332 = vsel %vm331, %v327, %v213
    %v333 = vsel %vm331, %v328, %v214
    %v334 = vsel %vm331, %v329, %v215
    %v335 = vsel %vm331, %v330, %v216
    %vm336 = vcmask 1043456
    %v337 = vsel %vm336, %v332, %v103
    %v338 = vsel %vm336, %v333, %v104
    %v339 = vsel %vm336, %v334, %v105
    %v340 = vsel %vm336, %v335, %v106
    %vm341 = vcmask 1044480
    %v342 = vsel %vm341, %v337, %v242
    %v343 = vsel %vm341, %v338, %v243
    %v344 = vsel %vm341, %v339, %v244
    %v345 = vsel %vm341, %v340, %v245
    %vm346 = vcmask 1045504
    %v347 = vsel %vm346, %v342, %v271
    %v348 = vsel %vm346, %v343, %v272
    %v349 = vsel %vm346, %v344, %v273
    %v350 = vsel %vm346, %v345, %v274
    %vm351 = vcmask 1046528
    %v352 = vsel %vm351, %v347, %v300
    %v353 = vsel %vm351, %v348, %v301
    %v354 = vsel %vm351, %v349, %v302
    %v355 = vsel %vm351, %v350, %v303
    %v356 = vpack.c.bf16 %v317, %v352
    %v357 = vpack.c.bf16 %v318, %v353
    %v358 = vpack.c.bf16 %v319, %v354
    %v359 = vpack.c.bf16 %v320, %v355
    %v360 = vld [vmem:[%s4] sm:$0xf]
    %v361 = vld [vmem:[%s4 + $0x4] sm:$0xf]
    %v362 = vld [vmem:[%s4 + $0x8] sm:$0xf]
    %v363 = vld [vmem:[%s4 + $0xc] sm:$0xf]
    %v364 = vld [vmem:[%s5] sm:$0xff]
    %v365 = vld [vmem:[%s5 + $0x8] sm:$0xff]
    %v366 = vld [vmem:[%s5 + $0x10] sm:$0xff]
    %v367 = vld [vmem:[%s5 + $0x18] sm:$0xff]
    %369 = vset.pattern.permute.xlu0 0
    %370 = vperm.xlu0 %369, %v364
    %v371 = vpop.permute.xlu0 %370
    %374 = vset.pattern.permute.xlu0 0
    %375 = vperm.xlu0 %374, %v365
    %v376 = vpop.permute.xlu0 %375
    %379 = vset.pattern.permute.xlu0 0
    %380 = vperm.xlu0 %379, %v366
    %v381 = vpop.permute.xlu0 %380
    %384 = vset.pattern.permute.xlu0 0
    %385 = vperm.xlu0 %384, %v367
    %v386 = vpop.permute.xlu0 %385
    %v392 = vunpack.c.l.b16 %v360
    %v393 = vunpack.c.l.b16 %v361
    %v394 = vunpack.c.l.b16 %v362
    %v395 = vunpack.c.l.b16 %v363
    %v396 = vpack.c.b16 %v393, %v392
    %v397 = vpack.c.b16 %v395, %v394
    %vm398 = vcmask 72704
    %v400 = vsel %vm398, %v396, 0
    %v403 = vsel %vm398, %v397, 0
    %v405 = vsel %vm336, 4294967295, 65535
    %v406 = vsel %vm341, %v405, 0
    %v408 = vand.u32 %v356, %v406
    %v411 = vand.u32 %v357, %v406
    %v414 = vand.u32 %v358, %v406
    %v417 = vand.u32 %v359, %v406
    %419 = vmatpush.bf16.msra.mxu0 0
    %420 = vmatpush.bf16.msra.mxu0 0
    %421 = vmatpush.bf16.msra.mxu0 0
    %422 = vmatpush.bf16.msra.mxu0 0
    %423 = vmatpush.bf16.msra.mxu0 0
    %424 = vmatpush.bf16.msra.mxu0 0
    %425 = vmatpush.bf16.msra.mxu0 0
    %426 = vmatpush.bf16.msra.mxu0 %v408
    %427 = vmatmul.bf16.gmra.mxu0 %v400
    %v428 = vpop.f32.mrf.mxu0
    %v429 = vadd.f32 %v371, %v428
    %v430 = vpop.f32.mrf.mxu0
    %v431 = vadd.f32 %v376, %v430
    %432 = vmatmul.bf16.gmra.mxu0 %v403
    %v433 = vpop.f32.mrf.mxu0
    %v434 = vadd.f32 %v381, %v433
    %v435 = vpop.f32.mrf.mxu0
    %v436 = vadd.f32 %v386, %v435
    %437 = vdwg.mxu0
    %438 = vmatpush.bf16.msra.mxu0 0
    %439 = vmatpush.bf16.msra.mxu0 0
    %440 = vmatpush.bf16.msra.mxu0 0
    %441 = vmatpush.bf16.msra.mxu0 0
    %442 = vmatpush.bf16.msra.mxu0 0
    %443 = vmatpush.bf16.msra.mxu0 0
    %444 = vmatpush.bf16.msra.mxu0 0
    %445 = vmatpush.bf16.msra.mxu0 %v411
    %446 = vmatmul.bf16.gmra.mxu0 %v400
    %v447 = vpop.f32.mrf.mxu0
    %v448 = vadd.f32 %v371, %v447
    %v449 = vpop.f32.mrf.mxu0
    %v450 = vadd.f32 %v376, %v449
    %451 = vmatmul.bf16.gmra.mxu0 %v403
    %v452 = vpop.f32.mrf.mxu0
    %v453 = vadd.f32 %v381, %v452
    %v454 = vpop.f32.mrf.mxu0
    %v455 = vadd.f32 %v386, %v454
    %456 = vdwg.mxu0
    %457 = vmatpush.bf16.msra.mxu0 0
    %458 = vmatpush.bf16.msra.mxu0 0
    %459 = vmatpush.bf16.msra.mxu0 0
    %460 = vmatpush.bf16.msra.mxu0 0
    %461 = vmatpush.bf16.msra.mxu0 0
    %462 = vmatpush.bf16.msra.mxu0 0
    %463 = vmatpush.bf16.msra.mxu0 0
    %464 = vmatpush.bf16.msra.mxu0 %v414
    %465 = vmatmul.bf16.gmra.mxu0 %v400
    %v466 = vpop.f32.mrf.mxu0
    %v467 = vadd.f32 %v371, %v466
    %v468 = vpop.f32.mrf.mxu0
    %v469 = vadd.f32 %v376, %v468
    %470 = vmatmul.bf16.gmra.mxu0 %v403
    %v471 = vpop.f32.mrf.mxu0
    %v472 = vadd.f32 %v381, %v471
    %v473 = vpop.f32.mrf.mxu0
    %v474 = vadd.f32 %v386, %v473
    %475 = vdwg.mxu0
    %476 = vmatpush.bf16.msra.mxu0 0
    %477 = vmatpush.bf16.msra.mxu0 0
    %478 = vmatpush.bf16.msra.mxu0 0
    %479 = vmatpush.bf16.msra.mxu0 0
    %480 = vmatpush.bf16.msra.mxu0 0
    %481 = vmatpush.bf16.msra.mxu0 0
    %482 = vmatpush.bf16.msra.mxu0 0
    %483 = vmatpush.bf16.msra.mxu0 %v417
    %484 = vmatmul.bf16.gmra.mxu0 %v400
    %v485 = vpop.f32.mrf.mxu0
    %v486 = vadd.f32 %v371, %v485
    %v487 = vpop.f32.mrf.mxu0
    %v488 = vadd.f32 %v376, %v487
    %489 = vmatmul.bf16.gmra.mxu0 %v403
    %v490 = vpop.f32.mrf.mxu0
    %v491 = vadd.f32 %v381, %v490
    %v492 = vpop.f32.mrf.mxu0
    %v493 = vadd.f32 %v386, %v492
    %494 = vdwg.mxu0
    %v495 = vld [vmem:[%s2] sm:$0xff]
    %v496 = vld [vmem:[%s2 + $0x8] sm:$0xff]
    %v497 = vld [vmem:[%s2 + $0x10] sm:$0xff]
    %v498 = vld [vmem:[%s2 + $0x18] sm:$0xff]
    %v499 = vld [vmem:[%s3] sm:$0xff]
    %v500 = vld [vmem:[%s3 + $0x8] sm:$0xff]
    %v501 = vld [vmem:[%s3 + $0x10] sm:$0xff]
    %v502 = vld [vmem:[%s3 + $0x18] sm:$0xff]
    %504 = vset.pattern.permute.xlu0 0
    %505 = vperm.xlu0 %504, %v495
    %v506 = vpop.permute.xlu0 %505
    %509 = vset.pattern.permute.xlu0 0
    %510 = vperm.xlu0 %509, %v496
    %v511 = vpop.permute.xlu0 %510
    %514 = vset.pattern.permute.xlu0 0
    %515 = vperm.xlu0 %514, %v497
    %v516 = vpop.permute.xlu0 %515
    %519 = vset.pattern.permute.xlu0 0
    %520 = vperm.xlu0 %519, %v498
    %v521 = vpop.permute.xlu0 %520
    %v523 = vmul.f32 %v429, %v506
    %v524 = vmul.f32 %v448, %v506
    %v525 = vmul.f32 %v467, %v506
    %v526 = vmul.f32 %v486, %v506
    %v527 = vmul.f32 %v431, %v511
    %v528 = vmul.f32 %v450, %v511
    %v529 = vmul.f32 %v469, %v511
    %v530 = vmul.f32 %v488, %v511
    %v531 = vmul.f32 %v434, %v516
    %v532 = vmul.f32 %v453, %v516
    %v533 = vmul.f32 %v472, %v516
    %v534 = vmul.f32 %v491, %v516
    %v535 = vmul.f32 %v436, %v521
    %v536 = vmul.f32 %v455, %v521
    %v537 = vmul.f32 %v474, %v521
    %v538 = vmul.f32 %v493, %v521
    %540 = vset.pattern.permute.xlu0 0
    %541 = vperm.xlu0 %540, %v499
    %v542 = vpop.permute.xlu0 %541
    %545 = vset.pattern.permute.xlu0 0
    %546 = vperm.xlu0 %545, %v500
    %v547 = vpop.permute.xlu0 %546
    %550 = vset.pattern.permute.xlu0 0
    %551 = vperm.xlu0 %550, %v501
    %v552 = vpop.permute.xlu0 %551
    %555 = vset.pattern.permute.xlu0 0
    %556 = vperm.xlu0 %555, %v502
    %v557 = vpop.permute.xlu0 %556
    %v559 = vadd.f32 %v523, %v542
    %v560 = vadd.f32 %v524, %v542
    %v561 = vadd.f32 %v525, %v542
    %v562 = vadd.f32 %v526, %v542
    %v563 = vadd.f32 %v527, %v547
    %v564 = vadd.f32 %v528, %v547
    %v565 = vadd.f32 %v529, %v547
    %v566 = vadd.f32 %v530, %v547
    %v567 = vadd.f32 %v531, %v552
    %v568 = vadd.f32 %v532, %v552
    %v569 = vadd.f32 %v533, %v552
    %v570 = vadd.f32 %v534, %v552
    %v571 = vadd.f32 %v535, %v557
    %v572 = vadd.f32 %v536, %v557
    %v573 = vadd.f32 %v537, %v557
    %v574 = vadd.f32 %v538, %v557
    %v575 = vmul.f32 %v559, 0.01
    %v576 = vmul.f32 %v560, 0.01
    %v577 = vmul.f32 %v561, 0.01
    %v578 = vmul.f32 %v562, 0.01
    %v579 = vmul.f32 %v563, 0.01
    %v580 = vmul.f32 %v564, 0.01
    %v581 = vmul.f32 %v565, 0.01
    %v582 = vmul.f32 %v566, 0.01
    %v583 = vmul.f32 %v567, 0.01
    %v584 = vmul.f32 %v568, 0.01
    %v585 = vmul.f32 %v569, 0.01
    %v586 = vmul.f32 %v570, 0.01
    %v587 = vmul.f32 %v571, 0.01
    %v588 = vmul.f32 %v572, 0.01
    %v589 = vmul.f32 %v573, 0.01
    %v590 = vmul.f32 %v574, 0.01
    %v591 = vmax.f32 %v559, %v575
    %v592 = vmax.f32 %v560, %v576
    %v593 = vmax.f32 %v561, %v577
    %v594 = vmax.f32 %v562, %v578
    %v595 = vmax.f32 %v563, %v579
    %v596 = vmax.f32 %v564, %v580
    %v597 = vmax.f32 %v565, %v581
    %v598 = vmax.f32 %v566, %v582
    %v599 = vmax.f32 %v567, %v583
    %v600 = vmax.f32 %v568, %v584
    %v601 = vmax.f32 %v569, %v585
    %v602 = vmax.f32 %v570, %v586
    %v603 = vmax.f32 %v571, %v587
    %v604 = vmax.f32 %v572, %v588
    %v605 = vmax.f32 %v573, %v589
    %v606 = vmax.f32 %v574, %v590
    %607 = vst [vmem:[#allocation2] sm:$0xff] %v591
    %608 = vst [vmem:[#allocation2 + $0x8] sm:$0xff] %v592
    %609 = vst [vmem:[#allocation2 + $0x10] sm:$0xff] %v593
    %610 = vst [vmem:[#allocation2 + $0x18] sm:$0xff] %v594
    %611 = vst [vmem:[#allocation2 + $0x20] sm:$0xff] %v595
    %612 = vst [vmem:[#allocation2 + $0x28] sm:$0xff] %v596
    %613 = vst [vmem:[#allocation2 + $0x30] sm:$0xff] %v597
    %614 = vst [vmem:[#allocation2 + $0x38] sm:$0xff] %v598
    %615 = vst [vmem:[#allocation2 + $0x40] sm:$0xff] %v599
    %616 = vst [vmem:[#allocation2 + $0x48] sm:$0xff] %v600
    %617 = vst [vmem:[#allocation2 + $0x50] sm:$0xff] %v601
    %618 = vst [vmem:[#allocation2 + $0x58] sm:$0xff] %v602
    %619 = vst [vmem:[#allocation2 + $0x60] sm:$0xff] %v603
    %620 = vst [vmem:[#allocation2 + $0x68] sm:$0xff] %v604
    %621 = vst [vmem:[#allocation2 + $0x70] sm:$0xff] %v605
    %622 = vst [vmem:[#allocation2 + $0x78] sm:$0xff] %v606
    loop: start=0, step=1, limit=4
    $region114: #{tpu_custom_call.1} parent=1 // loop_pre_header
      _
    $region115: #{tpu_custom_call.1} parent=1 // loop_header
      %s624 = sphi 0, %s628
      %p625 = scmp.ge.s32.totalorder %s624, 4
    $region116: #{tpu_custom_call.1} parent=1 // loop_header_branch
      %627 = sbr.rel (%p625) target = $region120
    $region117: #{tpu_custom_call.1} parent=1 // loop_body
      %v629 = vld [vmem:[#allocation2] sm:$0xff]
      %v630 = vld [vmem:[#allocation2 + $0x8] sm:$0xff]
      %v631 = vld [vmem:[#allocation2 + $0x10] sm:$0xff]
      %v632 = vld [vmem:[#allocation2 + $0x18] sm:$0xff]
      %v633 = vld [vmem:[#allocation2 + $0x20] sm:$0xff]
      %v634 = vld [vmem:[#allocation2 + $0x28] sm:$0xff]
      %v635 = vld [vmem:[#allocation2 + $0x30] sm:$0xff]
      %v636 = vld [vmem:[#allocation2 + $0x38] sm:$0xff]
      %v637 = vld [vmem:[#allocation2 + $0x40] sm:$0xff]
      %v638 = vld [vmem:[#allocation2 + $0x48] sm:$0xff]
      %v639 = vld [vmem:[#allocation2 + $0x50] sm:$0xff]
      %v640 = vld [vmem:[#allocation2 + $0x58] sm:$0xff]
      %v641 = vld [vmem:[#allocation2 + $0x60] sm:$0xff]
      %v642 = vld [vmem:[#allocation2 + $0x68] sm:$0xff]
      %v643 = vld [vmem:[#allocation2 + $0x70] sm:$0xff]
      %v644 = vld [vmem:[#allocation2 + $0x78] sm:$0xff]
      %s645 = smul.u32 %s624, 32
      %s646 = scalar_lea.vmem %s6, %s645
      %v647 = vld [vmem:[%s646] sm:$0xff]
      %v648 = vld [vmem:[%s646 + $0x8] sm:$0xff]
      %v649 = vld [vmem:[%s646 + $0x10] sm:$0xff]
      %v650 = vld [vmem:[%s646 + $0x18] sm:$0xff]
      %s651 = scalar_lea.vmem %s7, %s645
      %v652 = vld [vmem:[%s651] sm:$0xff]
      %v653 = vld [vmem:[%s651 + $0x8] sm:$0xff]
      %v654 = vld [vmem:[%s651 + $0x10] sm:$0xff]
      %v655 = vld [vmem:[%s651 + $0x18] sm:$0xff]
      %657 = vset.pattern.permute.xlu0 0
      %658 = vperm.xlu0 %657, %v647
      %v659 = vpop.permute.xlu0 %658
      %662 = vset.pattern.permute.xlu0 0
      %663 = vperm.xlu0 %662, %v648
      %v664 = vpop.permute.xlu0 %663
      %667 = vset.pattern.permute.xlu0 0
      %668 = vperm.xlu0 %667, %v649
      %v669 = vpop.permute.xlu0 %668
      %672 = vset.pattern.permute.xlu0 0
      %673 = vperm.xlu0 %672, %v650
      %v674 = vpop.permute.xlu0 %673
      %v676 = vmul.f32 %v629, %v659
      %v677 = vmul.f32 %v630, %v659
      %v678 = vmul.f32 %v631, %v659
      %v679 = vmul.f32 %v632, %v659
      %v680 = vmul.f32 %v633, %v664
      %v681 = vmul.f32 %v634, %v664
      %v682 = vmul.f32 %v635, %v664
      %v683 = vmul.f32 %v636, %v664
      %v684 = vmul.f32 %v637, %v669
      %v685 = vmul.f32 %v638, %v669
      %v686 = vmul.f32 %v639, %v669
      %v687 = vmul.f32 %v640, %v669
      %v688 = vmul.f32 %v641, %v674
      %v689 = vmul.f32 %v642, %v674
      %v690 = vmul.f32 %v643, %v674
      %v691 = vmul.f32 %v644, %v674
      %693 = vset.pattern.permute.xlu0 0
      %694 = vperm.xlu0 %693, %v652
      %v695 = vpop.permute.xlu0 %694
      %698 = vset.pattern.permute.xlu0 0
      %699 = vperm.xlu0 %698, %v653
      %v700 = vpop.permute.xlu0 %699
      %703 = vset.pattern.permute.xlu0 0
      %704 = vperm.xlu0 %703, %v654
      %v705 = vpop.permute.xlu0 %704
      %708 = vset.pattern.permute.xlu0 0
      %709 = vperm.xlu0 %708, %v655
      %v710 = vpop.permute.xlu0 %709
      %v712 = vadd.f32 %v676, %v695
      %v713 = vadd.f32 %v677, %v695
      %v714 = vadd.f32 %v678, %v695
      %v715 = vadd.f32 %v679, %v695
      %v716 = vadd.f32 %v680, %v700
      %v717 = vadd.f32 %v681, %v700
      %v718 = vadd.f32 %v682, %v700
      %v719 = vadd.f32 %v683, %v700
      %v720 = vadd.f32 %v684, %v705
      %v721 = vadd.f32 %v685, %v705
      %v722 = vadd.f32 %v686, %v705
      %v723 = vadd.f32 %v687, %v705
      %v724 = vadd.f32 %v688, %v710
      %v725 = vadd.f32 %v689, %v710
      %v726 = vadd.f32 %v690, %v710
      %v727 = vadd.f32 %v691, %v710
      %v728 = vmul.f32 %v712, 0.01
      %v729 = vmul.f32 %v713, 0.01
      %v730 = vmul.f32 %v714, 0.01
      %v731 = vmul.f32 %v715, 0.01
      %v732 = vmul.f32 %v716, 0.01
      %v733 = vmul.f32 %v717, 0.01
      %v734 = vmul.f32 %v718, 0.01
      %v735 = vmul.f32 %v719, 0.01
      %v736 = vmul.f32 %v720, 0.01
      %v737 = vmul.f32 %v721, 0.01
      %v738 = vmul.f32 %v722, 0.01
      %v739 = vmul.f32 %v723, 0.01
      %v740 = vmul.f32 %v724, 0.01
      %v741 = vmul.f32 %v725, 0.01
      %v742 = vmul.f32 %v726, 0.01
      %v743 = vmul.f32 %v727, 0.01
      %v744 = vmax.f32 %v712, %v728
      %v745 = vmax.f32 %v713, %v729
      %v746 = vmax.f32 %v714, %v730
      %v747 = vmax.f32 %v715, %v731
      %v748 = vmax.f32 %v716, %v732
      %v749 = vmax.f32 %v717, %v733
      %v750 = vmax.f32 %v718, %v734
      %v751 = vmax.f32 %v719, %v735
      %v752 = vmax.f32 %v720, %v736
      %v753 = vmax.f32 %v721, %v737
      %v754 = vmax.f32 %v722, %v738
      %v755 = vmax.f32 %v723, %v739
      %v756 = vmax.f32 %v724, %v740
      %v757 = vmax.f32 %v725, %v741
      %v758 = vmax.f32 %v726, %v742
      %v759 = vmax.f32 %v727, %v743
      %s760 = smul.u32 %s624, 9
      %s761 = smul.addr %s760, 4
      %s762 = scalar_lea.vmem %s8, %s761
      %v763 = vld [vmem:[%s762] sm:$0xf]
      %v764 = vld [vmem:[%s762 + $0x4] sm:$0xf]
      %v765 = vld [vmem:[%s762 + $0x8] sm:$0xf]
      %v766 = vld [vmem:[%s762 + $0xc] sm:$0xf]
      %v767 = vld [vmem:[%s762 + $0x10] sm:$0xf]
      %v768 = vld [vmem:[%s762 + $0x14] sm:$0xf]
      %v769 = vld [vmem:[%s762 + $0x18] sm:$0xf]
      %v770 = vld [vmem:[%s762 + $0x1c] sm:$0xf]
      %v771 = vld [vmem:[%s762 + $0x20] sm:$0xf]
      %v772 = vpack.c.bf16 %v748, %v744
      %v773 = vpack.c.bf16 %v749, %v745
      %v774 = vpack.c.bf16 %v750, %v746
      %v775 = vpack.c.bf16 %v751, %v747
      %v776 = vpack.c.bf16 %v756, %v752
      %v777 = vpack.c.bf16 %v757, %v753
      %v778 = vpack.c.bf16 %v758, %v754
      %v779 = vpack.c.bf16 %v759, %v755
      %v789 = vunpack.c.l.b16 %v763
      %v790 = vunpack.c.l.b16 %v764
      %v791 = vunpack.c.l.b16 %v765
      %v792 = vunpack.c.l.b16 %v766
      %v793 = vunpack.c.l.b16 %v767
      %v794 = vunpack.c.l.b16 %v768
      %v795 = vunpack.c.l.b16 %v769
      %v796 = vunpack.c.l.b16 %v770
      %v797 = vunpack.c.l.b16 %v771
      %v798 = vpack.c.b16 %v790, %v789
      %v799 = vpack.c.b16 %v792, %v791
      %v800 = vpack.c.b16 %v794, %v793
      %v801 = vpack.c.b16 %v796, %v795
      %v802 = vpack.c.b16 %v797, %v797
      %vm803 = vcmask 261120
      %v805 = vsel %vm803, %v798, 0
      %v808 = vsel %vm803, %v799, 0
      %v811 = vsel %vm803, %v800, 0
      %v814 = vsel %vm803, %v801, 0
      %v817 = vsel %vm803, %v802, 0
      %819 = vmatpush.bf16.msra.mxu0 0
      %820 = vmatpush.bf16.msra.mxu0 0
      %821 = vmatpush.bf16.msra.mxu0 0
      %822 = vmatpush.bf16.msra.mxu0 0
      %823 = vmatpush.bf16.msra.mxu0 0
      %824 = vmatpush.bf16.msra.mxu0 0
      %825 = vmatpush.bf16.msra.mxu0 %v776
      %826 = vmatpush.bf16.msra.mxu0 %v772
      %827 = vmatmul.bf16.gmra.mxu0 %v805
      %v828 = vpop.f32.mrf.mxu0
      %v829 = vadd.f32 0.0, %v828
      %v830 = vpop.f32.mrf.mxu0
      %v831 = vadd.f32 0.0, %v830
      %832 = vmatmul.bf16.gmra.mxu0 %v808
      %v833 = vpop.f32.mrf.mxu0
      %v834 = vadd.f32 0.0, %v833
      %v835 = vpop.f32.mrf.mxu0
      %v836 = vadd.f32 0.0, %v835
      %837 = vmatmul.bf16.gmra.mxu0 %v811
      %v838 = vpop.f32.mrf.mxu0
      %v839 = vadd.f32 0.0, %v838
      %v840 = vpop.f32.mrf.mxu0
      %v841 = vadd.f32 0.0, %v840
      %842 = vmatmul.bf16.gmra.mxu0 %v814
      %v843 = vpop.f32.mrf.mxu0
      %v844 = vadd.f32 0.0, %v843
      %v845 = vpop.f32.mrf.mxu0
      %v846 = vadd.f32 0.0, %v845
      %847 = vmatmul.bf16.gmra.mxu0 %v817
      %v848 = vpop.f32.mrf.mxu0
      %v849 = vadd.f32 0.0, %v848
      %v850 = vpop.f32.mrf.mxu0
      %851 = vdwg.mxu0
      %852 = vmatpush.bf16.msra.mxu0 0
      %853 = vmatpush.bf16.msra.mxu0 0
      %854 = vmatpush.bf16.msra.mxu0 0
      %855 = vmatpush.bf16.msra.mxu0 0
      %856 = vmatpush.bf16.msra.mxu0 0
      %857 = vmatpush.bf16.msra.mxu0 0
      %858 = vmatpush.bf16.msra.mxu0 %v777
      %859 = vmatpush.bf16.msra.mxu0 %v773
      %860 = vmatmul.bf16.gmra.mxu0 %v805
      %v861 = vpop.f32.mrf.mxu0
      %v862 = vadd.f32 0.0, %v861
      %v863 = vpop.f32.mrf.mxu0
      %v864 = vadd.f32 0.0, %v863
      %865 = vmatmul.bf16.gmra.mxu0 %v808
      %v866 = vpop.f32.mrf.mxu0
      %v867 = vadd.f32 0.0, %v866
      %v868 = vpop.f32.mrf.mxu0
      %v869 = vadd.f32 0.0, %v868
      %870 = vmatmul.bf16.gmra.mxu0 %v811
      %v871 = vpop.f32.mrf.mxu0
      %v872 = vadd.f32 0.0, %v871
      %v873 = vpop.f32.mrf.mxu0
      %v874 = vadd.f32 0.0, %v873
      %875 = vmatmul.bf16.gmra.mxu0 %v814
      %v876 = vpop.f32.mrf.mxu0
      %v877 = vadd.f32 0.0, %v876
      %v878 = vpop.f32.mrf.mxu0
      %v879 = vadd.f32 0.0, %v878
      %880 = vmatmul.bf16.gmra.mxu0 %v817
      %v881 = vpop.f32.mrf.mxu0
      %v882 = vadd.f32 0.0, %v881
      %v883 = vpop.f32.mrf.mxu0
      %884 = vdwg.mxu0
      %885 = vmatpush.bf16.msra.mxu0 0
      %886 = vmatpush.bf16.msra.mxu0 0
      %887 = vmatpush.bf16.msra.mxu0 0
      %888 = vmatpush.bf16.msra.mxu0 0
      %889 = vmatpush.bf16.msra.mxu0 0
      %890 = vmatpush.bf16.msra.mxu0 0
      %891 = vmatpush.bf16.msra.mxu0 %v778
      %892 = vmatpush.bf16.msra.mxu0 %v774
      %893 = vmatmul.bf16.gmra.mxu0 %v805
      %v894 = vpop.f32.mrf.mxu0
      %v895 = vadd.f32 0.0, %v894
      %v896 = vpop.f32.mrf.mxu0
      %v897 = vadd.f32 0.0, %v896
      %898 = vmatmul.bf16.gmra.mxu0 %v808
      %v899 = vpop.f32.mrf.mxu0
      %v900 = vadd.f32 0.0, %v899
      %v901 = vpop.f32.mrf.mxu0
      %v902 = vadd.f32 0.0, %v901
      %903 = vmatmul.bf16.gmra.mxu0 %v811
      %v904 = vpop.f32.mrf.mxu0
      %v905 = vadd.f32 0.0, %v904
      %v906 = vpop.f32.mrf.mxu0
      %v907 = vadd.f32 0.0, %v906
      %908 = vmatmul.bf16.gmra.mxu0 %v814
      %v909 = vpop.f32.mrf.mxu0
      %v910 = vadd.f32 0.0, %v909
      %v911 = vpop.f32.mrf.mxu0
      %v912 = vadd.f32 0.0, %v911
      %913 = vmatmul.bf16.gmra.mxu0 %v817
      %v914 = vpop.f32.mrf.mxu0
      %v915 = vadd.f32 0.0, %v914
      %v916 = vpop.f32.mrf.mxu0
      %917 = vdwg.mxu0
      %918 = vmatpush.bf16.msra.mxu0 0
      %919 = vmatpush.bf16.msra.mxu0 0
      %920 = vmatpush.bf16.msra.mxu0 0
      %921 = vmatpush.bf16.msra.mxu0 0
      %922 = vmatpush.bf16.msra.mxu0 0
      %923 = vmatpush.bf16.msra.mxu0 0
      %924 = vmatpush.bf16.msra.mxu0 %v779
      %925 = vmatpush.bf16.msra.mxu0 %v775
      %926 = vmatmul.bf16.gmra.mxu0 %v805
      %v927 = vpop.f32.mrf.mxu0
      %v928 = vadd.f32 0.0, %v927
      %v929 = vpop.f32.mrf.mxu0
      %v930 = vadd.f32 0.0, %v929
      %931 = vmatmul.bf16.gmra.mxu0 %v808
      %v932 = vpop.f32.mrf.mxu0
      %v933 = vadd.f32 0.0, %v932
      %v934 = vpop.f32.mrf.mxu0
      %v935 = vadd.f32 0.0, %v934
      %936 = vmatmul.bf16.gmra.mxu0 %v811
      %v937 = vpop.f32.mrf.mxu0
      %v938 = vadd.f32 0.0, %v937
      %v939 = vpop.f32.mrf.mxu0
      %v940 = vadd.f32 0.0, %v939
      %941 = vmatmul.bf16.gmra.mxu0 %v814
      %v942 = vpop.f32.mrf.mxu0
      %v943 = vadd.f32 0.0, %v942
      %v944 = vpop.f32.mrf.mxu0
      %v945 = vadd.f32 0.0, %v944
      %946 = vmatmul.bf16.gmra.mxu0 %v817
      %v947 = vpop.f32.mrf.mxu0
      %v948 = vadd.f32 0.0, %v947
      %v949 = vpop.f32.mrf.mxu0
      %950 = vdwg.mxu0
      %s951 = smul.u32 %s624, 8
      %s952 = scalar_lea.vmem %s9, %s951
      %v953 = vld [vmem:[%s952] sm:$0xff]
      %954 = vrot.lane.b32.xlu0 %v829, 17
      %v955 = vpop.permute.xlu0 %954
      %956 = vrot.lane.b32.xlu0 %v862, 17
      %v957 = vpop.permute.xlu0 %956
      %958 = vrot.lane.b32.xlu0 %v895, 17
      %v959 = vpop.permute.xlu0 %958
      %960 = vrot.lane.b32.xlu0 %v928, 17
      %v961 = vpop.permute.xlu0 %960
      %v962 = vsel %vm121, %v959, %v961
      %v963 = vsel %vm121, %v957, %v959
      %v964 = vsel %vm121, %v955, %v957
      %v965 = vsel %vm121, %v961, %v955
      %v966 = vperm.slane %v93, 0
      %v967 = vperm.slane %v94, 0
      %v968 = vperm.slane %v95, 0
      %v969 = vperm.slane %v96, 0
      %v970 = vmul.f32 %v966, %v965
      %v971 = vmul.f32 %v967, %v964
      %v972 = vmul.f32 %v968, %v963
      %v973 = vmul.f32 %v969, %v962
      %v974 = vadd.f32 %v839, %v970
      %v975 = vadd.f32 %v872, %v971
      %v976 = vadd.f32 %v905, %v972
      %v977 = vadd.f32 %v938, %v973
      %978 = vrot.lane.b32.xlu0 %v831, 16
      %v979 = vpop.permute.xlu0 %978
      %980 = vrot.lane.b32.xlu0 %v864, 16
      %v981 = vpop.permute.xlu0 %980
      %982 = vrot.lane.b32.xlu0 %v897, 16
      %v983 = vpop.permute.xlu0 %982
      %984 = vrot.lane.b32.xlu0 %v930, 16
      %v985 = vpop.permute.xlu0 %984
      %v986 = vsel %vm138, %v983, %v985
      %v987 = vsel %vm138, %v981, %v983
      %v988 = vsel %vm138, %v979, %v981
      %v989 = vsel %vm138, %v985, %v979
      %v990 = vperm.slane %v93, 1
      %v991 = vperm.slane %v94, 1
      %v992 = vperm.slane %v95, 1
      %v993 = vperm.slane %v96, 1
      %v994 = vmul.f32 %v990, %v989
      %v995 = vmul.f32 %v991, %v988
      %v996 = vmul.f32 %v992, %v987
      %v997 = vmul.f32 %v993, %v986
      %v998 = vadd.f32 %v974, %v994
      %v999 = vadd.f32 %v975, %v995
      %v1000 = vadd.f32 %v976, %v996
      %v1001 = vadd.f32 %v977, %v997
      %1002 = vrot.lane.b32.xlu0 %v834, 15
      %v1003 = vpop.permute.xlu0 %1002
      %1004 = vrot.lane.b32.xlu0 %v867, 15
      %v1005 = vpop.permute.xlu0 %1004
      %1006 = vrot.lane.b32.xlu0 %v900, 15
      %v1007 = vpop.permute.xlu0 %1006
      %1008 = vrot.lane.b32.xlu0 %v933, 15
      %v1009 = vpop.permute.xlu0 %1008
      %v1010 = vsel %vm167, %v1007, %v1009
      %v1011 = vsel %vm167, %v1005, %v1007
      %v1012 = vsel %vm167, %v1003, %v1005
      %v1013 = vsel %vm167, %v1009, %v1003
      %v1014 = vperm.slane %v93, 2
      %v1015 = vperm.slane %v94, 2
      %v1016 = vperm.slane %v95, 2
      %v1017 = vperm.slane %v96, 2
      %v1018 = vmul.f32 %v1014, %v1013
      %v1019 = vmul.f32 %v1015, %v1012
      %v1020 = vmul.f32 %v1016, %v1011
      %v1021 = vmul.f32 %v1017, %v1010
      %v1022 = vadd.f32 %v998, %v1018
      %v1023 = vadd.f32 %v999, %v1019
      %v1024 = vadd.f32 %v1000, %v1020
      %v1025 = vadd.f32 %v1001, %v1021
      %1026 = vrot.lane.b32.xlu0 %v836, 1
      %v1027 = vpop.permute.xlu0 %1026
      %1028 = vrot.lane.b32.xlu0 %v869, 1
      %v1029 = vpop.permute.xlu0 %1028
      %1030 = vrot.lane.b32.xlu0 %v902, 1
      %v1031 = vpop.permute.xlu0 %1030
      %1032 = vrot.lane.b32.xlu0 %v935, 1
      %v1033 = vpop.permute.xlu0 %1032
      %v1034 = vsel %vm196, %v1031, %v1033
      %v1035 = vsel %vm196, %v1029, %v1031
      %v1036 = vsel %vm196, %v1027, %v1029
      %v1037 = vsel %vm196, %v1033, %v1027
      %v1038 = vperm.slane %v93, 3
      %v1039 = vperm.slane %v94, 3
      %v1040 = vperm.slane %v95, 3
      %v1041 = vperm.slane %v96, 3
      %v1042 = vmul.f32 %v1038, %v1037
      %v1043 = vmul.f32 %v1039, %v1036
      %v1044 = vmul.f32 %v1040, %v1035
      %v1045 = vmul.f32 %v1041, %v1034
      %v1046 = vadd.f32 %v1022, %v1042
      %v1047 = vadd.f32 %v1023, %v1043
      %v1048 = vadd.f32 %v1024, %v1044
      %v1049 = vadd.f32 %v1025, %v1045
      %1050 = vrot.lane.b32.xlu0 %v841, 127
      %v1051 = vpop.permute.xlu0 %1050
      %1052 = vrot.lane.b32.xlu0 %v874, 127
      %v1053 = vpop.permute.xlu0 %1052
      %1054 = vrot.lane.b32.xlu0 %v907, 127
      %v1055 = vpop.permute.xlu0 %1054
      %1056 = vrot.lane.b32.xlu0 %v940, 127
      %v1057 = vpop.permute.xlu0 %1056
      %v1058 = vsel %vm225, %v1055, %v1057
      %v1059 = vsel %vm225, %v1053, %v1055
      %v1060 = vsel %vm225, %v1051, %v1053
      %v1061 = vsel %vm225, %v1057, %v1051
      %v1062 = vperm.slane %v93, 5
      %v1063 = vperm.slane %v94, 5
      %v1064 = vperm.slane %v95, 5
      %v1065 = vperm.slane %v96, 5
      %v1066 = vmul.f32 %v1062, %v1060
      %v1067 = vmul.f32 %v1063, %v1059
      %v1068 = vmul.f32 %v1064, %v1058
      %v1069 = vmul.f32 %v1065, %v1061
      %v1070 = vadd.f32 %v1046, %v1066
      %v1071 = vadd.f32 %v1047, %v1067
      %v1072 = vadd.f32 %v1048, %v1068
      %v1073 = vadd.f32 %v1049, %v1069
      %1074 = vrot.lane.b32.xlu0 %v844, 113
      %v1075 = vpop.permute.xlu0 %1074
      %1076 = vrot.lane.b32.xlu0 %v877, 113
      %v1077 = vpop.permute.xlu0 %1076
      %1078 = vrot.lane.b32.xlu0 %v910, 113
      %v1079 = vpop.permute.xlu0 %1078
      %1080 = vrot.lane.b32.xlu0 %v943, 113
      %v1081 = vpop.permute.xlu0 %1080
      %v1082 = vsel %vm254, %v1079, %v1081
      %v1083 = vsel %vm254, %v1077, %v1079
      %v1084 = vsel %vm254, %v1075, %v1077
      %v1085 = vsel %vm254, %v1081, %v1075
      %v1086 = vperm.slane %v93, 6
      %v1087 = vperm.slane %v94, 6
      %v1088 = vperm.slane %v95, 6
      %v1089 = vperm.slane %v96, 6
      %v1090 = vmul.f32 %v1086, %v1084
      %v1091 = vmul.f32 %v1087, %v1083
      %v1092 = vmul.f32 %v1088, %v1082
      %v1093 = vmul.f32 %v1089, %v1085
      %v1094 = vadd.f32 %v1070, %v1090
      %v1095 = vadd.f32 %v1071, %v1091
      %v1096 = vadd.f32 %v1072, %v1092
      %v1097 = vadd.f32 %v1073, %v1093
      %1098 = vrot.lane.b32.xlu0 %v846, 112
      %v1099 = vpop.permute.xlu0 %1098
      %1100 = vrot.lane.b32.xlu0 %v879, 112
      %v1101 = vpop.permute.xlu0 %1100
      %1102 = vrot.lane.b32.xlu0 %v912, 112
      %v1103 = vpop.permute.xlu0 %1102
      %1104 = vrot.lane.b32.xlu0 %v945, 112
      %v1105 = vpop.permute.xlu0 %1104
      %v1106 = vsel %vm283, %v1103, %v1105
      %v1107 = vsel %vm283, %v1101, %v1103
      %v1108 = vsel %vm283, %v1099, %v1101
      %v1109 = vsel %vm283, %v1105, %v1099
      %v1110 = vperm.slane %v93, 7
      %v1111 = vperm.slane %v94, 7
      %v1112 = vperm.slane %v95, 7
      %v1113 = vperm.slane %v96, 7
      %v1114 = vmul.f32 %v1110, %v1108
      %v1115 = vmul.f32 %v1111, %v1107
      %v1116 = vmul.f32 %v1112, %v1106
      %v1117 = vmul.f32 %v1113, %v1109
      %v1118 = vadd.f32 %v1094, %v1114
      %v1119 = vadd.f32 %v1095, %v1115
      %v1120 = vadd.f32 %v1096, %v1116
      %v1121 = vadd.f32 %v1097, %v1117
      %1122 = vrot.lane.b32.xlu0 %v849, 111
      %v1123 = vpop.permute.xlu0 %1122
      %1124 = vrot.lane.b32.xlu0 %v882, 111
      %v1125 = vpop.permute.xlu0 %1124
      %1126 = vrot.lane.b32.xlu0 %v915, 111
      %v1127 = vpop.permute.xlu0 %1126
      %1128 = vrot.lane.b32.xlu0 %v948, 111
      %v1129 = vpop.permute.xlu0 %1128
      %v1130 = vsel %vm312, %v1127, %v1129
      %v1131 = vsel %vm312, %v1125, %v1127
      %v1132 = vsel %vm312, %v1123, %v1125
      %v1133 = vsel %vm312, %v1129, %v1123
      %v1134 = vperm.slane %v97, 0
      %v1135 = vperm.slane %v98, 0
      %v1136 = vperm.slane %v99, 0
      %v1137 = vperm.slane %v100, 0
      %v1138 = vmul.f32 %v1134, %v1132
      %v1139 = vmul.f32 %v1135, %v1131
      %v1140 = vmul.f32 %v1136, %v1130
      %v1141 = vmul.f32 %v1137, %v1133
      %v1142 = vadd.f32 %v1118, %v1138
      %v1143 = vadd.f32 %v1119, %v1139
      %v1144 = vadd.f32 %v1120, %v1140
      %v1145 = vadd.f32 %v1121, %v1141
      %1147 = vset.pattern.permute.xlu0 0
      %1148 = vperm.xlu0 %1147, %v953
      %v1149 = vpop.permute.xlu0 %1148
      %v1151 = vadd.f32 %v1142, %v1149
      %v1152 = vadd.f32 %v1143, %v1149
      %v1153 = vadd.f32 %v1144, %v1149
      %v1154 = vadd.f32 %v1145, %v1149
      %1155 = vst [vmem:[#allocation2 + $0x80] sm:$0xff] %v1151
      %1156 = vst [vmem:[#allocation2 + $0x88] sm:$0xff] %v1152
      %1157 = vst [vmem:[#allocation2 + $0x90] sm:$0xff] %v1153
      %1158 = vst [vmem:[#allocation2 + $0x98] sm:$0xff] %v1154
      %v1159 = vld [vmem:[#allocation2] sm:$0xff]
      %v1160 = vld [vmem:[#allocation2 + $0x8] sm:$0xff]
      %v1161 = vld [vmem:[#allocation2 + $0x10] sm:$0xff]
      %v1162 = vld [vmem:[#allocation2 + $0x18] sm:$0xff]
      %v1163 = vld [vmem:[#allocation2 + $0x20] sm:$0xff]
      %v1164 = vld [vmem:[#allocation2 + $0x28] sm:$0xff]
      %v1165 = vld [vmem:[#allocation2 + $0x30] sm:$0xff]
      %v1166 = vld [vmem:[#allocation2 + $0x38] sm:$0xff]
      %v1167 = vld [vmem:[#allocation2 + $0x40] sm:$0xff]
      %v1168 = vld [vmem:[#allocation2 + $0x48] sm:$0xff]
      %v1169 = vld [vmem:[#allocation2 + $0x50] sm:$0xff]
      %v1170 = vld [vmem:[#allocation2 + $0x58] sm:$0xff]
      %v1171 = vld [vmem:[#allocation2 + $0x60] sm:$0xff]
      %v1172 = vld [vmem:[#allocation2 + $0x68] sm:$0xff]
      %v1173 = vld [vmem:[#allocation2 + $0x70] sm:$0xff]
      %v1174 = vld [vmem:[#allocation2 + $0x78] sm:$0xff]
      %v1175 = vld [vmem:[#allocation2 + $0x80] sm:$0xff]
      %v1176 = vld [vmem:[#allocation2 + $0x88] sm:$0xff]
      %v1177 = vld [vmem:[#allocation2 + $0x90] sm:$0xff]
      %v1178 = vld [vmem:[#allocation2 + $0x98] sm:$0xff]
      %s1179 = smul.u32 %s624, 40
      %s1180 = scalar_lea.vmem %s10, %s1179
      %v1181 = vld [vmem:[%s1180] sm:$0xff]
      %v1182 = vld [vmem:[%s1180 + $0x8] sm:$0xff]
      %v1183 = vld [vmem:[%s1180 + $0x10] sm:$0xff]
      %v1184 = vld [vmem:[%s1180 + $0x18] sm:$0xff]
      %v1185 = vld [vmem:[%s1180 + $0x20] sm:$0xff]
      %s1186 = scalar_lea.vmem %s11, %s1179
      %v1187 = vld [vmem:[%s1186] sm:$0xff]
      %v1188 = vld [vmem:[%s1186 + $0x8] sm:$0xff]
      %v1189 = vld [vmem:[%s1186 + $0x10] sm:$0xff]
      %v1190 = vld [vmem:[%s1186 + $0x18] sm:$0xff]
      %v1191 = vld [vmem:[%s1186 + $0x20] sm:$0xff]
      %1193 = vset.pattern.permute.xlu0 0
      %1194 = vperm.xlu0 %1193, %v1181
      %v1195 = vpop.permute.xlu0 %1194
      %1198 = vset.pattern.permute.xlu0 0
      %1199 = vperm.xlu0 %1198, %v1182
      %v1200 = vpop.permute.xlu0 %1199
      %1203 = vset.pattern.permute.xlu0 0
      %1204 = vperm.xlu0 %1203, %v1183
      %v1205 = vpop.permute.xlu0 %1204
      %1208 = vset.pattern.permute.xlu0 0
      %1209 = vperm.xlu0 %1208, %v1184
      %v1210 = vpop.permute.xlu0 %1209
      %1213 = vset.pattern.permute.xlu0 0
      %1214 = vperm.xlu0 %1213, %v1185
      %v1215 = vpop.permute.xlu0 %1214
      %v1217 = vmul.f32 %v1159, %v1195
      %v1218 = vmul.f32 %v1160, %v1195
      %v1219 = vmul.f32 %v1161, %v1195
      %v1220 = vmul.f32 %v1162, %v1195
      %v1221 = vmul.f32 %v1163, %v1200
      %v1222 = vmul.f32 %v1164, %v1200
      %v1223 = vmul.f32 %v1165, %v1200
      %v1224 = vmul.f32 %v1166, %v1200
      %v1225 = vmul.f32 %v1167, %v1205
      %v1226 = vmul.f32 %v1168, %v1205
      %v1227 = vmul.f32 %v1169, %v1205
      %v1228 = vmul.f32 %v1170, %v1205
      %v1229 = vmul.f32 %v1171, %v1210
      %v1230 = vmul.f32 %v1172, %v1210
      %v1231 = vmul.f32 %v1173, %v1210
      %v1232 = vmul.f32 %v1174, %v1210
      %v1233 = vmul.f32 %v1175, %v1215
      %v1234 = vmul.f32 %v1176, %v1215
      %v1235 = vmul.f32 %v1177, %v1215
      %v1236 = vmul.f32 %v1178, %v1215
      %1238 = vset.pattern.permute.xlu0 0
      %1239 = vperm.xlu0 %1238, %v1187
      %v1240 = vpop.permute.xlu0 %1239
      %1243 = vset.pattern.permute.xlu0 0
      %1244 = vperm.xlu0 %1243, %v1188
      %v1245 = vpop.permute.xlu0 %1244
      %1248 = vset.pattern.permute.xlu0 0
      %1249 = vperm.xlu0 %1248, %v1189
      %v1250 = vpop.permute.xlu0 %1249
      %1253 = vset.pattern.permute.xlu0 0
      %1254 = vperm.xlu0 %1253, %v1190
      %v1255 = vpop.permute.xlu0 %1254
      %1258 = vset.pattern.permute.xlu0 0
      %1259 = vperm.xlu0 %1258, %v1191
      %v1260 = vpop.permute.xlu0 %1259
      %v1262 = vadd.f32 %v1217, %v1240
      %v1263 = vadd.f32 %v1218, %v1240
      %v1264 = vadd.f32 %v1219, %v1240
      %v1265 = vadd.f32 %v1220, %v1240
      %v1266 = vadd.f32 %v1221, %v1245
      %v1267 = vadd.f32 %v1222, %v1245
      %v1268 = vadd.f32 %v1223, %v1245
      %v1269 = vadd.f32 %v1224, %v1245
      %v1270 = vadd.f32 %v1225, %v1250
      %v1271 = vadd.f32 %v1226, %v1250
      %v1272 = vadd.f32 %v1227, %v1250
      %v1273 = vadd.f32 %v1228, %v1250
      %v1274 = vadd.f32 %v1229, %v1255
      %v1275 = vadd.f32 %v1230, %v1255
      %v1276 = vadd.f32 %v1231, %v1255
      %v1277 = vadd.f32 %v1232, %v1255
      %v1278 = vadd.f32 %v1233, %v1260
      %v1279 = vadd.f32 %v1234, %v1260
      %v1280 = vadd.f32 %v1235, %v1260
      %v1281 = vadd.f32 %v1236, %v1260
      %v1282 = vmul.f32 %v1262, 0.01
      %v1283 = vmul.f32 %v1263, 0.01
      %v1284 = vmul.f32 %v1264, 0.01
      %v1285 = vmul.f32 %v1265, 0.01
      %v1286 = vmul.f32 %v1266, 0.01
      %v1287 = vmul.f32 %v1267, 0.01
      %v1288 = vmul.f32 %v1268, 0.01
      %v1289 = vmul.f32 %v1269, 0.01
      %v1290 = vmul.f32 %v1270, 0.01
      %v1291 = vmul.f32 %v1271, 0.01
      %v1292 = vmul.f32 %v1272, 0.01
      %v1293 = vmul.f32 %v1273, 0.01
      %v1294 = vmul.f32 %v1274, 0.01
      %v1295 = vmul.f32 %v1275, 0.01
      %v1296 = vmul.f32 %v1276, 0.01
      %v1297 = vmul.f32 %v1277, 0.01
      %v1298 = vmul.f32 %v1278, 0.01
      %v1299 = vmul.f32 %v1279, 0.01
      %v1300 = vmul.f32 %v1280, 0.01
      %v1301 = vmul.f32 %v1281, 0.01
      %v1302 = vmax.f32 %v1262, %v1282
      %v1303 = vmax.f32 %v1263, %v1283
      %v1304 = vmax.f32 %v1264, %v1284
      %v1305 = vmax.f32 %v1265, %v1285
      %v1306 = vmax.f32 %v1266, %v1286
      %v1307 = vmax.f32 %v1267, %v1287
      %v1308 = vmax.f32 %v1268, %v1288
      %v1309 = vmax.f32 %v1269, %v1289
      %v1310 = vmax.f32 %v1270, %v1290
      %v1311 = vmax.f32 %v1271, %v1291
      %v1312 = vmax.f32 %v1272, %v1292
      %v1313 = vmax.f32 %v1273, %v1293
      %v1314 = vmax.f32 %v1274, %v1294
      %v1315 = vmax.f32 %v1275, %v1295
      %v1316 = vmax.f32 %v1276, %v1296
      %v1317 = vmax.f32 %v1277, %v1297
      %v1318 = vmax.f32 %v1278, %v1298
      %v1319 = vmax.f32 %v1279, %v1299
      %v1320 = vmax.f32 %v1280, %v1300
      %v1321 = vmax.f32 %v1281, %v1301
      %s1322 = smul.addr %s760, 4
      %s1323 = scalar_lea.vmem %s12, %s1322
      %v1324 = vld [vmem:[%s1323] sm:$0xf]
      %v1325 = vld [vmem:[%s1323 + $0x4] sm:$0xf]
      %v1326 = vld [vmem:[%s1323 + $0x8] sm:$0xf]
      %v1327 = vld [vmem:[%s1323 + $0xc] sm:$0xf]
      %v1328 = vld [vmem:[%s1323 + $0x10] sm:$0xf]
      %v1329 = vld [vmem:[%s1323 + $0x14] sm:$0xf]
      %v1330 = vld [vmem:[%s1323 + $0x18] sm:$0xf]
      %v1331 = vld [vmem:[%s1323 + $0x1c] sm:$0xf]
      %v1332 = vld [vmem:[%s1323 + $0x20] sm:$0xf]
      %v1333 = vpack.c.bf16 %v1306, %v1302
      %v1334 = vpack.c.bf16 %v1307, %v1303
      %v1335 = vpack.c.bf16 %v1308, %v1304
      %v1336 = vpack.c.bf16 %v1309, %v1305
      %v1337 = vpack.c.bf16 %v1314, %v1310
      %v1338 = vpack.c.bf16 %v1315, %v1311
      %v1339 = vpack.c.bf16 %v1316, %v1312
      %v1340 = vpack.c.bf16 %v1317, %v1313
      %v1341 = vpack.c.bf16 %v1318, %v1318
      %v1342 = vpack.c.bf16 %v1319, %v1319
      %v1343 = vpack.c.bf16 %v1320, %v1320
      %v1344 = vpack.c.bf16 %v1321, %v1321
      %v1354 = vunpack.c.l.b16 %v1324
      %v1355 = vunpack.c.l.b16 %v1325
      %v1356 = vunpack.c.l.b16 %v1326
      %v1357 = vunpack.c.l.b16 %v1327
      %v1358 = vunpack.c.l.b16 %v1328
      %v1359 = vunpack.c.l.b16 %v1329
      %v1360 = vunpack.c.l.b16 %v1330
      %v1361 = vunpack.c.l.b16 %v1331
      %v1362 = vunpack.c.l.b16 %v1332
      %v1363 = vpack.c.b16 %v1355, %v1354
      %v1364 = vpack.c.b16 %v1357, %v1356
      %v1365 = vpack.c.b16 %v1359, %v1358
      %v1366 = vpack.c.b16 %v1361, %v1360
      %v1367 = vpack.c.b16 %v1362, %v1362
      %vm1368 = vcmask 326656
      %v1370 = vsel %vm1368, %v1363, 0
      %v1373 = vsel %vm1368, %v1364, 0
      %v1376 = vsel %vm1368, %v1365, 0
      %v1379 = vsel %vm1368, %v1366, 0
      %v1382 = vsel %vm1368, %v1367, 0
      %v1385 = vsel %vm336, %v1341, 0
      %v1388 = vsel %vm336, %v1342, 0
      %v1391 = vsel %vm336, %v1343, 0
      %v1394 = vsel %vm336, %v1344, 0
      %1396 = vmatpush.bf16.msra.mxu0 0
      %1397 = vmatpush.bf16.msra.mxu0 0
      %1398 = vmatpush.bf16.msra.mxu0 0
      %1399 = vmatpush.bf16.msra.mxu0 0
      %1400 = vmatpush.bf16.msra.mxu0 0
      %1401 = vmatpush.bf16.msra.mxu0 %v1385
      %1402 = vmatpush.bf16.msra.mxu0 %v1337
      %1403 = vmatpush.bf16.msra.mxu0 %v1333
      %1404 = vmatmul.bf16.gmra.mxu0 %v1370
      %v1405 = vpop.f32.mrf.mxu0
      %v1406 = vadd.f32 0.0, %v1405
      %v1407 = vpop.f32.mrf.mxu0
      %v1408 = vadd.f32 0.0, %v1407
      %1409 = vmatmul.bf16.gmra.mxu0 %v1373
      %v1410 = vpop.f32.mrf.mxu0
      %v1411 = vadd.f32 0.0, %v1410
      %v1412 = vpop.f32.mrf.mxu0
      %v1413 = vadd.f32 0.0, %v1412
      %1414 = vmatmul.bf16.gmra.mxu0 %v1376
      %v1415 = vpop.f32.mrf.mxu0
      %v1416 = vadd.f32 0.0, %v1415
      %v1417 = vpop.f32.mrf.mxu0
      %v1418 = vadd.f32 0.0, %v1417
      %1419 = vmatmul.bf16.gmra.mxu0 %v1379
      %v1420 = vpop.f32.mrf.mxu0
      %v1421 = vadd.f32 0.0, %v1420
      %v1422 = vpop.f32.mrf.mxu0
      %v1423 = vadd.f32 0.0, %v1422
      %1424 = vmatmul.bf16.gmra.mxu0 %v1382
      %v1425 = vpop.f32.mrf.mxu0
      %v1426 = vadd.f32 0.0, %v1425
      %v1427 = vpop.f32.mrf.mxu0
      %1428 = vdwg.mxu0
      %1429 = vmatpush.bf16.msra.mxu0 0
      %1430 = vmatpush.bf16.msra.mxu0 0
      %1431 = vmatpush.bf16.msra.mxu0 0
      %1432 = vmatpush.bf16.msra.mxu0 0
      %1433 = vmatpush.bf16.msra.mxu0 0
      %1434 = vmatpush.bf16.msra.mxu0 %v1388
      %1435 = vmatpush.bf16.msra.mxu0 %v1338
      %1436 = vmatpush.bf16.msra.mxu0 %v1334
      %1437 = vmatmul.bf16.gmra.mxu0 %v1370
      %v1438 = vpop.f32.mrf.mxu0
      %v1439 = vadd.f32 0.0, %v1438
      %v1440 = vpop.f32.mrf.mxu0
      %v1441 = vadd.f32 0.0, %v1440
      %1442 = vmatmul.bf16.gmra.mxu0 %v1373
      %v1443 = vpop.f32.mrf.mxu0
      %v1444 = vadd.f32 0.0, %v1443
      %v1445 = vpop.f32.mrf.mxu0
      %v1446 = vadd.f32 0.0, %v1445
      %1447 = vmatmul.bf16.gmra.mxu0 %v1376
      %v1448 = vpop.f32.mrf.mxu0
      %v1449 = vadd.f32 0.0, %v1448
      %v1450 = vpop.f32.mrf.mxu0
      %v1451 = vadd.f32 0.0, %v1450
      %1452 = vmatmul.bf16.gmra.mxu0 %v1379
      %v1453 = vpop.f32.mrf.mxu0
      %v1454 = vadd.f32 0.0, %v1453
      %v1455 = vpop.f32.mrf.mxu0
      %v1456 = vadd.f32 0.0, %v1455
      %1457 = vmatmul.bf16.gmra.mxu0 %v1382
      %v1458 = vpop.f32.mrf.mxu0
      %v1459 = vadd.f32 0.0, %v1458
      %v1460 = vpop.f32.mrf.mxu0
      %1461 = vdwg.mxu0
      %1462 = vmatpush.bf16.msra.mxu0 0
      %1463 = vmatpush.bf16.msra.mxu0 0
      %1464 = vmatpush.bf16.msra.mxu0 0
      %1465 = vmatpush.bf16.msra.mxu0 0
      %1466 = vmatpush.bf16.msra.mxu0 0
      %1467 = vmatpush.bf16.msra.mxu0 %v1391
      %1468 = vmatpush.bf16.msra.mxu0 %v1339
      %1469 = vmatpush.bf16.msra.mxu0 %v1335
      %1470 = vmatmul.bf16.gmra.mxu0 %v1370
      %v1471 = vpop.f32.mrf.mxu0
      %v1472 = vadd.f32 0.0, %v1471
      %v1473 = vpop.f32.mrf.mxu0
      %v1474 = vadd.f32 0.0, %v1473
      %1475 = vmatmul.bf16.gmra.mxu0 %v1373
      %v1476 = vpop.f32.mrf.mxu0
      %v1477 = vadd.f32 0.0, %v1476
      %v1478 = vpop.f32.mrf.mxu0
      %v1479 = vadd.f32 0.0, %v1478
      %1480 = vmatmul.bf16.gmra.mxu0 %v1376
      %v1481 = vpop.f32.mrf.mxu0
      %v1482 = vadd.f32 0.0, %v1481
      %v1483 = vpop.f32.mrf.mxu0
      %v1484 = vadd.f32 0.0, %v1483
      %1485 = vmatmul.bf16.gmra.mxu0 %v1379
      %v1486 = vpop.f32.mrf.mxu0
      %v1487 = vadd.f32 0.0, %v1486
      %v1488 = vpop.f32.mrf.mxu0
      %v1489 = vadd.f32 0.0, %v1488
      %1490 = vmatmul.bf16.gmra.mxu0 %v1382
      %v1491 = vpop.f32.mrf.mxu0
      %v1492 = vadd.f32 0.0, %v1491
      %v1493 = vpop.f32.mrf.mxu0
      %1494 = vdwg.mxu0
      %1495 = vmatpush.bf16.msra.mxu0 0
      %1496 = vmatpush.bf16.msra.mxu0 0
      %1497 = vmatpush.bf16.msra.mxu0 0
      %1498 = vmatpush.bf16.msra.mxu0 0
      %1499 = vmatpush.bf16.msra.mxu0 0
      %1500 = vmatpush.bf16.msra.mxu0 %v1394
      %1501 = vmatpush.bf16.msra.mxu0 %v1340
      %1502 = vmatpush.bf16.msra.mxu0 %v1336
      %1503 = vmatmul.bf16.gmra.mxu0 %v1370
      %v1504 = vpop.f32.mrf.mxu0
      %v1505 = vadd.f32 0.0, %v1504
      %v1506 = vpop.f32.mrf.mxu0
      %v1507 = vadd.f32 0.0, %v1506
      %1508 = vmatmul.bf16.gmra.mxu0 %v1373
      %v1509 = vpop.f32.mrf.mxu0
      %v1510 = vadd.f32 0.0, %v1509
      %v1511 = vpop.f32.mrf.mxu0
      %v1512 = vadd.f32 0.0, %v1511
      %1513 = vmatmul.bf16.gmra.mxu0 %v1376
      %v1514 = vpop.f32.mrf.mxu0
      %v1515 = vadd.f32 0.0, %v1514
      %v1516 = vpop.f32.mrf.mxu0
      %v1517 = vadd.f32 0.0, %v1516
      %1518 = vmatmul.bf16.gmra.mxu0 %v1379
      %v1519 = vpop.f32.mrf.mxu0
      %v1520 = vadd.f32 0.0, %v1519
      %v1521 = vpop.f32.mrf.mxu0
      %v1522 = vadd.f32 0.0, %v1521
      %1523 = vmatmul.bf16.gmra.mxu0 %v1382
      %v1524 = vpop.f32.mrf.mxu0
      %v1525 = vadd.f32 0.0, %v1524
      %v1526 = vpop.f32.mrf.mxu0
      %1527 = vdwg.mxu0
      %s1528 = scalar_lea.vmem %s13, %s951
      %v1529 = vld [vmem:[%s1528] sm:$0xff]
      %1530 = vrot.lane.b32.xlu0 %v1406, 17
      %v1531 = vpop.permute.xlu0 %1530
      %1532 = vrot.lane.b32.xlu0 %v1439, 17
      %v1533 = vpop.permute.xlu0 %1532
      %1534 = vrot.lane.b32.xlu0 %v1472, 17
      %v1535 = vpop.permute.xlu0 %1534
      %1536 = vrot.lane.b32.xlu0 %v1505, 17
      %v1537 = vpop.permute.xlu0 %1536
      %v1538 = vsel %vm121, %v1535, %v1537
      %v1539 = vsel %vm121, %v1533, %v1535
      %v1540 = vsel %vm121, %v1531, %v1533
      %v1541 = vsel %vm121, %v1537, %v1531
      %v1542 = vmul.f32 %v966, %v1541
      %v1543 = vmul.f32 %v967, %v1540
      %v1544 = vmul.f32 %v968, %v1539
      %v1545 = vmul.f32 %v969, %v1538
      %v1546 = vadd.f32 %v1416, %v1542
      %v1547 = vadd.f32 %v1449, %v1543
      %v1548 = vadd.f32 %v1482, %v1544
      %v1549 = vadd.f32 %v1515, %v1545
      %1550 = vrot.lane.b32.xlu0 %v1408, 16
      %v1551 = vpop.permute.xlu0 %1550
      %1552 = vrot.lane.b32.xlu0 %v1441, 16
      %v1553 = vpop.permute.xlu0 %1552
      %1554 = vrot.lane.b32.xlu0 %v1474, 16
      %v1555 = vpop.permute.xlu0 %1554
      %1556 = vrot.lane.b32.xlu0 %v1507, 16
      %v1557 = vpop.permute.xlu0 %1556
      %v1558 = vsel %vm138, %v1555, %v1557
      %v1559 = vsel %vm138, %v1553, %v1555
      %v1560 = vsel %vm138, %v1551, %v1553
      %v1561 = vsel %vm138, %v1557, %v1551
      %v1562 = vmul.f32 %v990, %v1561
      %v1563 = vmul.f32 %v991, %v1560
      %v1564 = vmul.f32 %v992, %v1559
      %v1565 = vmul.f32 %v993, %v1558
      %v1566 = vadd.f32 %v1546, %v1562
      %v1567 = vadd.f32 %v1547, %v1563
      %v1568 = vadd.f32 %v1548, %v1564
      %v1569 = vadd.f32 %v1549, %v1565
      %1570 = vrot.lane.b32.xlu0 %v1411, 15
      %v1571 = vpop.permute.xlu0 %1570
      %1572 = vrot.lane.b32.xlu0 %v1444, 15
      %v1573 = vpop.permute.xlu0 %1572
      %1574 = vrot.lane.b32.xlu0 %v1477, 15
      %v1575 = vpop.permute.xlu0 %1574
      %1576 = vrot.lane.b32.xlu0 %v1510, 15
      %v1577 = vpop.permute.xlu0 %1576
      %v1578 = vsel %vm167, %v1575, %v1577
      %v1579 = vsel %vm167, %v1573, %v1575
      %v1580 = vsel %vm167, %v1571, %v1573
      %v1581 = vsel %vm167, %v1577, %v1571
      %v1582 = vmul.f32 %v1014, %v1581
      %v1583 = vmul.f32 %v1015, %v1580
      %v1584 = vmul.f32 %v1016, %v1579
      %v1585 = vmul.f32 %v1017, %v1578
      %v1586 = vadd.f32 %v1566, %v1582
      %v1587 = vadd.f32 %v1567, %v1583
      %v1588 = vadd.f32 %v1568, %v1584
      %v1589 = vadd.f32 %v1569, %v1585
      %1590 = vrot.lane.b32.xlu0 %v1413, 1
      %v1591 = vpop.permute.xlu0 %1590
      %1592 = vrot.lane.b32.xlu0 %v1446, 1
      %v1593 = vpop.permute.xlu0 %1592
      %1594 = vrot.lane.b32.xlu0 %v1479, 1
      %v1595 = vpop.permute.xlu0 %1594
      %1596 = vrot.lane.b32.xlu0 %v1512, 1
      %v1597 = vpop.permute.xlu0 %1596
      %v1598 = vsel %vm196, %v1595, %v1597
      %v1599 = vsel %vm196, %v1593, %v1595
      %v1600 = vsel %vm196, %v1591, %v1593
      %v1601 = vsel %vm196, %v1597, %v1591
      %v1602 = vmul.f32 %v1038, %v1601
      %v1603 = vmul.f32 %v1039, %v1600
      %v1604 = vmul.f32 %v1040, %v1599
      %v1605 = vmul.f32 %v1041, %v1598
      %v1606 = vadd.f32 %v1586, %v1602
      %v1607 = vadd.f32 %v1587, %v1603
      %v1608 = vadd.f32 %v1588, %v1604
      %v1609 = vadd.f32 %v1589, %v1605
      %1610 = vrot.lane.b32.xlu0 %v1418, 127
      %v1611 = vpop.permute.xlu0 %1610
      %1612 = vrot.lane.b32.xlu0 %v1451, 127
      %v1613 = vpop.permute.xlu0 %1612
      %1614 = vrot.lane.b32.xlu0 %v1484, 127
      %v1615 = vpop.permute.xlu0 %1614
      %1616 = vrot.lane.b32.xlu0 %v1517, 127
      %v1617 = vpop.permute.xlu0 %1616
      %v1618 = vsel %vm225, %v1615, %v1617
      %v1619 = vsel %vm225, %v1613, %v1615
      %v1620 = vsel %vm225, %v1611, %v1613
      %v1621 = vsel %vm225, %v1617, %v1611
      %v1622 = vmul.f32 %v1062, %v1620
      %v1623 = vmul.f32 %v1063, %v1619
      %v1624 = vmul.f32 %v1064, %v1618
      %v1625 = vmul.f32 %v1065, %v1621
      %v1626 = vadd.f32 %v1606, %v1622
      %v1627 = vadd.f32 %v1607, %v1623
      %v1628 = vadd.f32 %v1608, %v1624
      %v1629 = vadd.f32 %v1609, %v1625
      %1630 = vrot.lane.b32.xlu0 %v1421, 113
      %v1631 = vpop.permute.xlu0 %1630
      %1632 = vrot.lane.b32.xlu0 %v1454, 113
      %v1633 = vpop.permute.xlu0 %1632
      %1634 = vrot.lane.b32.xlu0 %v1487, 113
      %v1635 = vpop.permute.xlu0 %1634
      %1636 = vrot.lane.b32.xlu0 %v1520, 113
      %v1637 = vpop.permute.xlu0 %1636
      %v1638 = vsel %vm254, %v1635, %v1637
      %v1639 = vsel %vm254, %v1633, %v1635
      %v1640 = vsel %vm254, %v1631, %v1633
      %v1641 = vsel %vm254, %v1637, %v1631
      %v1642 = vmul.f32 %v1086, %v1640
      %v1643 = vmul.f32 %v1087, %v1639
      %v1644 = vmul.f32 %v1088, %v1638
      %v1645 = vmul.f32 %v1089, %v1641
      %v1646 = vadd.f32 %v1626, %v1642
      %v1647 = vadd.f32 %v1627, %v1643
      %v1648 = vadd.f32 %v1628, %v1644
      %v1649 = vadd.f32 %v1629, %v1645
      %1650 = vrot.lane.b32.xlu0 %v1423, 112
      %v1651 = vpop.permute.xlu0 %1650
      %1652 = vrot.lane.b32.xlu0 %v1456, 112
      %v1653 = vpop.permute.xlu0 %1652
      %1654 = vrot.lane.b32.xlu0 %v1489, 112
      %v1655 = vpop.permute.xlu0 %1654
      %1656 = vrot.lane.b32.xlu0 %v1522, 112
      %v1657 = vpop.permute.xlu0 %1656
      %v1658 = vsel %vm283, %v1655, %v1657
      %v1659 = vsel %vm283, %v1653, %v1655
      %v1660 = vsel %vm283, %v1651, %v1653
      %v1661 = vsel %vm283, %v1657, %v1651
      %v1662 = vmul.f32 %v1110, %v1660
      %v1663 = vmul.f32 %v1111, %v1659
      %v1664 = vmul.f32 %v1112, %v1658
      %v1665 = vmul.f32 %v1113, %v1661
      %v1666 = vadd.f32 %v1646, %v1662
      %v1667 = vadd.f32 %v1647, %v1663
      %v1668 = vadd.f32 %v1648, %v1664
      %v1669 = vadd.f32 %v1649, %v1665
      %1670 = vrot.lane.b32.xlu0 %v1426, 111
      %v1671 = vpop.permute.xlu0 %1670
      %1672 = vrot.lane.b32.xlu0 %v1459, 111
      %v1673 = vpop.permute.xlu0 %1672
      %1674 = vrot.lane.b32.xlu0 %v1492, 111
      %v1675 = vpop.permute.xlu0 %1674
      %1676 = vrot.lane.b32.xlu0 %v1525, 111
      %v1677 = vpop.permute.xlu0 %1676
      %v1678 = vsel %vm312, %v1675, %v1677
      %v1679 = vsel %vm312, %v1673, %v1675
      %v1680 = vsel %vm312, %v1671, %v1673
      %v1681 = vsel %vm312, %v1677, %v1671
      %v1682 = vmul.f32 %v1134, %v1680
      %v1683 = vmul.f32 %v1135, %v1679
      %v1684 = vmul.f32 %v1136, %v1678
      %v1685 = vmul.f32 %v1137, %v1681
      %v1686 = vadd.f32 %v1666, %v1682
      %v1687 = vadd.f32 %v1667, %v1683
      %v1688 = vadd.f32 %v1668, %v1684
      %v1689 = vadd.f32 %v1669, %v1685
      %1691 = vset.pattern.permute.xlu0 0
      %1692 = vperm.xlu0 %1691, %v1529
      %v1693 = vpop.permute.xlu0 %1692
      %v1695 = vadd.f32 %v1686, %v1693
      %v1696 = vadd.f32 %v1687, %v1693
      %v1697 = vadd.f32 %v1688, %v1693
      %v1698 = vadd.f32 %v1689, %v1693
      %1699 = vst [vmem:[#allocation2 + $0xa0] sm:$0xff] %v1695
      %1700 = vst [vmem:[#allocation2 + $0xa8] sm:$0xff] %v1696
      %1701 = vst [vmem:[#allocation2 + $0xb0] sm:$0xff] %v1697
      %1702 = vst [vmem:[#allocation2 + $0xb8] sm:$0xff] %v1698
      %v1703 = vld [vmem:[#allocation2] sm:$0xff]
      %v1704 = vld [vmem:[#allocation2 + $0x8] sm:$0xff]
      %v1705 = vld [vmem:[#allocation2 + $0x10] sm:$0xff]
      %v1706 = vld [vmem:[#allocation2 + $0x18] sm:$0xff]
      %v1707 = vld [vmem:[#allocation2 + $0x20] sm:$0xff]
      %v1708 = vld [vmem:[#allocation2 + $0x28] sm:$0xff]
      %v1709 = vld [vmem:[#allocation2 + $0x30] sm:$0xff]
      %v1710 = vld [vmem:[#allocation2 + $0x38] sm:$0xff]
      %v1711 = vld [vmem:[#allocation2 + $0x40] sm:$0xff]
      %v1712 = vld [vmem:[#allocation2 + $0x48] sm:$0xff]
      %v1713 = vld [vmem:[#allocation2 + $0x50] sm:$0xff]
      %v1714 = vld [vmem:[#allocation2 + $0x58] sm:$0xff]
      %v1715 = vld [vmem:[#allocation2 + $0x60] sm:$0xff]
      %v1716 = vld [vmem:[#allocation2 + $0x68] sm:$0xff]
      %v1717 = vld [vmem:[#allocation2 + $0x70] sm:$0xff]
      %v1718 = vld [vmem:[#allocation2 + $0x78] sm:$0xff]
      %v1719 = vld [vmem:[#allocation2 + $0x80] sm:$0xff]
      %v1720 = vld [vmem:[#allocation2 + $0x88] sm:$0xff]
      %v1721 = vld [vmem:[#allocation2 + $0x90] sm:$0xff]
      %v1722 = vld [vmem:[#allocation2 + $0x98] sm:$0xff]
      %v1723 = vld [vmem:[#allocation2 + $0xa0] sm:$0xff]
      %v1724 = vld [vmem:[#allocation2 + $0xa8] sm:$0xff]
      %v1725 = vld [vmem:[#allocation2 + $0xb0] sm:$0xff]
      %v1726 = vld [vmem:[#allocation2 + $0xb8] sm:$0xff]
      %s1727 = smul.u32 %s624, 48
      %s1728 = scalar_lea.vmem %s14, %s1727
      %v1729 = vld [vmem:[%s1728] sm:$0xff]
      %v1730 = vld [vmem:[%s1728 + $0x8] sm:$0xff]
      %v1731 = vld [vmem:[%s1728 + $0x10] sm:$0xff]
      %v1732 = vld [vmem:[%s1728 + $0x18] sm:$0xff]
      %v1733 = vld [vmem:[%s1728 + $0x20] sm:$0xff]
      %v1734 = vld [vmem:[%s1728 + $0x28] sm:$0xff]
      %s1735 = scalar_lea.vmem %s15, %s1727
      %v1736 = vld [vmem:[%s1735] sm:$0xff]
      %v1737 = vld [vmem:[%s1735 + $0x8] sm:$0xff]
      %v1738 = vld [vmem:[%s1735 + $0x10] sm:$0xff]
      %v1739 = vld [vmem:[%s1735 + $0x18] sm:$0xff]
      %v1740 = vld [vmem:[%s1735 + $0x20] sm:$0xff]
      %v1741 = vld [vmem:[%s1735 + $0x28] sm:$0xff]
      %1743 = vset.pattern.permute.xlu0 0
      %1744 = vperm.xlu0 %1743, %v1729
      %v1745 = vpop.permute.xlu0 %1744
      %1748 = vset.pattern.permute.xlu0 0
      %1749 = vperm.xlu0 %1748, %v1730
      %v1750 = vpop.permute.xlu0 %1749
      %1753 = vset.pattern.permute.xlu0 0
      %1754 = vperm.xlu0 %1753, %v1731
      %v1755 = vpop.permute.xlu0 %1754
      %1758 = vset.pattern.permute.xlu0 0
      %1759 = vperm.xlu0 %1758, %v1732
      %v1760 = vpop.permute.xlu0 %1759
      %1763 = vset.pattern.permute.xlu0 0
      %1764 = vperm.xlu0 %1763, %v1733
      %v1765 = vpop.permute.xlu0 %1764
      %1768 = vset.pattern.permute.xlu0 0
      %1769 = vperm.xlu0 %1768, %v1734
      %v1770 = vpop.permute.xlu0 %1769
      %v1772 = vmul.f32 %v1703, %v1745
      %v1773 = vmul.f32 %v1704, %v1745
      %v1774 = vmul.f32 %v1705, %v1745
      %v1775 = vmul.f32 %v1706, %v1745
      %v1776 = vmul.f32 %v1707, %v1750
      %v1777 = vmul.f32 %v1708, %v1750
      %v1778 = vmul.f32 %v1709, %v1750
      %v1779 = vmul.f32 %v1710, %v1750
      %v1780 = vmul.f32 %v1711, %v1755
      %v1781 = vmul.f32 %v1712, %v1755
      %v1782 = vmul.f32 %v1713, %v1755
      %v1783 = vmul.f32 %v1714, %v1755
      %v1784 = vmul.f32 %v1715, %v1760
      %v1785 = vmul.f32 %v1716, %v1760
      %v1786 = vmul.f32 %v1717, %v1760
      %v1787 = vmul.f32 %v1718, %v1760
      %v1788 = vmul.f32 %v1719, %v1765
      %v1789 = vmul.f32 %v1720, %v1765
      %v1790 = vmul.f32 %v1721, %v1765
      %v1791 = vmul.f32 %v1722, %v1765
      %v1792 = vmul.f32 %v1723, %v1770
      %v1793 = vmul.f32 %v1724, %v1770
      %v1794 = vmul.f32 %v1725, %v1770
      %v1795 = vmul.f32 %v1726, %v1770
      %1797 = vset.pattern.permute.xlu0 0
      %1798 = vperm.xlu0 %1797, %v1736
      %v1799 = vpop.permute.xlu0 %1798
      %1802 = vset.pattern.permute.xlu0 0
      %1803 = vperm.xlu0 %1802, %v1737
      %v1804 = vpop.permute.xlu0 %1803
      %1807 = vset.pattern.permute.xlu0 0
      %1808 = vperm.xlu0 %1807, %v1738
      %v1809 = vpop.permute.xlu0 %1808
      %1812 = vset.pattern.permute.xlu0 0
      %1813 = vperm.xlu0 %1812, %v1739
      %v1814 = vpop.permute.xlu0 %1813
      %1817 = vset.pattern.permute.xlu0 0
      %1818 = vperm.xlu0 %1817, %v1740
      %v1819 = vpop.permute.xlu0 %1818
      %1822 = vset.pattern.permute.xlu0 0
      %1823 = vperm.xlu0 %1822, %v1741
      %v1824 = vpop.permute.xlu0 %1823
      %v1826 = vadd.f32 %v1772, %v1799
      %v1827 = vadd.f32 %v1773, %v1799
      %v1828 = vadd.f32 %v1774, %v1799
      %v1829 = vadd.f32 %v1775, %v1799
      %v1830 = vadd.f32 %v1776, %v1804
      %v1831 = vadd.f32 %v1777, %v1804
      %v1832 = vadd.f32 %v1778, %v1804
      %v1833 = vadd.f32 %v1779, %v1804
      %v1834 = vadd.f32 %v1780, %v1809
      %v1835 = vadd.f32 %v1781, %v1809
      %v1836 = vadd.f32 %v1782, %v1809
      %v1837 = vadd.f32 %v1783, %v1809
      %v1838 = vadd.f32 %v1784, %v1814
      %v1839 = vadd.f32 %v1785, %v1814
      %v1840 = vadd.f32 %v1786, %v1814
      %v1841 = vadd.f32 %v1787, %v1814
      %v1842 = vadd.f32 %v1788, %v1819
      %v1843 = vadd.f32 %v1789, %v1819
      %v1844 = vadd.f32 %v1790, %v1819
      %v1845 = vadd.f32 %v1791, %v1819
      %v1846 = vadd.f32 %v1792, %v1824
      %v1847 = vadd.f32 %v1793, %v1824
      %v1848 = vadd.f32 %v1794, %v1824
      %v1849 = vadd.f32 %v1795, %v1824
      %v1850 = vmul.f32 %v1826, 0.01
      %v1851 = vmul.f32 %v1827, 0.01
      %v1852 = vmul.f32 %v1828, 0.01
      %v1853 = vmul.f32 %v1829, 0.01
      %v1854 = vmul.f32 %v1830, 0.01
      %v1855 = vmul.f32 %v1831, 0.01
      %v1856 = vmul.f32 %v1832, 0.01
      %v1857 = vmul.f32 %v1833, 0.01
      %v1858 = vmul.f32 %v1834, 0.01
      %v1859 = vmul.f32 %v1835, 0.01
      %v1860 = vmul.f32 %v1836, 0.01
      %v1861 = vmul.f32 %v1837, 0.01
      %v1862 = vmul.f32 %v1838, 0.01
      %v1863 = vmul.f32 %v1839, 0.01
      %v1864 = vmul.f32 %v1840, 0.01
      %v1865 = vmul.f32 %v1841, 0.01
      %v1866 = vmul.f32 %v1842, 0.01
      %v1867 = vmul.f32 %v1843, 0.01
      %v1868 = vmul.f32 %v1844, 0.01
      %v1869 = vmul.f32 %v1845, 0.01
      %v1870 = vmul.f32 %v1846, 0.01
      %v1871 = vmul.f32 %v1847, 0.01
      %v1872 = vmul.f32 %v1848, 0.01
      %v1873 = vmul.f32 %v1849, 0.01
      %v1874 = vmax.f32 %v1826, %v1850
      %v1875 = vmax.f32 %v1827, %v1851
      %v1876 = vmax.f32 %v1828, %v1852
      %v1877 = vmax.f32 %v1829, %v1853
      %v1878 = vmax.f32 %v1830, %v1854
      %v1879 = vmax.f32 %v1831, %v1855
      %v1880 = vmax.f32 %v1832, %v1856
      %v1881 = vmax.f32 %v1833, %v1857
      %v1882 = vmax.f32 %v1834, %v1858
      %v1883 = vmax.f32 %v1835, %v1859
      %v1884 = vmax.f32 %v1836, %v1860
      %v1885 = vmax.f32 %v1837, %v1861
      %v1886 = vmax.f32 %v1838, %v1862
      %v1887 = vmax.f32 %v1839, %v1863
      %v1888 = vmax.f32 %v1840, %v1864
      %v1889 = vmax.f32 %v1841, %v1865
      %v1890 = vmax.f32 %v1842, %v1866
      %v1891 = vmax.f32 %v1843, %v1867
      %v1892 = vmax.f32 %v1844, %v1868
      %v1893 = vmax.f32 %v1845, %v1869
      %v1894 = vmax.f32 %v1846, %v1870
      %v1895 = vmax.f32 %v1847, %v1871
      %v1896 = vmax.f32 %v1848, %v1872
      %v1897 = vmax.f32 %v1849, %v1873
      %s1898 = smul.addr %s760, 4
      %s1899 = scalar_lea.vmem %s16, %s1898
      %v1900 = vld [vmem:[%s1899] sm:$0xf]
      %v1901 = vld [vmem:[%s1899 + $0x4] sm:$0xf]
      %v1902 = vld [vmem:[%s1899 + $0x8] sm:$0xf]
      %v1903 = vld [vmem:[%s1899 + $0xc] sm:$0xf]
      %v1904 = vld [vmem:[%s1899 + $0x10] sm:$0xf]
      %v1905 = vld [vmem:[%s1899 + $0x14] sm:$0xf]
      %v1906 = vld [vmem:[%s1899 + $0x18] sm:$0xf]
      %v1907 = vld [vmem:[%s1899 + $0x1c] sm:$0xf]
      %v1908 = vld [vmem:[%s1899 + $0x20] sm:$0xf]
      %v1909 = vpack.c.bf16 %v1878, %v1874
      %v1910 = vpack.c.bf16 %v1879, %v1875
      %v1911 = vpack.c.bf16 %v1880, %v1876
      %v1912 = vpack.c.bf16 %v1881, %v1877
      %v1913 = vpack.c.bf16 %v1886, %v1882
      %v1914 = vpack.c.bf16 %v1887, %v1883
      %v1915 = vpack.c.bf16 %v1888, %v1884
      %v1916 = vpack.c.bf16 %v1889, %v1885
      %v1917 = vpack.c.bf16 %v1894, %v1890
      %v1918 = vpack.c.bf16 %v1895, %v1891
      %v1919 = vpack.c.bf16 %v1896, %v1892
      %v1920 = vpack.c.bf16 %v1897, %v1893
      %v1930 = vunpack.c.l.b16 %v1900
      %v1931 = vunpack.c.l.b16 %v1901
      %v1932 = vunpack.c.l.b16 %v1902
      %v1933 = vunpack.c.l.b16 %v1903
      %v1934 = vunpack.c.l.b16 %v1904
      %v1935 = vunpack.c.l.b16 %v1905
      %v1936 = vunpack.c.l.b16 %v1906
      %v1937 = vunpack.c.l.b16 %v1907
      %v1938 = vunpack.c.l.b16 %v1908
      %v1939 = vpack.c.b16 %v1931, %v1930
      %v1940 = vpack.c.b16 %v1933, %v1932
      %v1941 = vpack.c.b16 %v1935, %v1934
      %v1942 = vpack.c.b16 %v1937, %v1936
      %v1943 = vpack.c.b16 %v1938, %v1938
      %vm1944 = vcmask 392192
      %v1946 = vsel %vm1944, %v1939, 0
      %v1949 = vsel %vm1944, %v1940, 0
      %v1952 = vsel %vm1944, %v1941, 0
      %v1955 = vsel %vm1944, %v1942, 0
      %v1958 = vsel %vm1944, %v1943, 0
      %1960 = vmatpush.bf16.msra.mxu0 0
      %1961 = vmatpush.bf16.msra.mxu0 0
      %1962 = vmatpush.bf16.msra.mxu0 0
      %1963 = vmatpush.bf16.msra.mxu0 0
      %1964 = vmatpush.bf16.msra.mxu0 0
      %1965 = vmatpush.bf16.msra.mxu0 %v1917
      %1966 = vmatpush.bf16.msra.mxu0 %v1913
      %1967 = vmatpush.bf16.msra.mxu0 %v1909
      %1968 = vmatmul.bf16.gmra.mxu0 %v1946
      %v1969 = vpop.f32.mrf.mxu0
      %v1970 = vadd.f32 0.0, %v1969
      %v1971 = vpop.f32.mrf.mxu0
      %v1972 = vadd.f32 0.0, %v1971
      %1973 = vmatmul.bf16.gmra.mxu0 %v1949
      %v1974 = vpop.f32.mrf.mxu0
      %v1975 = vadd.f32 0.0, %v1974
      %v1976 = vpop.f32.mrf.mxu0
      %v1977 = vadd.f32 0.0, %v1976
      %1978 = vmatmul.bf16.gmra.mxu0 %v1952
      %v1979 = vpop.f32.mrf.mxu0
      %v1980 = vadd.f32 0.0, %v1979
      %v1981 = vpop.f32.mrf.mxu0
      %v1982 = vadd.f32 0.0, %v1981
      %1983 = vmatmul.bf16.gmra.mxu0 %v1955
      %v1984 = vpop.f32.mrf.mxu0
      %v1985 = vadd.f32 0.0, %v1984
      %v1986 = vpop.f32.mrf.mxu0
      %v1987 = vadd.f32 0.0, %v1986
      %1988 = vmatmul.bf16.gmra.mxu0 %v1958
      %v1989 = vpop.f32.mrf.mxu0
      %v1990 = vadd.f32 0.0, %v1989
      %v1991 = vpop.f32.mrf.mxu0
      %1992 = vdwg.mxu0
      %1993 = vmatpush.bf16.msra.mxu0 0
      %1994 = vmatpush.bf16.msra.mxu0 0
      %1995 = vmatpush.bf16.msra.mxu0 0
      %1996 = vmatpush.bf16.msra.mxu0 0
      %1997 = vmatpush.bf16.msra.mxu0 0
      %1998 = vmatpush.bf16.msra.mxu0 %v1918
      %1999 = vmatpush.bf16.msra.mxu0 %v1914
      %2000 = vmatpush.bf16.msra.mxu0 %v1910
      %2001 = vmatmul.bf16.gmra.mxu0 %v1946
      %v2002 = vpop.f32.mrf.mxu0
      %v2003 = vadd.f32 0.0, %v2002
      %v2004 = vpop.f32.mrf.mxu0
      %v2005 = vadd.f32 0.0, %v2004
      %2006 = vmatmul.bf16.gmra.mxu0 %v1949
      %v2007 = vpop.f32.mrf.mxu0
      %v2008 = vadd.f32 0.0, %v2007
      %v2009 = vpop.f32.mrf.mxu0
      %v2010 = vadd.f32 0.0, %v2009
      %2011 = vmatmul.bf16.gmra.mxu0 %v1952
      %v2012 = vpop.f32.mrf.mxu0
      %v2013 = vadd.f32 0.0, %v2012
      %v2014 = vpop.f32.mrf.mxu0
      %v2015 = vadd.f32 0.0, %v2014
      %2016 = vmatmul.bf16.gmra.mxu0 %v1955
      %v2017 = vpop.f32.mrf.mxu0
      %v2018 = vadd.f32 0.0, %v2017
      %v2019 = vpop.f32.mrf.mxu0
      %v2020 = vadd.f32 0.0, %v2019
      %2021 = vmatmul.bf16.gmra.mxu0 %v1958
      %v2022 = vpop.f32.mrf.mxu0
      %v2023 = vadd.f32 0.0, %v2022
      %v2024 = vpop.f32.mrf.mxu0
      %2025 = vdwg.mxu0
      %2026 = vmatpush.bf16.msra.mxu0 0
      %2027 = vmatpush.bf16.msra.mxu0 0
      %2028 = vmatpush.bf16.msra.mxu0 0
      %2029 = vmatpush.bf16.msra.mxu0 0
      %2030 = vmatpush.bf16.msra.mxu0 0
      %2031 = vmatpush.bf16.msra.mxu0 %v1919
      %2032 = vmatpush.bf16.msra.mxu0 %v1915
      %2033 = vmatpush.bf16.msra.mxu0 %v1911
      %2034 = vmatmul.bf16.gmra.mxu0 %v1946
      %v2035 = vpop.f32.mrf.mxu0
      %v2036 = vadd.f32 0.0, %v2035
      %v2037 = vpop.f32.mrf.mxu0
      %v2038 = vadd.f32 0.0, %v2037
      %2039 = vmatmul.bf16.gmra.mxu0 %v1949
      %v2040 = vpop.f32.mrf.mxu0
      %v2041 = vadd.f32 0.0, %v2040
      %v2042 = vpop.f32.mrf.mxu0
      %v2043 = vadd.f32 0.0, %v2042
      %2044 = vmatmul.bf16.gmra.mxu0 %v1952
      %v2045 = vpop.f32.mrf.mxu0
      %v2046 = vadd.f32 0.0, %v2045
      %v2047 = vpop.f32.mrf.mxu0
      %v2048 = vadd.f32 0.0, %v2047
      %2049 = vmatmul.bf16.gmra.mxu0 %v1955
      %v2050 = vpop.f32.mrf.mxu0
      %v2051 = vadd.f32 0.0, %v2050
      %v2052 = vpop.f32.mrf.mxu0
      %v2053 = vadd.f32 0.0, %v2052
      %2054 = vmatmul.bf16.gmra.mxu0 %v1958
      %v2055 = vpop.f32.mrf.mxu0
      %v2056 = vadd.f32 0.0, %v2055
      %v2057 = vpop.f32.mrf.mxu0
      %2058 = vdwg.mxu0
      %2059 = vmatpush.bf16.msra.mxu0 0
      %2060 = vmatpush.bf16.msra.mxu0 0
      %2061 = vmatpush.bf16.msra.mxu0 0
      %2062 = vmatpush.bf16.msra.mxu0 0
      %2063 = vmatpush.bf16.msra.mxu0 0
      %2064 = vmatpush.bf16.msra.mxu0 %v1920
      %2065 = vmatpush.bf16.msra.mxu0 %v1916
      %2066 = vmatpush.bf16.msra.mxu0 %v1912
      %2067 = vmatmul.bf16.gmra.mxu0 %v1946
      %v2068 = vpop.f32.mrf.mxu0
      %v2069 = vadd.f32 0.0, %v2068
      %v2070 = vpop.f32.mrf.mxu0
      %v2071 = vadd.f32 0.0, %v2070
      %2072 = vmatmul.bf16.gmra.mxu0 %v1949
      %v2073 = vpop.f32.mrf.mxu0
      %v2074 = vadd.f32 0.0, %v2073
      %v2075 = vpop.f32.mrf.mxu0
      %v2076 = vadd.f32 0.0, %v2075
      %2077 = vmatmul.bf16.gmra.mxu0 %v1952
      %v2078 = vpop.f32.mrf.mxu0
      %v2079 = vadd.f32 0.0, %v2078
      %v2080 = vpop.f32.mrf.mxu0
      %v2081 = vadd.f32 0.0, %v2080
      %2082 = vmatmul.bf16.gmra.mxu0 %v1955
      %v2083 = vpop.f32.mrf.mxu0
      %v2084 = vadd.f32 0.0, %v2083
      %v2085 = vpop.f32.mrf.mxu0
      %v2086 = vadd.f32 0.0, %v2085
      %2087 = vmatmul.bf16.gmra.mxu0 %v1958
      %v2088 = vpop.f32.mrf.mxu0
      %v2089 = vadd.f32 0.0, %v2088
      %v2090 = vpop.f32.mrf.mxu0
      %2091 = vdwg.mxu0
      %s2092 = scalar_lea.vmem %s17, %s951
      %v2093 = vld [vmem:[%s2092] sm:$0xff]
      %2094 = vrot.lane.b32.xlu0 %v1970, 17
      %v2095 = vpop.permute.xlu0 %2094
      %2096 = vrot.lane.b32.xlu0 %v2003, 17
      %v2097 = vpop.permute.xlu0 %2096
      %2098 = vrot.lane.b32.xlu0 %v2036, 17
      %v2099 = vpop.permute.xlu0 %2098
      %2100 = vrot.lane.b32.xlu0 %v2069, 17
      %v2101 = vpop.permute.xlu0 %2100
      %v2102 = vsel %vm121, %v2099, %v2101
      %v2103 = vsel %vm121, %v2097, %v2099
      %v2104 = vsel %vm121, %v2095, %v2097
      %v2105 = vsel %vm121, %v2101, %v2095
      %v2106 = vmul.f32 %v966, %v2105
      %v2107 = vmul.f32 %v967, %v2104
      %v2108 = vmul.f32 %v968, %v2103
      %v2109 = vmul.f32 %v969, %v2102
      %v2110 = vadd.f32 %v1980, %v2106
      %v2111 = vadd.f32 %v2013, %v2107
      %v2112 = vadd.f32 %v2046, %v2108
      %v2113 = vadd.f32 %v2079, %v2109
      %2114 = vrot.lane.b32.xlu0 %v1972, 16
      %v2115 = vpop.permute.xlu0 %2114
      %2116 = vrot.lane.b32.xlu0 %v2005, 16
      %v2117 = vpop.permute.xlu0 %2116
      %2118 = vrot.lane.b32.xlu0 %v2038, 16
      %v2119 = vpop.permute.xlu0 %2118
      %2120 = vrot.lane.b32.xlu0 %v2071, 16
      %v2121 = vpop.permute.xlu0 %2120
      %v2122 = vsel %vm138, %v2119, %v2121
      %v2123 = vsel %vm138, %v2117, %v2119
      %v2124 = vsel %vm138, %v2115, %v2117
      %v2125 = vsel %vm138, %v2121, %v2115
      %v2126 = vmul.f32 %v990, %v2125
      %v2127 = vmul.f32 %v991, %v2124
      %v2128 = vmul.f32 %v992, %v2123
      %v2129 = vmul.f32 %v993, %v2122
      %v2130 = vadd.f32 %v2110, %v2126
      %v2131 = vadd.f32 %v2111, %v2127
      %v2132 = vadd.f32 %v2112, %v2128
      %v2133 = vadd.f32 %v2113, %v2129
      %2134 = vrot.lane.b32.xlu0 %v1975, 15
      %v2135 = vpop.permute.xlu0 %2134
      %2136 = vrot.lane.b32.xlu0 %v2008, 15
      %v2137 = vpop.permute.xlu0 %2136
      %2138 = vrot.lane.b32.xlu0 %v2041, 15
      %v2139 = vpop.permute.xlu0 %2138
      %2140 = vrot.lane.b32.xlu0 %v2074, 15
      %v2141 = vpop.permute.xlu0 %2140
      %v2142 = vsel %vm167, %v2139, %v2141
      %v2143 = vsel %vm167, %v2137, %v2139
      %v2144 = vsel %vm167, %v2135, %v2137
      %v2145 = vsel %vm167, %v2141, %v2135
      %v2146 = vmul.f32 %v1014, %v2145
      %v2147 = vmul.f32 %v1015, %v2144
      %v2148 = vmul.f32 %v1016, %v2143
      %v2149 = vmul.f32 %v1017, %v2142
      %v2150 = vadd.f32 %v2130, %v2146
      %v2151 = vadd.f32 %v2131, %v2147
      %v2152 = vadd.f32 %v2132, %v2148
      %v2153 = vadd.f32 %v2133, %v2149
      %2154 = vrot.lane.b32.xlu0 %v1977, 1
      %v2155 = vpop.permute.xlu0 %2154
      %2156 = vrot.lane.b32.xlu0 %v2010, 1
      %v2157 = vpop.permute.xlu0 %2156
      %2158 = vrot.lane.b32.xlu0 %v2043, 1
      %v2159 = vpop.permute.xlu0 %2158
      %2160 = vrot.lane.b32.xlu0 %v2076, 1
      %v2161 = vpop.permute.xlu0 %2160
      %v2162 = vsel %vm196, %v2159, %v2161
      %v2163 = vsel %vm196, %v2157, %v2159
      %v2164 = vsel %vm196, %v2155, %v2157
      %v2165 = vsel %vm196, %v2161, %v2155
      %v2166 = vmul.f32 %v1038, %v2165
      %v2167 = vmul.f32 %v1039, %v2164
      %v2168 = vmul.f32 %v1040, %v2163
      %v2169 = vmul.f32 %v1041, %v2162
      %v2170 = vadd.f32 %v2150, %v2166
      %v2171 = vadd.f32 %v2151, %v2167
      %v2172 = vadd.f32 %v2152, %v2168
      %v2173 = vadd.f32 %v2153, %v2169
      %2174 = vrot.lane.b32.xlu0 %v1982, 127
      %v2175 = vpop.permute.xlu0 %2174
      %2176 = vrot.lane.b32.xlu0 %v2015, 127
      %v2177 = vpop.permute.xlu0 %2176
      %2178 = vrot.lane.b32.xlu0 %v2048, 127
      %v2179 = vpop.permute.xlu0 %2178
      %2180 = vrot.lane.b32.xlu0 %v2081, 127
      %v2181 = vpop.permute.xlu0 %2180
      %v2182 = vsel %vm225, %v2179, %v2181
      %v2183 = vsel %vm225, %v2177, %v2179
      %v2184 = vsel %vm225, %v2175, %v2177
      %v2185 = vsel %vm225, %v2181, %v2175
      %v2186 = vmul.f32 %v1062, %v2184
      %v2187 = vmul.f32 %v1063, %v2183
      %v2188 = vmul.f32 %v1064, %v2182
      %v2189 = vmul.f32 %v1065, %v2185
      %v2190 = vadd.f32 %v2170, %v2186
      %v2191 = vadd.f32 %v2171, %v2187
      %v2192 = vadd.f32 %v2172, %v2188
      %v2193 = vadd.f32 %v2173, %v2189
      %2194 = vrot.lane.b32.xlu0 %v1985, 113
      %v2195 = vpop.permute.xlu0 %2194
      %2196 = vrot.lane.b32.xlu0 %v2018, 113
      %v2197 = vpop.permute.xlu0 %2196
      %2198 = vrot.lane.b32.xlu0 %v2051, 113
      %v2199 = vpop.permute.xlu0 %2198
      %2200 = vrot.lane.b32.xlu0 %v2084, 113
      %v2201 = vpop.permute.xlu0 %2200
      %v2202 = vsel %vm254, %v2199, %v2201
      %v2203 = vsel %vm254, %v2197, %v2199
      %v2204 = vsel %vm254, %v2195, %v2197
      %v2205 = vsel %vm254, %v2201, %v2195
      %v2206 = vmul.f32 %v1086, %v2204
      %v2207 = vmul.f32 %v1087, %v2203
      %v2208 = vmul.f32 %v1088, %v2202
      %v2209 = vmul.f32 %v1089, %v2205
      %v2210 = vadd.f32 %v2190, %v2206
      %v2211 = vadd.f32 %v2191, %v2207
      %v2212 = vadd.f32 %v2192, %v2208
      %v2213 = vadd.f32 %v2193, %v2209
      %2214 = vrot.lane.b32.xlu0 %v1987, 112
      %v2215 = vpop.permute.xlu0 %2214
      %2216 = vrot.lane.b32.xlu0 %v2020, 112
      %v2217 = vpop.permute.xlu0 %2216
      %2218 = vrot.lane.b32.xlu0 %v2053, 112
      %v2219 = vpop.permute.xlu0 %2218
      %2220 = vrot.lane.b32.xlu0 %v2086, 112
      %v2221 = vpop.permute.xlu0 %2220
      %v2222 = vsel %vm283, %v2219, %v2221
      %v2223 = vsel %vm283, %v2217, %v2219
      %v2224 = vsel %vm283, %v2215, %v2217
      %v2225 = vsel %vm283, %v2221, %v2215
      %v2226 = vmul.f32 %v1110, %v2224
      %v2227 = vmul.f32 %v1111, %v2223
      %v2228 = vmul.f32 %v1112, %v2222
      %v2229 = vmul.f32 %v1113, %v2225
      %v2230 = vadd.f32 %v2210, %v2226
      %v2231 = vadd.f32 %v2211, %v2227
      %v2232 = vadd.f32 %v2212, %v2228
      %v2233 = vadd.f32 %v2213, %v2229
      %2234 = vrot.lane.b32.xlu0 %v1990, 111
      %v2235 = vpop.permute.xlu0 %2234
      %2236 = vrot.lane.b32.xlu0 %v2023, 111
      %v2237 = vpop.permute.xlu0 %2236
      %2238 = vrot.lane.b32.xlu0 %v2056, 111
      %v2239 = vpop.permute.xlu0 %2238
      %2240 = vrot.lane.b32.xlu0 %v2089, 111
      %v2241 = vpop.permute.xlu0 %2240
      %v2242 = vsel %vm312, %v2239, %v2241
      %v2243 = vsel %vm312, %v2237, %v2239
      %v2244 = vsel %vm312, %v2235, %v2237
      %v2245 = vsel %vm312, %v2241, %v2235
      %v2246 = vmul.f32 %v1134, %v2244
      %v2247 = vmul.f32 %v1135, %v2243
      %v2248 = vmul.f32 %v1136, %v2242
      %v2249 = vmul.f32 %v1137, %v2245
      %v2250 = vadd.f32 %v2230, %v2246
      %v2251 = vadd.f32 %v2231, %v2247
      %v2252 = vadd.f32 %v2232, %v2248
      %v2253 = vadd.f32 %v2233, %v2249
      %2255 = vset.pattern.permute.xlu0 0
      %2256 = vperm.xlu0 %2255, %v2093
      %v2257 = vpop.permute.xlu0 %2256
      %v2259 = vadd.f32 %v2250, %v2257
      %v2260 = vadd.f32 %v2251, %v2257
      %v2261 = vadd.f32 %v2252, %v2257
      %v2262 = vadd.f32 %v2253, %v2257
      %2263 = vst [vmem:[#allocation2 + $0xc0] sm:$0xff] %v2259
      %2264 = vst [vmem:[#allocation2 + $0xc8] sm:$0xff] %v2260
      %2265 = vst [vmem:[#allocation2 + $0xd0] sm:$0xff] %v2261
      %2266 = vst [vmem:[#allocation2 + $0xd8] sm:$0xff] %v2262
      %v2267 = vld [vmem:[#allocation2] sm:$0xff]
      %v2268 = vld [vmem:[#allocation2 + $0x8] sm:$0xff]
      %v2269 = vld [vmem:[#allocation2 + $0x10] sm:$0xff]
      %v2270 = vld [vmem:[#allocation2 + $0x18] sm:$0xff]
      %v2271 = vld [vmem:[#allocation2 + $0x20] sm:$0xff]
      %v2272 = vld [vmem:[#allocation2 + $0x28] sm:$0xff]
      %v2273 = vld [vmem:[#allocation2 + $0x30] sm:$0xff]
      %v2274 = vld [vmem:[#allocation2 + $0x38] sm:$0xff]
      %v2275 = vld [vmem:[#allocation2 + $0x40] sm:$0xff]
      %v2276 = vld [vmem:[#allocation2 + $0x48] sm:$0xff]
      %v2277 = vld [vmem:[#allocation2 + $0x50] sm:$0xff]
      %v2278 = vld [vmem:[#allocation2 + $0x58] sm:$0xff]
      %v2279 = vld [vmem:[#allocation2 + $0x60] sm:$0xff]
      %v2280 = vld [vmem:[#allocation2 + $0x68] sm:$0xff]
      %v2281 = vld [vmem:[#allocation2 + $0x70] sm:$0xff]
      %v2282 = vld [vmem:[#allocation2 + $0x78] sm:$0xff]
      %v2283 = vld [vmem:[#allocation2 + $0x80] sm:$0xff]
      %v2284 = vld [vmem:[#allocation2 + $0x88] sm:$0xff]
      %v2285 = vld [vmem:[#allocation2 + $0x90] sm:$0xff]
      %v2286 = vld [vmem:[#allocation2 + $0x98] sm:$0xff]
      %v2287 = vld [vmem:[#allocation2 + $0xa0] sm:$0xff]
      %v2288 = vld [vmem:[#allocation2 + $0xa8] sm:$0xff]
      %v2289 = vld [vmem:[#allocation2 + $0xb0] sm:$0xff]
      %v2290 = vld [vmem:[#allocation2 + $0xb8] sm:$0xff]
      %v2291 = vld [vmem:[#allocation2 + $0xc0] sm:$0xff]
      %v2292 = vld [vmem:[#allocation2 + $0xc8] sm:$0xff]
      %v2293 = vld [vmem:[#allocation2 + $0xd0] sm:$0xff]
      %v2294 = vld [vmem:[#allocation2 + $0xd8] sm:$0xff]
      %s2295 = smul.u32 %s624, 56
      %s2296 = scalar_lea.vmem %s18, %s2295
      %v2297 = vld [vmem:[%s2296] sm:$0xff]
      %v2298 = vld [vmem:[%s2296 + $0x8] sm:$0xff]
      %v2299 = vld [vmem:[%s2296 + $0x10] sm:$0xff]
      %v2300 = vld [vmem:[%s2296 + $0x18] sm:$0xff]
      %v2301 = vld [vmem:[%s2296 + $0x20] sm:$0xff]
      %v2302 = vld [vmem:[%s2296 + $0x28] sm:$0xff]
      %v2303 = vld [vmem:[%s2296 + $0x30] sm:$0xff]
      %s2304 = scalar_lea.vmem %s19, %s2295
      %v2305 = vld [vmem:[%s2304] sm:$0xff]
      %v2306 = vld [vmem:[%s2304 + $0x8] sm:$0xff]
      %v2307 = vld [vmem:[%s2304 + $0x10] sm:$0xff]
      %v2308 = vld [vmem:[%s2304 + $0x18] sm:$0xff]
      %v2309 = vld [vmem:[%s2304 + $0x20] sm:$0xff]
      %v2310 = vld [vmem:[%s2304 + $0x28] sm:$0xff]
      %v2311 = vld [vmem:[%s2304 + $0x30] sm:$0xff]
      %2313 = vset.pattern.permute.xlu0 0
      %2314 = vperm.xlu0 %2313, %v2297
      %v2315 = vpop.permute.xlu0 %2314
      %2318 = vset.pattern.permute.xlu0 0
      %2319 = vperm.xlu0 %2318, %v2298
      %v2320 = vpop.permute.xlu0 %2319
      %2323 = vset.pattern.permute.xlu0 0
      %2324 = vperm.xlu0 %2323, %v2299
      %v2325 = vpop.permute.xlu0 %2324
      %2328 = vset.pattern.permute.xlu0 0
      %2329 = vperm.xlu0 %2328, %v2300
      %v2330 = vpop.permute.xlu0 %2329
      %2333 = vset.pattern.permute.xlu0 0
      %2334 = vperm.xlu0 %2333, %v2301
      %v2335 = vpop.permute.xlu0 %2334
      %2338 = vset.pattern.permute.xlu0 0
      %2339 = vperm.xlu0 %2338, %v2302
      %v2340 = vpop.permute.xlu0 %2339
      %2343 = vset.pattern.permute.xlu0 0
      %2344 = vperm.xlu0 %2343, %v2303
      %v2345 = vpop.permute.xlu0 %2344
      %v2347 = vmul.f32 %v2267, %v2315
      %v2348 = vmul.f32 %v2268, %v2315
      %v2349 = vmul.f32 %v2269, %v2315
      %v2350 = vmul.f32 %v2270, %v2315
      %v2351 = vmul.f32 %v2271, %v2320
      %v2352 = vmul.f32 %v2272, %v2320
      %v2353 = vmul.f32 %v2273, %v2320
      %v2354 = vmul.f32 %v2274, %v2320
      %v2355 = vmul.f32 %v2275, %v2325
      %v2356 = vmul.f32 %v2276, %v2325
      %v2357 = vmul.f32 %v2277, %v2325
      %v2358 = vmul.f32 %v2278, %v2325
      %v2359 = vmul.f32 %v2279, %v2330
      %v2360 = vmul.f32 %v2280, %v2330
      %v2361 = vmul.f32 %v2281, %v2330
      %v2362 = vmul.f32 %v2282, %v2330
      %v2363 = vmul.f32 %v2283, %v2335
      %v2364 = vmul.f32 %v2284, %v2335
      %v2365 = vmul.f32 %v2285, %v2335
      %v2366 = vmul.f32 %v2286, %v2335
      %v2367 = vmul.f32 %v2287, %v2340
      %v2368 = vmul.f32 %v2288, %v2340
      %v2369 = vmul.f32 %v2289, %v2340
      %v2370 = vmul.f32 %v2290, %v2340
      %v2371 = vmul.f32 %v2291, %v2345
      %v2372 = vmul.f32 %v2292, %v2345
      %v2373 = vmul.f32 %v2293, %v2345
      %v2374 = vmul.f32 %v2294, %v2345
      %2376 = vset.pattern.permute.xlu0 0
      %2377 = vperm.xlu0 %2376, %v2305
      %v2378 = vpop.permute.xlu0 %2377
      %2381 = vset.pattern.permute.xlu0 0
      %2382 = vperm.xlu0 %2381, %v2306
      %v2383 = vpop.permute.xlu0 %2382
      %2386 = vset.pattern.permute.xlu0 0
      %2387 = vperm.xlu0 %2386, %v2307
      %v2388 = vpop.permute.xlu0 %2387
      %2391 = vset.pattern.permute.xlu0 0
      %2392 = vperm.xlu0 %2391, %v2308
      %v2393 = vpop.permute.xlu0 %2392
      %2396 = vset.pattern.permute.xlu0 0
      %2397 = vperm.xlu0 %2396, %v2309
      %v2398 = vpop.permute.xlu0 %2397
      %2401 = vset.pattern.permute.xlu0 0
      %2402 = vperm.xlu0 %2401, %v2310
      %v2403 = vpop.permute.xlu0 %2402
      %2406 = vset.pattern.permute.xlu0 0
      %2407 = vperm.xlu0 %2406, %v2311
      %v2408 = vpop.permute.xlu0 %2407
      %v2410 = vadd.f32 %v2347, %v2378
      %v2411 = vadd.f32 %v2348, %v2378
      %v2412 = vadd.f32 %v2349, %v2378
      %v2413 = vadd.f32 %v2350, %v2378
      %v2414 = vadd.f32 %v2351, %v2383
      %v2415 = vadd.f32 %v2352, %v2383
      %v2416 = vadd.f32 %v2353, %v2383
      %v2417 = vadd.f32 %v2354, %v2383
      %v2418 = vadd.f32 %v2355, %v2388
      %v2419 = vadd.f32 %v2356, %v2388
      %v2420 = vadd.f32 %v2357, %v2388
      %v2421 = vadd.f32 %v2358, %v2388
      %v2422 = vadd.f32 %v2359, %v2393
      %v2423 = vadd.f32 %v2360, %v2393
      %v2424 = vadd.f32 %v2361, %v2393
      %v2425 = vadd.f32 %v2362, %v2393
      %v2426 = vadd.f32 %v2363, %v2398
      %v2427 = vadd.f32 %v2364, %v2398
      %v2428 = vadd.f32 %v2365, %v2398
      %v2429 = vadd.f32 %v2366, %v2398
      %v2430 = vadd.f32 %v2367, %v2403
      %v2431 = vadd.f32 %v2368, %v2403
      %v2432 = vadd.f32 %v2369, %v2403
      %v2433 = vadd.f32 %v2370, %v2403
      %v2434 = vadd.f32 %v2371, %v2408
      %v2435 = vadd.f32 %v2372, %v2408
      %v2436 = vadd.f32 %v2373, %v2408
      %v2437 = vadd.f32 %v2374, %v2408
      %v2438 = vmul.f32 %v2410, 0.01
      %v2439 = vmul.f32 %v2411, 0.01
      %v2440 = vmul.f32 %v2412, 0.01
      %v2441 = vmul.f32 %v2413, 0.01
      %v2442 = vmul.f32 %v2414, 0.01
      %v2443 = vmul.f32 %v2415, 0.01
      %v2444 = vmul.f32 %v2416, 0.01
      %v2445 = vmul.f32 %v2417, 0.01
      %v2446 = vmul.f32 %v2418, 0.01
      %v2447 = vmul.f32 %v2419, 0.01
      %v2448 = vmul.f32 %v2420, 0.01
      %v2449 = vmul.f32 %v2421, 0.01
      %v2450 = vmul.f32 %v2422, 0.01
      %v2451 = vmul.f32 %v2423, 0.01
      %v2452 = vmul.f32 %v2424, 0.01
      %v2453 = vmul.f32 %v2425, 0.01
      %v2454 = vmul.f32 %v2426, 0.01
      %v2455 = vmul.f32 %v2427, 0.01
      %v2456 = vmul.f32 %v2428, 0.01
      %v2457 = vmul.f32 %v2429, 0.01
      %v2458 = vmul.f32 %v2430, 0.01
      %v2459 = vmul.f32 %v2431, 0.01
      %v2460 = vmul.f32 %v2432, 0.01
      %v2461 = vmul.f32 %v2433, 0.01
      %v2462 = vmul.f32 %v2434, 0.01
      %v2463 = vmul.f32 %v2435, 0.01
      %v2464 = vmul.f32 %v2436, 0.01
      %v2465 = vmul.f32 %v2437, 0.01
      %v2466 = vmax.f32 %v2410, %v2438
      %v2467 = vmax.f32 %v2411, %v2439
      %v2468 = vmax.f32 %v2412, %v2440
      %v2469 = vmax.f32 %v2413, %v2441
      %v2470 = vmax.f32 %v2414, %v2442
      %v2471 = vmax.f32 %v2415, %v2443
      %v2472 = vmax.f32 %v2416, %v2444
      %v2473 = vmax.f32 %v2417, %v2445
      %v2474 = vmax.f32 %v2418, %v2446
      %v2475 = vmax.f32 %v2419, %v2447
      %v2476 = vmax.f32 %v2420, %v2448
      %v2477 = vmax.f32 %v2421, %v2449
      %v2478 = vmax.f32 %v2422, %v2450
      %v2479 = vmax.f32 %v2423, %v2451
      %v2480 = vmax.f32 %v2424, %v2452
      %v2481 = vmax.f32 %v2425, %v2453
      %v2482 = vmax.f32 %v2426, %v2454
      %v2483 = vmax.f32 %v2427, %v2455
      %v2484 = vmax.f32 %v2428, %v2456
      %v2485 = vmax.f32 %v2429, %v2457
      %v2486 = vmax.f32 %v2430, %v2458
      %v2487 = vmax.f32 %v2431, %v2459
      %v2488 = vmax.f32 %v2432, %v2460
      %v2489 = vmax.f32 %v2433, %v2461
      %v2490 = vmax.f32 %v2434, %v2462
      %v2491 = vmax.f32 %v2435, %v2463
      %v2492 = vmax.f32 %v2436, %v2464
      %v2493 = vmax.f32 %v2437, %v2465
      %s2494 = smul.addr %s760, 4
      %s2495 = scalar_lea.vmem %s20, %s2494
      %v2496 = vld [vmem:[%s2495] sm:$0xf]
      %v2497 = vld [vmem:[%s2495 + $0x4] sm:$0xf]
      %v2498 = vld [vmem:[%s2495 + $0x8] sm:$0xf]
      %v2499 = vld [vmem:[%s2495 + $0xc] sm:$0xf]
      %v2500 = vld [vmem:[%s2495 + $0x10] sm:$0xf]
      %v2501 = vld [vmem:[%s2495 + $0x14] sm:$0xf]
      %v2502 = vld [vmem:[%s2495 + $0x18] sm:$0xf]
      %v2503 = vld [vmem:[%s2495 + $0x1c] sm:$0xf]
      %v2504 = vld [vmem:[%s2495 + $0x20] sm:$0xf]
      %v2505 = vpack.c.bf16 %v2470, %v2466
      %v2506 = vpack.c.bf16 %v2471, %v2467
      %v2507 = vpack.c.bf16 %v2472, %v2468
      %v2508 = vpack.c.bf16 %v2473, %v2469
      %v2509 = vpack.c.bf16 %v2478, %v2474
      %v2510 = vpack.c.bf16 %v2479, %v2475
      %v2511 = vpack.c.bf16 %v2480, %v2476
      %v2512 = vpack.c.bf16 %v2481, %v2477
      %v2513 = vpack.c.bf16 %v2486, %v2482
      %v2514 = vpack.c.bf16 %v2487, %v2483
      %v2515 = vpack.c.bf16 %v2488, %v2484
      %v2516 = vpack.c.bf16 %v2489, %v2485
      %v2517 = vpack.c.bf16 %v2490, %v2490
      %v2518 = vpack.c.bf16 %v2491, %v2491
      %v2519 = vpack.c.bf16 %v2492, %v2492
      %v2520 = vpack.c.bf16 %v2493, %v2493
      %v2530 = vunpack.c.l.b16 %v2496
      %v2531 = vunpack.c.l.b16 %v2497
      %v2532 = vunpack.c.l.b16 %v2498
      %v2533 = vunpack.c.l.b16 %v2499
      %v2534 = vunpack.c.l.b16 %v2500
      %v2535 = vunpack.c.l.b16 %v2501
      %v2536 = vunpack.c.l.b16 %v2502
      %v2537 = vunpack.c.l.b16 %v2503
      %v2538 = vunpack.c.l.b16 %v2504
      %v2539 = vpack.c.b16 %v2531, %v2530
      %v2540 = vpack.c.b16 %v2533, %v2532
      %v2541 = vpack.c.b16 %v2535, %v2534
      %v2542 = vpack.c.b16 %v2537, %v2536
      %v2543 = vpack.c.b16 %v2538, %v2538
      %vm2544 = vcmask 457728
      %v2546 = vsel %vm2544, %v2539, 0
      %v2549 = vsel %vm2544, %v2540, 0
      %v2552 = vsel %vm2544, %v2541, 0
      %v2555 = vsel %vm2544, %v2542, 0
      %v2558 = vsel %vm2544, %v2543, 0
      %v2561 = vsel %vm336, %v2517, 0
      %v2564 = vsel %vm336, %v2518, 0
      %v2567 = vsel %vm336, %v2519, 0
      %v2570 = vsel %vm336, %v2520, 0
      %2572 = vmatpush.bf16.msra.mxu0 0
      %2573 = vmatpush.bf16.msra.mxu0 0
      %2574 = vmatpush.bf16.msra.mxu0 0
      %2575 = vmatpush.bf16.msra.mxu0 0
      %2576 = vmatpush.bf16.msra.mxu0 %v2561
      %2577 = vmatpush.bf16.msra.mxu0 %v2513
      %2578 = vmatpush.bf16.msra.mxu0 %v2509
      %2579 = vmatpush.bf16.msra.mxu0 %v2505
      %2580 = vmatmul.bf16.gmra.mxu0 %v2546
      %v2581 = vpop.f32.mrf.mxu0
      %v2582 = vadd.f32 0.0, %v2581
      %v2583 = vpop.f32.mrf.mxu0
      %v2584 = vadd.f32 0.0, %v2583
      %2585 = vmatmul.bf16.gmra.mxu0 %v2549
      %v2586 = vpop.f32.mrf.mxu0
      %v2587 = vadd.f32 0.0, %v2586
      %v2588 = vpop.f32.mrf.mxu0
      %v2589 = vadd.f32 0.0, %v2588
      %2590 = vmatmul.bf16.gmra.mxu0 %v2552
      %v2591 = vpop.f32.mrf.mxu0
      %v2592 = vadd.f32 0.0, %v2591
      %v2593 = vpop.f32.mrf.mxu0
      %v2594 = vadd.f32 0.0, %v2593
      %2595 = vmatmul.bf16.gmra.mxu0 %v2555
      %v2596 = vpop.f32.mrf.mxu0
      %v2597 = vadd.f32 0.0, %v2596
      %v2598 = vpop.f32.mrf.mxu0
      %v2599 = vadd.f32 0.0, %v2598
      %2600 = vmatmul.bf16.gmra.mxu0 %v2558
      %v2601 = vpop.f32.mrf.mxu0
      %v2602 = vadd.f32 0.0, %v2601
      %v2603 = vpop.f32.mrf.mxu0
      %2604 = vdwg.mxu0
      %2605 = vmatpush.bf16.msra.mxu0 0
      %2606 = vmatpush.bf16.msra.mxu0 0
      %2607 = vmatpush.bf16.msra.mxu0 0
      %2608 = vmatpush.bf16.msra.mxu0 0
      %2609 = vmatpush.bf16.msra.mxu0 %v2564
      %2610 = vmatpush.bf16.msra.mxu0 %v2514
      %2611 = vmatpush.bf16.msra.mxu0 %v2510
      %2612 = vmatpush.bf16.msra.mxu0 %v2506
      %2613 = vmatmul.bf16.gmra.mxu0 %v2546
      %v2614 = vpop.f32.mrf.mxu0
      %v2615 = vadd.f32 0.0, %v2614
      %v2616 = vpop.f32.mrf.mxu0
      %v2617 = vadd.f32 0.0, %v2616
      %2618 = vmatmul.bf16.gmra.mxu0 %v2549
      %v2619 = vpop.f32.mrf.mxu0
      %v2620 = vadd.f32 0.0, %v2619
      %v2621 = vpop.f32.mrf.mxu0
      %v2622 = vadd.f32 0.0, %v2621
      %2623 = vmatmul.bf16.gmra.mxu0 %v2552
      %v2624 = vpop.f32.mrf.mxu0
      %v2625 = vadd.f32 0.0, %v2624
      %v2626 = vpop.f32.mrf.mxu0
      %v2627 = vadd.f32 0.0, %v2626
      %2628 = vmatmul.bf16.gmra.mxu0 %v2555
      %v2629 = vpop.f32.mrf.mxu0
      %v2630 = vadd.f32 0.0, %v2629
      %v2631 = vpop.f32.mrf.mxu0
      %v2632 = vadd.f32 0.0, %v2631
      %2633 = vmatmul.bf16.gmra.mxu0 %v2558
      %v2634 = vpop.f32.mrf.mxu0
      %v2635 = vadd.f32 0.0, %v2634
      %v2636 = vpop.f32.mrf.mxu0
      %2637 = vdwg.mxu0
      %2638 = vmatpush.bf16.msra.mxu0 0
      %2639 = vmatpush.bf16.msra.mxu0 0
      %2640 = vmatpush.bf16.msra.mxu0 0
      %2641 = vmatpush.bf16.msra.mxu0 0
      %2642 = vmatpush.bf16.msra.mxu0 %v2567
      %2643 = vmatpush.bf16.msra.mxu0 %v2515
      %2644 = vmatpush.bf16.msra.mxu0 %v2511
      %2645 = vmatpush.bf16.msra.mxu0 %v2507
      %2646 = vmatmul.bf16.gmra.mxu0 %v2546
      %v2647 = vpop.f32.mrf.mxu0
      %v2648 = vadd.f32 0.0, %v2647
      %v2649 = vpop.f32.mrf.mxu0
      %v2650 = vadd.f32 0.0, %v2649
      %2651 = vmatmul.bf16.gmra.mxu0 %v2549
      %v2652 = vpop.f32.mrf.mxu0
      %v2653 = vadd.f32 0.0, %v2652
      %v2654 = vpop.f32.mrf.mxu0
      %v2655 = vadd.f32 0.0, %v2654
      %2656 = vmatmul.bf16.gmra.mxu0 %v2552
      %v2657 = vpop.f32.mrf.mxu0
      %v2658 = vadd.f32 0.0, %v2657
      %v2659 = vpop.f32.mrf.mxu0
      %v2660 = vadd.f32 0.0, %v2659
      %2661 = vmatmul.bf16.gmra.mxu0 %v2555
      %v2662 = vpop.f32.mrf.mxu0
      %v2663 = vadd.f32 0.0, %v2662
      %v2664 = vpop.f32.mrf.mxu0
      %v2665 = vadd.f32 0.0, %v2664
      %2666 = vmatmul.bf16.gmra.mxu0 %v2558
      %v2667 = vpop.f32.mrf.mxu0
      %v2668 = vadd.f32 0.0, %v2667
      %v2669 = vpop.f32.mrf.mxu0
      %2670 = vdwg.mxu0
      %2671 = vmatpush.bf16.msra.mxu0 0
      %2672 = vmatpush.bf16.msra.mxu0 0
      %2673 = vmatpush.bf16.msra.mxu0 0
      %2674 = vmatpush.bf16.msra.mxu0 0
      %2675 = vmatpush.bf16.msra.mxu0 %v2570
      %2676 = vmatpush.bf16.msra.mxu0 %v2516
      %2677 = vmatpush.bf16.msra.mxu0 %v2512
      %2678 = vmatpush.bf16.msra.mxu0 %v2508
      %2679 = vmatmul.bf16.gmra.mxu0 %v2546
      %v2680 = vpop.f32.mrf.mxu0
      %v2681 = vadd.f32 0.0, %v2680
      %v2682 = vpop.f32.mrf.mxu0
      %v2683 = vadd.f32 0.0, %v2682
      %2684 = vmatmul.bf16.gmra.mxu0 %v2549
      %v2685 = vpop.f32.mrf.mxu0
      %v2686 = vadd.f32 0.0, %v2685
      %v2687 = vpop.f32.mrf.mxu0
      %v2688 = vadd.f32 0.0, %v2687
      %2689 = vmatmul.bf16.gmra.mxu0 %v2552
      %v2690 = vpop.f32.mrf.mxu0
      %v2691 = vadd.f32 0.0, %v2690
      %v2692 = vpop.f32.mrf.mxu0
      %v2693 = vadd.f32 0.0, %v2692
      %2694 = vmatmul.bf16.gmra.mxu0 %v2555
      %v2695 = vpop.f32.mrf.mxu0
      %v2696 = vadd.f32 0.0, %v2695
      %v2697 = vpop.f32.mrf.mxu0
      %v2698 = vadd.f32 0.0, %v2697
      %2699 = vmatmul.bf16.gmra.mxu0 %v2558
      %v2700 = vpop.f32.mrf.mxu0
      %v2701 = vadd.f32 0.0, %v2700
      %v2702 = vpop.f32.mrf.mxu0
      %2703 = vdwg.mxu0
      %s2704 = scalar_lea.vmem %s21, %s951
      %v2705 = vld [vmem:[%s2704] sm:$0xff]
      %2706 = vrot.lane.b32.xlu0 %v2582, 17
      %v2707 = vpop.permute.xlu0 %2706
      %2708 = vrot.lane.b32.xlu0 %v2615, 17
      %v2709 = vpop.permute.xlu0 %2708
      %2710 = vrot.lane.b32.xlu0 %v2648, 17
      %v2711 = vpop.permute.xlu0 %2710
      %2712 = vrot.lane.b32.xlu0 %v2681, 17
      %v2713 = vpop.permute.xlu0 %2712
      %v2714 = vsel %vm121, %v2711, %v2713
      %v2715 = vsel %vm121, %v2709, %v2711
      %v2716 = vsel %vm121, %v2707, %v2709
      %v2717 = vsel %vm121, %v2713, %v2707
      %v2718 = vmul.f32 %v966, %v2717
      %v2719 = vmul.f32 %v967, %v2716
      %v2720 = vmul.f32 %v968, %v2715
      %v2721 = vmul.f32 %v969, %v2714
      %v2722 = vadd.f32 %v2592, %v2718
      %v2723 = vadd.f32 %v2625, %v2719
      %v2724 = vadd.f32 %v2658, %v2720
      %v2725 = vadd.f32 %v2691, %v2721
      %2726 = vrot.lane.b32.xlu0 %v2584, 16
      %v2727 = vpop.permute.xlu0 %2726
      %2728 = vrot.lane.b32.xlu0 %v2617, 16
      %v2729 = vpop.permute.xlu0 %2728
      %2730 = vrot.lane.b32.xlu0 %v2650, 16
      %v2731 = vpop.permute.xlu0 %2730
      %2732 = vrot.lane.b32.xlu0 %v2683, 16
      %v2733 = vpop.permute.xlu0 %2732
      %v2734 = vsel %vm138, %v2731, %v2733
      %v2735 = vsel %vm138, %v2729, %v2731
      %v2736 = vsel %vm138, %v2727, %v2729
      %v2737 = vsel %vm138, %v2733, %v2727
      %v2738 = vmul.f32 %v990, %v2737
      %v2739 = vmul.f32 %v991, %v2736
      %v2740 = vmul.f32 %v992, %v2735
      %v2741 = vmul.f32 %v993, %v2734
      %v2742 = vadd.f32 %v2722, %v2738
      %v2743 = vadd.f32 %v2723, %v2739
      %v2744 = vadd.f32 %v2724, %v2740
      %v2745 = vadd.f32 %v2725, %v2741
      %2746 = vrot.lane.b32.xlu0 %v2587, 15
      %v2747 = vpop.permute.xlu0 %2746
      %2748 = vrot.lane.b32.xlu0 %v2620, 15
      %v2749 = vpop.permute.xlu0 %2748
      %2750 = vrot.lane.b32.xlu0 %v2653, 15
      %v2751 = vpop.permute.xlu0 %2750
      %2752 = vrot.lane.b32.xlu0 %v2686, 15
      %v2753 = vpop.permute.xlu0 %2752
      %v2754 = vsel %vm167, %v2751, %v2753
      %v2755 = vsel %vm167, %v2749, %v2751
      %v2756 = vsel %vm167, %v2747, %v2749
      %v2757 = vsel %vm167, %v2753, %v2747
      %v2758 = vmul.f32 %v1014, %v2757
      %v2759 = vmul.f32 %v1015, %v2756
      %v2760 = vmul.f32 %v1016, %v2755
      %v2761 = vmul.f32 %v1017, %v2754
      %v2762 = vadd.f32 %v2742, %v2758
      %v2763 = vadd.f32 %v2743, %v2759
      %v2764 = vadd.f32 %v2744, %v2760
      %v2765 = vadd.f32 %v2745, %v2761
      %2766 = vrot.lane.b32.xlu0 %v2589, 1
      %v2767 = vpop.permute.xlu0 %2766
      %2768 = vrot.lane.b32.xlu0 %v2622, 1
      %v2769 = vpop.permute.xlu0 %2768
      %2770 = vrot.lane.b32.xlu0 %v2655, 1
      %v2771 = vpop.permute.xlu0 %2770
      %2772 = vrot.lane.b32.xlu0 %v2688, 1
      %v2773 = vpop.permute.xlu0 %2772
      %v2774 = vsel %vm196, %v2771, %v2773
      %v2775 = vsel %vm196, %v2769, %v2771
      %v2776 = vsel %vm196, %v2767, %v2769
      %v2777 = vsel %vm196, %v2773, %v2767
      %v2778 = vmul.f32 %v1038, %v2777
      %v2779 = vmul.f32 %v1039, %v2776
      %v2780 = vmul.f32 %v1040, %v2775
      %v2781 = vmul.f32 %v1041, %v2774
      %v2782 = vadd.f32 %v2762, %v2778
      %v2783 = vadd.f32 %v2763, %v2779
      %v2784 = vadd.f32 %v2764, %v2780
      %v2785 = vadd.f32 %v2765, %v2781
      %2786 = vrot.lane.b32.xlu0 %v2594, 127
      %v2787 = vpop.permute.xlu0 %2786
      %2788 = vrot.lane.b32.xlu0 %v2627, 127
      %v2789 = vpop.permute.xlu0 %2788
      %2790 = vrot.lane.b32.xlu0 %v2660, 127
      %v2791 = vpop.permute.xlu0 %2790
      %2792 = vrot.lane.b32.xlu0 %v2693, 127
      %v2793 = vpop.permute.xlu0 %2792
      %v2794 = vsel %vm225, %v2791, %v2793
      %v2795 = vsel %vm225, %v2789, %v2791
      %v2796 = vsel %vm225, %v2787, %v2789
      %v2797 = vsel %vm225, %v2793, %v2787
      %v2798 = vmul.f32 %v1062, %v2796
      %v2799 = vmul.f32 %v1063, %v2795
      %v2800 = vmul.f32 %v1064, %v2794
      %v2801 = vmul.f32 %v1065, %v2797
      %v2802 = vadd.f32 %v2782, %v2798
      %v2803 = vadd.f32 %v2783, %v2799
      %v2804 = vadd.f32 %v2784, %v2800
      %v2805 = vadd.f32 %v2785, %v2801
      %2806 = vrot.lane.b32.xlu0 %v2597, 113
      %v2807 = vpop.permute.xlu0 %2806
      %2808 = vrot.lane.b32.xlu0 %v2630, 113
      %v2809 = vpop.permute.xlu0 %2808
      %2810 = vrot.lane.b32.xlu0 %v2663, 113
      %v2811 = vpop.permute.xlu0 %2810
      %2812 = vrot.lane.b32.xlu0 %v2696, 113
      %v2813 = vpop.permute.xlu0 %2812
      %v2814 = vsel %vm254, %v2811, %v2813
      %v2815 = vsel %vm254, %v2809, %v2811
      %v2816 = vsel %vm254, %v2807, %v2809
      %v2817 = vsel %vm254, %v2813, %v2807
      %v2818 = vmul.f32 %v1086, %v2816
      %v2819 = vmul.f32 %v1087, %v2815
      %v2820 = vmul.f32 %v1088, %v2814
      %v2821 = vmul.f32 %v1089, %v2817
      %v2822 = vadd.f32 %v2802, %v2818
      %v2823 = vadd.f32 %v2803, %v2819
      %v2824 = vadd.f32 %v2804, %v2820
      %v2825 = vadd.f32 %v2805, %v2821
      %2826 = vrot.lane.b32.xlu0 %v2599, 112
      %v2827 = vpop.permute.xlu0 %2826
      %2828 = vrot.lane.b32.xlu0 %v2632, 112
      %v2829 = vpop.permute.xlu0 %2828
      %2830 = vrot.lane.b32.xlu0 %v2665, 112
      %v2831 = vpop.permute.xlu0 %2830
      %2832 = vrot.lane.b32.xlu0 %v2698, 112
      %v2833 = vpop.permute.xlu0 %2832
      %v2834 = vsel %vm283, %v2831, %v2833
      %v2835 = vsel %vm283, %v2829, %v2831
      %v2836 = vsel %vm283, %v2827, %v2829
      %v2837 = vsel %vm283, %v2833, %v2827
      %v2838 = vmul.f32 %v1110, %v2836
      %v2839 = vmul.f32 %v1111, %v2835
      %v2840 = vmul.f32 %v1112, %v2834
      %v2841 = vmul.f32 %v1113, %v2837
      %v2842 = vadd.f32 %v2822, %v2838
      %v2843 = vadd.f32 %v2823, %v2839
      %v2844 = vadd.f32 %v2824, %v2840
      %v2845 = vadd.f32 %v2825, %v2841
      %2846 = vrot.lane.b32.xlu0 %v2602, 111
      %v2847 = vpop.permute.xlu0 %2846
      %2848 = vrot.lane.b32.xlu0 %v2635, 111
      %v2849 = vpop.permute.xlu0 %2848
      %2850 = vrot.lane.b32.xlu0 %v2668, 111
      %v2851 = vpop.permute.xlu0 %2850
      %2852 = vrot.lane.b32.xlu0 %v2701, 111
      %v2853 = vpop.permute.xlu0 %2852
      %v2854 = vsel %vm312, %v2851, %v2853
      %v2855 = vsel %vm312, %v2849, %v2851
      %v2856 = vsel %vm312, %v2847, %v2849
      %v2857 = vsel %vm312, %v2853, %v2847
      %v2858 = vmul.f32 %v1134, %v2856
      %v2859 = vmul.f32 %v1135, %v2855
      %v2860 = vmul.f32 %v1136, %v2854
      %v2861 = vmul.f32 %v1137, %v2857
      %v2862 = vadd.f32 %v2842, %v2858
      %v2863 = vadd.f32 %v2843, %v2859
      %v2864 = vadd.f32 %v2844, %v2860
      %v2865 = vadd.f32 %v2845, %v2861
      %2867 = vset.pattern.permute.xlu0 0
      %2868 = vperm.xlu0 %2867, %v2705
      %v2869 = vpop.permute.xlu0 %2868
      %v2871 = vadd.f32 %v2862, %v2869
      %v2872 = vadd.f32 %v2863, %v2869
      %v2873 = vadd.f32 %v2864, %v2869
      %v2874 = vadd.f32 %v2865, %v2869
      %2875 = vst [vmem:[#allocation2 + $0xe0] sm:$0xff] %v2871
      %2876 = vst [vmem:[#allocation2 + $0xe8] sm:$0xff] %v2872
      %2877 = vst [vmem:[#allocation2 + $0xf0] sm:$0xff] %v2873
      %2878 = vst [vmem:[#allocation2 + $0xf8] sm:$0xff] %v2874
      %v2879 = vld [vmem:[#allocation2] sm:$0xff]
      %v2880 = vld [vmem:[#allocation2 + $0x8] sm:$0xff]
      %v2881 = vld [vmem:[#allocation2 + $0x10] sm:$0xff]
      %v2882 = vld [vmem:[#allocation2 + $0x18] sm:$0xff]
      %v2883 = vld [vmem:[#allocation2 + $0x20] sm:$0xff]
      %v2884 = vld [vmem:[#allocation2 + $0x28] sm:$0xff]
      %v2885 = vld [vmem:[#allocation2 + $0x30] sm:$0xff]
      %v2886 = vld [vmem:[#allocation2 + $0x38] sm:$0xff]
      %v2887 = vld [vmem:[#allocation2 + $0x40] sm:$0xff]
      %v2888 = vld [vmem:[#allocation2 + $0x48] sm:$0xff]
      %v2889 = vld [vmem:[#allocation2 + $0x50] sm:$0xff]
      %v2890 = vld [vmem:[#allocation2 + $0x58] sm:$0xff]
      %v2891 = vld [vmem:[#allocation2 + $0x60] sm:$0xff]
      %v2892 = vld [vmem:[#allocation2 + $0x68] sm:$0xff]
      %v2893 = vld [vmem:[#allocation2 + $0x70] sm:$0xff]
      %v2894 = vld [vmem:[#allocation2 + $0x78] sm:$0xff]
      %v2895 = vld [vmem:[#allocation2 + $0x80] sm:$0xff]
      %v2896 = vld [vmem:[#allocation2 + $0x88] sm:$0xff]
      %v2897 = vld [vmem:[#allocation2 + $0x90] sm:$0xff]
      %v2898 = vld [vmem:[#allocation2 + $0x98] sm:$0xff]
      %v2899 = vld [vmem:[#allocation2 + $0xa0] sm:$0xff]
      %v2900 = vld [vmem:[#allocation2 + $0xa8] sm:$0xff]
      %v2901 = vld [vmem:[#allocation2 + $0xb0] sm:$0xff]
      %v2902 = vld [vmem:[#allocation2 + $0xb8] sm:$0xff]
      %v2903 = vld [vmem:[#allocation2 + $0xc0] sm:$0xff]
      %v2904 = vld [vmem:[#allocation2 + $0xc8] sm:$0xff]
      %v2905 = vld [vmem:[#allocation2 + $0xd0] sm:$0xff]
      %v2906 = vld [vmem:[#allocation2 + $0xd8] sm:$0xff]
      %v2907 = vld [vmem:[#allocation2 + $0xe0] sm:$0xff]
      %v2908 = vld [vmem:[#allocation2 + $0xe8] sm:$0xff]
      %v2909 = vld [vmem:[#allocation2 + $0xf0] sm:$0xff]
      %v2910 = vld [vmem:[#allocation2 + $0xf8] sm:$0xff]
      %v2911 = vpack.c.bf16 %v2883, %v2879
      %v2912 = vpack.c.bf16 %v2884, %v2880
      %v2913 = vpack.c.bf16 %v2885, %v2881
      %v2914 = vpack.c.bf16 %v2886, %v2882
      %v2915 = vpack.c.bf16 %v2891, %v2887
      %v2916 = vpack.c.bf16 %v2892, %v2888
      %v2917 = vpack.c.bf16 %v2893, %v2889
      %v2918 = vpack.c.bf16 %v2894, %v2890
      %v2919 = vpack.c.bf16 %v2899, %v2895
      %v2920 = vpack.c.bf16 %v2900, %v2896
      %v2921 = vpack.c.bf16 %v2901, %v2897
      %v2922 = vpack.c.bf16 %v2902, %v2898
      %v2923 = vpack.c.bf16 %v2907, %v2903
      %v2924 = vpack.c.bf16 %v2908, %v2904
      %v2925 = vpack.c.bf16 %v2909, %v2905
      %v2926 = vpack.c.bf16 %v2910, %v2906
      %s2927 = smul.u32 %s624, 4
      %s2928 = smul.addr %s2927, 4
      %s2929 = scalar_lea.vmem %s22, %s2928
      %v2930 = vld [vmem:[%s2929] sm:$0xf]
      %v2931 = vld [vmem:[%s2929 + $0x4] sm:$0xf]
      %v2932 = vld [vmem:[%s2929 + $0x8] sm:$0xf]
      %v2933 = vld [vmem:[%s2929 + $0xc] sm:$0xf]
      %s2934 = scalar_lea.vmem %s23, %s645
      %v2935 = vld [vmem:[%s2934] sm:$0xff]
      %v2936 = vld [vmem:[%s2934 + $0x8] sm:$0xff]
      %v2937 = vld [vmem:[%s2934 + $0x10] sm:$0xff]
      %v2938 = vld [vmem:[%s2934 + $0x18] sm:$0xff]
      %2940 = vset.pattern.permute.xlu0 0
      %2941 = vperm.xlu0 %2940, %v2935
      %v2942 = vpop.permute.xlu0 %2941
      %2945 = vset.pattern.permute.xlu0 0
      %2946 = vperm.xlu0 %2945, %v2936
      %v2947 = vpop.permute.xlu0 %2946
      %2950 = vset.pattern.permute.xlu0 0
      %2951 = vperm.xlu0 %2950, %v2937
      %v2952 = vpop.permute.xlu0 %2951
      %2955 = vset.pattern.permute.xlu0 0
      %2956 = vperm.xlu0 %2955, %v2938
      %v2957 = vpop.permute.xlu0 %2956
      %v2963 = vunpack.c.l.b16 %v2930
      %v2964 = vunpack.c.l.b16 %v2931
      %v2965 = vunpack.c.l.b16 %v2932
      %v2966 = vunpack.c.l.b16 %v2933
      %v2967 = vpack.c.b16 %v2964, %v2963
      %v2968 = vpack.c.b16 %v2966, %v2965
      %vm2969 = vcmask 523264
      %v2971 = vsel %vm2969, %v2967, 0
      %v2974 = vsel %vm2969, %v2968, 0
      %2976 = vmatpush.bf16.msra.mxu0 0
      %2977 = vmatpush.bf16.msra.mxu0 0
      %2978 = vmatpush.bf16.msra.mxu0 0
      %2979 = vmatpush.bf16.msra.mxu0 0
      %2980 = vmatpush.bf16.msra.mxu0 %v2923
      %2981 = vmatpush.bf16.msra.mxu0 %v2919
      %2982 = vmatpush.bf16.msra.mxu0 %v2915
      %2983 = vmatpush.bf16.msra.mxu0 %v2911
      %2984 = vmatmul.bf16.gmra.mxu0 %v2971
      %v2985 = vpop.f32.mrf.mxu0
      %v2986 = vadd.f32 %v2942, %v2985
      %v2987 = vpop.f32.mrf.mxu0
      %v2988 = vadd.f32 %v2947, %v2987
      %2989 = vmatmul.bf16.gmra.mxu0 %v2974
      %v2990 = vpop.f32.mrf.mxu0
      %v2991 = vadd.f32 %v2952, %v2990
      %v2992 = vpop.f32.mrf.mxu0
      %v2993 = vadd.f32 %v2957, %v2992
      %2994 = vdwg.mxu0
      %2995 = vmatpush.bf16.msra.mxu0 0
      %2996 = vmatpush.bf16.msra.mxu0 0
      %2997 = vmatpush.bf16.msra.mxu0 0
      %2998 = vmatpush.bf16.msra.mxu0 0
      %2999 = vmatpush.bf16.msra.mxu0 %v2924
      %3000 = vmatpush.bf16.msra.mxu0 %v2920
      %3001 = vmatpush.bf16.msra.mxu0 %v2916
      %3002 = vmatpush.bf16.msra.mxu0 %v2912
      %3003 = vmatmul.bf16.gmra.mxu0 %v2971
      %v3004 = vpop.f32.mrf.mxu0
      %v3005 = vadd.f32 %v2942, %v3004
      %v3006 = vpop.f32.mrf.mxu0
      %v3007 = vadd.f32 %v2947, %v3006
      %3008 = vmatmul.bf16.gmra.mxu0 %v2974
      %v3009 = vpop.f32.mrf.mxu0
      %v3010 = vadd.f32 %v2952, %v3009
      %v3011 = vpop.f32.mrf.mxu0
      %v3012 = vadd.f32 %v2957, %v3011
      %3013 = vdwg.mxu0
      %3014 = vmatpush.bf16.msra.mxu0 0
      %3015 = vmatpush.bf16.msra.mxu0 0
      %3016 = vmatpush.bf16.msra.mxu0 0
      %3017 = vmatpush.bf16.msra.mxu0 0
      %3018 = vmatpush.bf16.msra.mxu0 %v2925
      %3019 = vmatpush.bf16.msra.mxu0 %v2921
      %3020 = vmatpush.bf16.msra.mxu0 %v2917
      %3021 = vmatpush.bf16.msra.mxu0 %v2913
      %3022 = vmatmul.bf16.gmra.mxu0 %v2971
      %v3023 = vpop.f32.mrf.mxu0
      %v3024 = vadd.f32 %v2942, %v3023
      %v3025 = vpop.f32.mrf.mxu0
      %v3026 = vadd.f32 %v2947, %v3025
      %3027 = vmatmul.bf16.gmra.mxu0 %v2974
      %v3028 = vpop.f32.mrf.mxu0
      %v3029 = vadd.f32 %v2952, %v3028
      %v3030 = vpop.f32.mrf.mxu0
      %v3031 = vadd.f32 %v2957, %v3030
      %3032 = vdwg.mxu0
      %3033 = vmatpush.bf16.msra.mxu0 0
      %3034 = vmatpush.bf16.msra.mxu0 0
      %3035 = vmatpush.bf16.msra.mxu0 0
      %3036 = vmatpush.bf16.msra.mxu0 0
      %3037 = vmatpush.bf16.msra.mxu0 %v2926
      %3038 = vmatpush.bf16.msra.mxu0 %v2922
      %3039 = vmatpush.bf16.msra.mxu0 %v2918
      %3040 = vmatpush.bf16.msra.mxu0 %v2914
      %3041 = vmatmul.bf16.gmra.mxu0 %v2971
      %v3042 = vpop.f32.mrf.mxu0
      %v3043 = vadd.f32 %v2942, %v3042
      %v3044 = vpop.f32.mrf.mxu0
      %v3045 = vadd.f32 %v2947, %v3044
      %3046 = vmatmul.bf16.gmra.mxu0 %v2974
      %v3047 = vpop.f32.mrf.mxu0
      %v3048 = vadd.f32 %v2952, %v3047
      %v3049 = vpop.f32.mrf.mxu0
      %v3050 = vadd.f32 %v2957, %v3049
      %3051 = vdwg.mxu0
      %3052 = vst [vmem:[#allocation2] sm:$0xff] %v2986
      %3053 = vst [vmem:[#allocation2 + $0x8] sm:$0xff] %v3005
      %3054 = vst [vmem:[#allocation2 + $0x10] sm:$0xff] %v3024
      %3055 = vst [vmem:[#allocation2 + $0x18] sm:$0xff] %v3043
      %3056 = vst [vmem:[#allocation2 + $0x20] sm:$0xff] %v2988
      %3057 = vst [vmem:[#allocation2 + $0x28] sm:$0xff] %v3007
      %3058 = vst [vmem:[#allocation2 + $0x30] sm:$0xff] %v3026
      %3059 = vst [vmem:[#allocation2 + $0x38] sm:$0xff] %v3045
      %3060 = vst [vmem:[#allocation2 + $0x40] sm:$0xff] %v2991
      %3061 = vst [vmem:[#allocation2 + $0x48] sm:$0xff] %v3010
      %3062 = vst [vmem:[#allocation2 + $0x50] sm:$0xff] %v3029
      %3063 = vst [vmem:[#allocation2 + $0x58] sm:$0xff] %v3048
      %3064 = vst [vmem:[#allocation2 + $0x60] sm:$0xff] %v2993
      %3065 = vst [vmem:[#allocation2 + $0x68] sm:$0xff] %v3012
      %3066 = vst [vmem:[#allocation2 + $0x70] sm:$0xff] %v3031
      %3067 = vst [vmem:[#allocation2 + $0x78] sm:$0xff] %v3050
    $region118: #{tpu_custom_call.1} parent=1 // loop_footer
      %s628 = sadd.s32 1, %s624
    $region119: #{tpu_custom_call.1} parent=1 // loop_footer_branch
      %623 = sbr.rel target = $region115
    $region120: #{tpu_custom_call.1} parent=1 // loop_exit
      _
    %v3068 = vld [vmem:[#allocation2] sm:$0xff]
    %v3069 = vld [vmem:[#allocation2 + $0x8] sm:$0xff]
    %v3070 = vld [vmem:[#allocation2 + $0x10] sm:$0xff]
    %v3071 = vld [vmem:[#allocation2 + $0x18] sm:$0xff]
    %v3072 = vld [vmem:[#allocation2 + $0x20] sm:$0xff]
    %v3073 = vld [vmem:[#allocation2 + $0x28] sm:$0xff]
    %v3074 = vld [vmem:[#allocation2 + $0x30] sm:$0xff]
    %v3075 = vld [vmem:[#allocation2 + $0x38] sm:$0xff]
    %v3076 = vld [vmem:[#allocation2 + $0x40] sm:$0xff]
    %v3077 = vld [vmem:[#allocation2 + $0x48] sm:$0xff]
    %v3078 = vld [vmem:[#allocation2 + $0x50] sm:$0xff]
    %v3079 = vld [vmem:[#allocation2 + $0x58] sm:$0xff]
    %v3080 = vld [vmem:[#allocation2 + $0x60] sm:$0xff]
    %v3081 = vld [vmem:[#allocation2 + $0x68] sm:$0xff]
    %v3082 = vld [vmem:[#allocation2 + $0x70] sm:$0xff]
    %v3083 = vld [vmem:[#allocation2 + $0x78] sm:$0xff]
    %v3084 = vld [vmem:[%s24] sm:$0xff]
    %v3085 = vld [vmem:[%s24 + $0x8] sm:$0xff]
    %v3086 = vld [vmem:[%s24 + $0x10] sm:$0xff]
    %v3087 = vld [vmem:[%s24 + $0x18] sm:$0xff]
    %v3088 = vld [vmem:[%s25] sm:$0xff]
    %v3089 = vld [vmem:[%s25 + $0x8] sm:$0xff]
    %v3090 = vld [vmem:[%s25 + $0x10] sm:$0xff]
    %v3091 = vld [vmem:[%s25 + $0x18] sm:$0xff]
    %3093 = vset.pattern.permute.xlu0 0
    %3094 = vperm.xlu0 %3093, %v3084
    %v3095 = vpop.permute.xlu0 %3094
    %3098 = vset.pattern.permute.xlu0 0
    %3099 = vperm.xlu0 %3098, %v3085
    %v3100 = vpop.permute.xlu0 %3099
    %3103 = vset.pattern.permute.xlu0 0
    %3104 = vperm.xlu0 %3103, %v3086
    %v3105 = vpop.permute.xlu0 %3104
    %3108 = vset.pattern.permute.xlu0 0
    %3109 = vperm.xlu0 %3108, %v3087
    %v3110 = vpop.permute.xlu0 %3109
    %v3112 = vmul.f32 %v3068, %v3095
    %v3113 = vmul.f32 %v3069, %v3095
    %v3114 = vmul.f32 %v3070, %v3095
    %v3115 = vmul.f32 %v3071, %v3095
    %v3116 = vmul.f32 %v3072, %v3100
    %v3117 = vmul.f32 %v3073, %v3100
    %v3118 = vmul.f32 %v3074, %v3100
    %v3119 = vmul.f32 %v3075, %v3100
    %v3120 = vmul.f32 %v3076, %v3105
    %v3121 = vmul.f32 %v3077, %v3105
    %v3122 = vmul.f32 %v3078, %v3105
    %v3123 = vmul.f32 %v3079, %v3105
    %v3124 = vmul.f32 %v3080, %v3110
    %v3125 = vmul.f32 %v3081, %v3110
    %v3126 = vmul.f32 %v3082, %v3110
    %v3127 = vmul.f32 %v3083, %v3110
    %3129 = vset.pattern.permute.xlu0 0
    %3130 = vperm.xlu0 %3129, %v3088
    %v3131 = vpop.permute.xlu0 %3130
    %3134 = vset.pattern.permute.xlu0 0
    %3135 = vperm.xlu0 %3134, %v3089
    %v3136 = vpop.permute.xlu0 %3135
    %3139 = vset.pattern.permute.xlu0 0
    %3140 = vperm.xlu0 %3139, %v3090
    %v3141 = vpop.permute.xlu0 %3140
    %3144 = vset.pattern.permute.xlu0 0
    %3145 = vperm.xlu0 %3144, %v3091
    %v3146 = vpop.permute.xlu0 %3145
    %v3148 = vadd.f32 %v3112, %v3131
    %v3149 = vadd.f32 %v3113, %v3131
    %v3150 = vadd.f32 %v3114, %v3131
    %v3151 = vadd.f32 %v3115, %v3131
    %v3152 = vadd.f32 %v3116, %v3136
    %v3153 = vadd.f32 %v3117, %v3136
    %v3154 = vadd.f32 %v3118, %v3136
    %v3155 = vadd.f32 %v3119, %v3136
    %v3156 = vadd.f32 %v3120, %v3141
    %v3157 = vadd.f32 %v3121, %v3141
    %v3158 = vadd.f32 %v3122, %v3141
    %v3159 = vadd.f32 %v3123, %v3141
    %v3160 = vadd.f32 %v3124, %v3146
    %v3161 = vadd.f32 %v3125, %v3146
    %v3162 = vadd.f32 %v3126, %v3146
    %v3163 = vadd.f32 %v3127, %v3146
    %v3164 = vmul.f32 %v3148, 0.01
    %v3165 = vmul.f32 %v3149, 0.01
    %v3166 = vmul.f32 %v3150, 0.01
    %v3167 = vmul.f32 %v3151, 0.01
    %v3168 = vmul.f32 %v3152, 0.01
    %v3169 = vmul.f32 %v3153, 0.01
    %v3170 = vmul.f32 %v3154, 0.01
    %v3171 = vmul.f32 %v3155, 0.01
    %v3172 = vmul.f32 %v3156, 0.01
    %v3173 = vmul.f32 %v3157, 0.01
    %v3174 = vmul.f32 %v3158, 0.01
    %v3175 = vmul.f32 %v3159, 0.01
    %v3176 = vmul.f32 %v3160, 0.01
    %v3177 = vmul.f32 %v3161, 0.01
    %v3178 = vmul.f32 %v3162, 0.01
    %v3179 = vmul.f32 %v3163, 0.01
    %v3180 = vmax.f32 %v3148, %v3164
    %v3181 = vmax.f32 %v3149, %v3165
    %v3182 = vmax.f32 %v3150, %v3166
    %v3183 = vmax.f32 %v3151, %v3167
    %v3184 = vmax.f32 %v3152, %v3168
    %v3185 = vmax.f32 %v3153, %v3169
    %v3186 = vmax.f32 %v3154, %v3170
    %v3187 = vmax.f32 %v3155, %v3171
    %v3188 = vmax.f32 %v3156, %v3172
    %v3189 = vmax.f32 %v3157, %v3173
    %v3190 = vmax.f32 %v3158, %v3174
    %v3191 = vmax.f32 %v3159, %v3175
    %v3192 = vmax.f32 %v3160, %v3176
    %v3193 = vmax.f32 %v3161, %v3177
    %v3194 = vmax.f32 %v3162, %v3178
    %v3195 = vmax.f32 %v3163, %v3179
    %v3196 = vld [vmem:[%s26] sm:$0xf]
    %v3197 = vld [vmem:[%s26 + $0x4] sm:$0x1]
    %v3198 = vpack.c.bf16 %v3184, %v3180
    %v3199 = vpack.c.bf16 %v3185, %v3181
    %v3200 = vpack.c.bf16 %v3186, %v3182
    %v3201 = vpack.c.bf16 %v3187, %v3183
    %v3202 = vpack.c.bf16 %v3192, %v3188
    %v3203 = vpack.c.bf16 %v3193, %v3189
    %v3204 = vpack.c.bf16 %v3194, %v3190
    %v3205 = vpack.c.bf16 %v3195, %v3191
    %v3208 = vunpack.c.l.b16 %v3196
    %v3209 = vunpack.c.l.b16 %v3197
    %v3210 = vpack.c.b16 %v3209, %v3208
    %vm3211 = vcmask 261120
    %v3213 = vsel %vm3211, %v3210, 0
    %3215 = vmatpush.bf16.msra.mxu0 0
    %3216 = vmatpush.bf16.msra.mxu0 0
    %3217 = vmatpush.bf16.msra.mxu0 0
    %3218 = vmatpush.bf16.msra.mxu0 0
    %3219 = vmatpush.bf16.msra.mxu0 0
    %3220 = vmatpush.bf16.msra.mxu0 0
    %3221 = vmatpush.bf16.msra.mxu0 %v3202
    %3222 = vmatpush.bf16.msra.mxu0 %v3198
    %3223 = vmatmul.bf16.gmra.mxu0 %v3213
    %v3224 = vpop.f32.mrf.mxu0
    %v3225 = vadd.f32 0.0, %v3224
    %v3226 = vpop.f32.mrf.mxu0
    %v3227 = vadd.f32 0.0, %v3226
    %3228 = vdwg.mxu0
    %3229 = vmatpush.bf16.msra.mxu0 0
    %3230 = vmatpush.bf16.msra.mxu0 0
    %3231 = vmatpush.bf16.msra.mxu0 0
    %3232 = vmatpush.bf16.msra.mxu0 0
    %3233 = vmatpush.bf16.msra.mxu0 0
    %3234 = vmatpush.bf16.msra.mxu0 0
    %3235 = vmatpush.bf16.msra.mxu0 %v3203
    %3236 = vmatpush.bf16.msra.mxu0 %v3199
    %3237 = vmatmul.bf16.gmra.mxu0 %v3213
    %v3238 = vpop.f32.mrf.mxu0
    %v3239 = vadd.f32 0.0, %v3238
    %v3240 = vpop.f32.mrf.mxu0
    %v3241 = vadd.f32 0.0, %v3240
    %3242 = vdwg.mxu0
    %3243 = vmatpush.bf16.msra.mxu0 0
    %3244 = vmatpush.bf16.msra.mxu0 0
    %3245 = vmatpush.bf16.msra.mxu0 0
    %3246 = vmatpush.bf16.msra.mxu0 0
    %3247 = vmatpush.bf16.msra.mxu0 0
    %3248 = vmatpush.bf16.msra.mxu0 0
    %3249 = vmatpush.bf16.msra.mxu0 %v3204
    %3250 = vmatpush.bf16.msra.mxu0 %v3200
    %3251 = vmatmul.bf16.gmra.mxu0 %v3213
    %v3252 = vpop.f32.mrf.mxu0
    %v3253 = vadd.f32 0.0, %v3252
    %v3254 = vpop.f32.mrf.mxu0
    %v3255 = vadd.f32 0.0, %v3254
    %3256 = vdwg.mxu0
    %3257 = vmatpush.bf16.msra.mxu0 0
    %3258 = vmatpush.bf16.msra.mxu0 0
    %3259 = vmatpush.bf16.msra.mxu0 0
    %3260 = vmatpush.bf16.msra.mxu0 0
    %3261 = vmatpush.bf16.msra.mxu0 0
    %3262 = vmatpush.bf16.msra.mxu0 0
    %3263 = vmatpush.bf16.msra.mxu0 %v3205
    %3264 = vmatpush.bf16.msra.mxu0 %v3201
    %3265 = vmatmul.bf16.gmra.mxu0 %v3213
    %v3266 = vpop.f32.mrf.mxu0
    %v3267 = vadd.f32 0.0, %v3266
    %v3268 = vpop.f32.mrf.mxu0
    %v3269 = vadd.f32 0.0, %v3268
    %3270 = vdwg.mxu0
    %v3271 = vld [vmem:[#allocation3] sm:$0x1]
    %3272 = vrot.lane.b32.xlu0 %v3225, 17
    %v3273 = vpop.permute.xlu0 %3272
    %3274 = vrot.lane.b32.xlu0 %v3239, 17
    %v3275 = vpop.permute.xlu0 %3274
    %3276 = vrot.lane.b32.xlu0 %v3253, 17
    %v3277 = vpop.permute.xlu0 %3276
    %3278 = vrot.lane.b32.xlu0 %v3267, 17
    %v3279 = vpop.permute.xlu0 %3278
    %v3280 = vsel %vm121, %v3277, %v3279
    %v3281 = vsel %vm121, %v3275, %v3277
    %v3282 = vsel %vm121, %v3273, %v3275
    %v3283 = vsel %vm121, %v3279, %v3273
    %v3284 = vmul.f32 %v93, %v3283
    %v3285 = vmul.f32 %v94, %v3282
    %v3286 = vmul.f32 %v95, %v3281
    %v3287 = vmul.f32 %v96, %v3280
    %v3292 = vrot.slane %v3284, 4
    %v3293 = vrot.slane %v3285, 4
    %v3294 = vrot.slane %v3286, 4
    %v3295 = vrot.slane %v3287, 4
    %v3300 = vadd.f32 %v3225, %v3292
    %v3301 = vadd.f32 %v3239, %v3293
    %v3302 = vadd.f32 %v3253, %v3294
    %v3303 = vadd.f32 %v3267, %v3295
    %v3308 = vrot.slane %v3225, 1
    %v3309 = vrot.slane %v3239, 1
    %v3310 = vrot.slane %v3253, 1
    %v3311 = vrot.slane %v3267, 1
    %3316 = vrot.lane.b32.xlu0 %v3308, 16
    %v3317 = vpop.permute.xlu0 %3316
    %3318 = vrot.lane.b32.xlu0 %v3309, 16
    %v3319 = vpop.permute.xlu0 %3318
    %3320 = vrot.lane.b32.xlu0 %v3310, 16
    %v3321 = vpop.permute.xlu0 %3320
    %3322 = vrot.lane.b32.xlu0 %v3311, 16
    %v3323 = vpop.permute.xlu0 %3322
    %v3324 = vsel %vm138, %v3321, %v3323
    %v3325 = vsel %vm138, %v3319, %v3321
    %v3326 = vsel %vm138, %v3317, %v3319
    %v3327 = vsel %vm138, %v3323, %v3317
    %v3332 = vrot.slane %v3327, 7
    %v3333 = vrot.slane %v3326, 7
    %v3334 = vrot.slane %v3325, 7
    %v3335 = vrot.slane %v3324, 7
    %v3340 = vmul.f32 %v93, %v3332
    %v3341 = vmul.f32 %v94, %v3333
    %v3342 = vmul.f32 %v95, %v3334
    %v3343 = vmul.f32 %v96, %v3335
    %v3348 = vrot.slane %v3340, 5
    %v3349 = vrot.slane %v3341, 5
    %v3350 = vrot.slane %v3342, 5
    %v3351 = vrot.slane %v3343, 5
    %v3356 = vadd.f32 %v3300, %v3348
    %v3357 = vadd.f32 %v3301, %v3349
    %v3358 = vadd.f32 %v3302, %v3350
    %v3359 = vadd.f32 %v3303, %v3351
    %v3360 = vrot.slane %v3225, 2
    %v3361 = vrot.slane %v3239, 2
    %v3362 = vrot.slane %v3253, 2
    %v3363 = vrot.slane %v3267, 2
    %3368 = vrot.lane.b32.xlu0 %v3360, 15
    %v3369 = vpop.permute.xlu0 %3368
    %3370 = vrot.lane.b32.xlu0 %v3361, 15
    %v3371 = vpop.permute.xlu0 %3370
    %3372 = vrot.lane.b32.xlu0 %v3362, 15
    %v3373 = vpop.permute.xlu0 %3372
    %3374 = vrot.lane.b32.xlu0 %v3363, 15
    %v3375 = vpop.permute.xlu0 %3374
    %v3376 = vsel %vm167, %v3373, %v3375
    %v3377 = vsel %vm167, %v3371, %v3373
    %v3378 = vsel %vm167, %v3369, %v3371
    %v3379 = vsel %vm167, %v3375, %v3369
    %v3384 = vrot.slane %v3379, 6
    %v3385 = vrot.slane %v3378, 6
    %v3386 = vrot.slane %v3377, 6
    %v3387 = vrot.slane %v3376, 6
    %v3392 = vmul.f32 %v93, %v3384
    %v3393 = vmul.f32 %v94, %v3385
    %v3394 = vmul.f32 %v95, %v3386
    %v3395 = vmul.f32 %v96, %v3387
    %v3400 = vrot.slane %v3392, 6
    %v3401 = vrot.slane %v3393, 6
    %v3402 = vrot.slane %v3394, 6
    %v3403 = vrot.slane %v3395, 6
    %v3408 = vadd.f32 %v3356, %v3400
    %v3409 = vadd.f32 %v3357, %v3401
    %v3410 = vadd.f32 %v3358, %v3402
    %v3411 = vadd.f32 %v3359, %v3403
    %v3412 = vrot.slane %v3225, 3
    %v3413 = vrot.slane %v3239, 3
    %v3414 = vrot.slane %v3253, 3
    %v3415 = vrot.slane %v3267, 3
    %3420 = vrot.lane.b32.xlu0 %v3412, 1
    %v3421 = vpop.permute.xlu0 %3420
    %3422 = vrot.lane.b32.xlu0 %v3413, 1
    %v3423 = vpop.permute.xlu0 %3422
    %3424 = vrot.lane.b32.xlu0 %v3414, 1
    %v3425 = vpop.permute.xlu0 %3424
    %3426 = vrot.lane.b32.xlu0 %v3415, 1
    %v3427 = vpop.permute.xlu0 %3426
    %v3428 = vsel %vm196, %v3425, %v3427
    %v3429 = vsel %vm196, %v3423, %v3425
    %v3430 = vsel %vm196, %v3421, %v3423
    %v3431 = vsel %vm196, %v3427, %v3421
    %v3436 = vrot.slane %v3431, 5
    %v3437 = vrot.slane %v3430, 5
    %v3438 = vrot.slane %v3429, 5
    %v3439 = vrot.slane %v3428, 5
    %v3444 = vmul.f32 %v93, %v3436
    %v3445 = vmul.f32 %v94, %v3437
    %v3446 = vmul.f32 %v95, %v3438
    %v3447 = vmul.f32 %v96, %v3439
    %v3452 = vrot.slane %v3444, 7
    %v3453 = vrot.slane %v3445, 7
    %v3454 = vrot.slane %v3446, 7
    %v3455 = vrot.slane %v3447, 7
    %v3460 = vadd.f32 %v3408, %v3452
    %v3461 = vadd.f32 %v3409, %v3453
    %v3462 = vadd.f32 %v3410, %v3454
    %v3463 = vadd.f32 %v3411, %v3455
    %v3464 = vrot.slane %v3225, 5
    %v3465 = vrot.slane %v3239, 5
    %v3466 = vrot.slane %v3253, 5
    %v3467 = vrot.slane %v3267, 5
    %3472 = vrot.lane.b32.xlu0 %v3464, 127
    %v3473 = vpop.permute.xlu0 %3472
    %3474 = vrot.lane.b32.xlu0 %v3465, 127
    %v3475 = vpop.permute.xlu0 %3474
    %3476 = vrot.lane.b32.xlu0 %v3466, 127
    %v3477 = vpop.permute.xlu0 %3476
    %3478 = vrot.lane.b32.xlu0 %v3467, 127
    %v3479 = vpop.permute.xlu0 %3478
    %v3480 = vsel %vm225, %v3477, %v3479
    %v3481 = vsel %vm225, %v3475, %v3477
    %v3482 = vsel %vm225, %v3473, %v3475
    %v3483 = vsel %vm225, %v3479, %v3473
    %v3488 = vrot.slane %v3482, 3
    %v3489 = vrot.slane %v3481, 3
    %v3490 = vrot.slane %v3480, 3
    %v3491 = vrot.slane %v3483, 3
    %v3496 = vmul.f32 %v93, %v3488
    %v3497 = vmul.f32 %v94, %v3489
    %v3498 = vmul.f32 %v95, %v3490
    %v3499 = vmul.f32 %v96, %v3491
    %v3504 = vrot.slane %v3496, 1
    %v3505 = vrot.slane %v3497, 1
    %v3506 = vrot.slane %v3498, 1
    %v3507 = vrot.slane %v3499, 1
    %v3512 = vadd.f32 %v3460, %v3504
    %v3513 = vadd.f32 %v3461, %v3505
    %v3514 = vadd.f32 %v3462, %v3506
    %v3515 = vadd.f32 %v3463, %v3507
    %v3516 = vrot.slane %v3225, 6
    %v3517 = vrot.slane %v3239, 6
    %v3518 = vrot.slane %v3253, 6
    %v3519 = vrot.slane %v3267, 6
    %3524 = vrot.lane.b32.xlu0 %v3516, 113
    %v3525 = vpop.permute.xlu0 %3524
    %3526 = vrot.lane.b32.xlu0 %v3517, 113
    %v3527 = vpop.permute.xlu0 %3526
    %3528 = vrot.lane.b32.xlu0 %v3518, 113
    %v3529 = vpop.permute.xlu0 %3528
    %3530 = vrot.lane.b32.xlu0 %v3519, 113
    %v3531 = vpop.permute.xlu0 %3530
    %v3532 = vsel %vm254, %v3529, %v3531
    %v3533 = vsel %vm254, %v3527, %v3529
    %v3534 = vsel %vm254, %v3525, %v3527
    %v3535 = vsel %vm254, %v3531, %v3525
    %v3540 = vrot.slane %v3534, 2
    %v3541 = vrot.slane %v3533, 2
    %v3542 = vrot.slane %v3532, 2
    %v3543 = vrot.slane %v3535, 2
    %v3548 = vmul.f32 %v93, %v3540
    %v3549 = vmul.f32 %v94, %v3541
    %v3550 = vmul.f32 %v95, %v3542
    %v3551 = vmul.f32 %v96, %v3543
    %v3556 = vrot.slane %v3548, 2
    %v3557 = vrot.slane %v3549, 2
    %v3558 = vrot.slane %v3550, 2
    %v3559 = vrot.slane %v3551, 2
    %v3564 = vadd.f32 %v3512, %v3556
    %v3565 = vadd.f32 %v3513, %v3557
    %v3566 = vadd.f32 %v3514, %v3558
    %v3567 = vadd.f32 %v3515, %v3559
    %v3568 = vrot.slane %v3225, 7
    %v3569 = vrot.slane %v3239, 7
    %v3570 = vrot.slane %v3253, 7
    %v3571 = vrot.slane %v3267, 7
    %3576 = vrot.lane.b32.xlu0 %v3568, 112
    %v3577 = vpop.permute.xlu0 %3576
    %3578 = vrot.lane.b32.xlu0 %v3569, 112
    %v3579 = vpop.permute.xlu0 %3578
    %3580 = vrot.lane.b32.xlu0 %v3570, 112
    %v3581 = vpop.permute.xlu0 %3580
    %3582 = vrot.lane.b32.xlu0 %v3571, 112
    %v3583 = vpop.permute.xlu0 %3582
    %v3584 = vsel %vm283, %v3581, %v3583
    %v3585 = vsel %vm283, %v3579, %v3581
    %v3586 = vsel %vm283, %v3577, %v3579
    %v3587 = vsel %vm283, %v3583, %v3577
    %v3592 = vrot.slane %v3586, 1
    %v3593 = vrot.slane %v3585, 1
    %v3594 = vrot.slane %v3584, 1
    %v3595 = vrot.slane %v3587, 1
    %v3600 = vmul.f32 %v93, %v3592
    %v3601 = vmul.f32 %v94, %v3593
    %v3602 = vmul.f32 %v95, %v3594
    %v3603 = vmul.f32 %v96, %v3595
    %v3608 = vrot.slane %v3600, 3
    %v3609 = vrot.slane %v3601, 3
    %v3610 = vrot.slane %v3602, 3
    %v3611 = vrot.slane %v3603, 3
    %v3616 = vadd.f32 %v3564, %v3608
    %v3617 = vadd.f32 %v3565, %v3609
    %v3618 = vadd.f32 %v3566, %v3610
    %v3619 = vadd.f32 %v3567, %v3611
    %3620 = vrot.lane.b32.xlu0 %v3227, 111
    %v3621 = vpop.permute.xlu0 %3620
    %3622 = vrot.lane.b32.xlu0 %v3241, 111
    %v3623 = vpop.permute.xlu0 %3622
    %3624 = vrot.lane.b32.xlu0 %v3255, 111
    %v3625 = vpop.permute.xlu0 %3624
    %3626 = vrot.lane.b32.xlu0 %v3269, 111
    %v3627 = vpop.permute.xlu0 %3626
    %v3628 = vsel %vm312, %v3625, %v3627
    %v3629 = vsel %vm312, %v3623, %v3625
    %v3630 = vsel %vm312, %v3621, %v3623
    %v3631 = vsel %vm312, %v3627, %v3621
    %v3632 = vmul.f32 %v97, %v3630
    %v3633 = vmul.f32 %v98, %v3629
    %v3634 = vmul.f32 %v99, %v3628
    %v3635 = vmul.f32 %v100, %v3631
    %v3640 = vrot.slane %v3632, 4
    %v3641 = vrot.slane %v3633, 4
    %v3642 = vrot.slane %v3634, 4
    %v3643 = vrot.slane %v3635, 4
    %v3648 = vadd.f32 %v3616, %v3640
    %v3649 = vadd.f32 %v3617, %v3641
    %v3650 = vadd.f32 %v3618, %v3642
    %v3651 = vadd.f32 %v3619, %v3643
    %3653 = vset.pattern.permute.xlu0 0
    %3654 = vperm.xlu0 %3653, %v3271
    %v3655 = vpop.permute.xlu0 %3654
    %v3657 = vperm.slane %v3655, 0
    %v3658 = vadd.f32 %v3648, %v3657
    %v3659 = vadd.f32 %v3649, %v3657
    %v3660 = vadd.f32 %v3650, %v3657
    %v3661 = vadd.f32 %v3651, %v3657
    %vm3662 = vcmp.eq.f32.partialorder %v101, 0.0
    %3667 = vst [vmem:[#allocation1] sm:$0xff] %v3658
    %3668 = vst [vmem:[#allocation1 + $0x9] sm:$0xff] %v3659
    %3669 = vst [vmem:[#allocation1 + $0x12] sm:$0xff] %v3660
    %3670 = vst [vmem:[#allocation1 + $0x1b] sm:$0xff] %v3661
    %s3671 = scalar_lea.vmem [#allocation1], 4
    %v3672 = vld [vmem:[%s3671] ss:$9 sm:$0xff]
    %v3674 = vsel %vm3662, %v3672, 0.0
    %v3675 = vadd.f32 %v3674, %v101
    %v3676 = vlaneseq
    %vm3677 = vcmp.ge.s32.totalorder %v3676, 0
    %vm3678 = vcmp.lt.s32.totalorder %v3676, 512
    %vm3679 = vmand %vm3677, %vm3678
    %3680 = vst.msk [vmem:[#allocation4] sm:$0xf] %vm3679, %v3675
    // Predicated region
    $region121: #{tpu_custom_call.1} parent=1 // pred_check
      _
    $region122: #{tpu_custom_call.1} parent=1 // pred_check_branch
      %3682 = sbr.rel (0) target = $region124
    $region123: #{tpu_custom_call.1} parent=1 // pred_region
      %3684 = vsyncadd [#allocation5], 0
      %s3686 = sshll.u32 [#allocation4], 4
      %s3687 = int_to_ptr.vmem [resolvable:$true] %s3686
      %s3688 = sshll.u32 %s28, 4
      %s3689 = int_to_ptr.hbm [resolvable:$true] %s3688
      %3691 = dma.vmem_to_hbm [thread:$0]  %s3687, 64, %s3689, [#allocation5]
    $region124: #{tpu_custom_call.1} parent=1 // pred_fallthru
      _
    // Predicated region
    $region125: #{tpu_custom_call.1} parent=1 // pred_check
      _
    $region126: #{tpu_custom_call.1} parent=1 // pred_check_branch
      %3693 = sbr.rel (0) target = $region128
    $region127: #{tpu_custom_call.1} parent=1 // pred_region
      %3695 = dma.done [#allocation5], 64
    $region128: #{tpu_custom_call.1} parent=1 // pred_fallthru
      _
    %3696 = vsyncpa [#allocation5], 1

</llo_original>
